<compile_context>
chip_gen: v7x
topology: tpu7x:2x2x1
jax: 0.10.0
libtpu: 0.0.40
codegen_flags: <defaults>
</compile_context>

<pallas_src>
import jax
import jax.numpy as jnp
from jax import lax
from jax.experimental import pallas as pl
from jax.experimental.pallas import tpu as pltpu


HIDDEN = 50          # true hidden size
HP = 128             # per-gate lane-padded hidden size (one full 128-lane tile)


def _row_offsets(hp):
    """Row offsets of each parameter inside the packed (rows, 4*hp) slab.
    All offsets are multiples of 8 so every view is sublane-aligned."""
    o = {}
    o["wih0"] = 0
    o["b0"] = 8
    o["whh0"] = 16
    o["wih1"] = o["whh0"] + hp
    o["whh1"] = o["wih1"] + hp
    o["b1"] = o["whh1"] + hp
    o["fcw"] = o["b1"] + 8
    o["fcb"] = o["fcw"] + 8
    o["rows"] = o["fcb"] + 8
    return o


# ----------------------------- Pallas kernel ------------------------------ #
def _build_kernel(T, Bp, Hp, offs):
    G = 4 * Hp

    def kernel(x2d_ref, w_ref, out_ref, xp_ref):
        # zero-cost static views into the packed parameter slab
        wih0 = w_ref.at[offs["wih0"]:offs["wih0"] + 1, :]     # (1, 4Hp)
        b0 = w_ref.at[offs["b0"]:offs["b0"] + 1, :]           # (1, 4Hp)
        whh0 = w_ref.at[offs["whh0"]:offs["whh0"] + Hp, :]    # (Hp, 4Hp)
        wih1 = w_ref.at[offs["wih1"]:offs["wih1"] + Hp, :]    # (Hp, 4Hp)
        whh1 = w_ref.at[offs["whh1"]:offs["whh1"] + Hp, :]    # (Hp, 4Hp)
        b1 = w_ref.at[offs["b1"]:offs["b1"] + 1, :]           # (1, 4Hp)
        fcw = w_ref.at[offs["fcw"]:offs["fcw"] + 1, 0:Hp]     # (1, Hp)
        fcb = w_ref.at[offs["fcb"]:offs["fcb"] + 1, 0:1]      # (1, 1)

        # Hoisted layer-0 input projection.  input_size == 1, so this is a
        # pure VPU broadcast multiply-add; the result is parked in VMEM.
        xp_ref[...] = x2d_ref[...] * wih0[...] + b0[...]

        # Hoist the layer-1 bias broadcast out of the loop (JAX does not CSE it).
        b1b = jnp.broadcast_to(b1[...], (Bp, G))

        def activate(pre, c):
            # fused gate order (i, f, o, g); every slice is 128-lane-tile aligned
            sig = jax.nn.sigmoid(pre[:, :3 * Hp])
            g = jnp.tanh(pre[:, 3 * Hp:])
            i = sig[:, 0:Hp]
            f = sig[:, Hp:2 * Hp]
            o = sig[:, 2 * Hp:3 * Hp]
            c_new = f * c + i * g
            h_new = o * jnp.tanh(c_new)
            return h_new, c_new

        def step(t, carry):
            h0, c0, h1, c1 = carry
            row = pl.multiple_of(t * Bp, 8)
            xp_t = xp_ref[pl.ds(row, Bp), :]                   # (Bp, 4Hp)

            # layer 0: single fused (Bp, Hp) @ (Hp, 4Hp) recurrent matmul
            pre0 = xp_t + jnp.dot(h0, whh0[...],
                                  preferred_element_type=jnp.float32,
                                  precision=lax.Precision.DEFAULT)
            h0, c0 = activate(pre0, c0)

            # layer 1: two back-to-back MXU dots (no misaligned concat)
            pre1 = (jnp.dot(h0, wih1[...],
                            preferred_element_type=jnp.float32,
                            precision=lax.Precision.DEFAULT)
                    + jnp.dot(h1, whh1[...],
                              preferred_element_type=jnp.float32,
                              precision=lax.Precision.DEFAULT)
                    + b1b)
            h1, c1 = activate(pre1, c1)
            return h0, c0, h1, c1

        z = jnp.zeros((Bp, Hp), jnp.float32)
        h0, c0, h1, c1 = lax.fori_loop(0, T, step, (z, z, z, z), unroll=True)

        # fc on the last timestep's top-layer hidden state:
        # VPU multiply + lane reduce (avoids a degenerate N=1 MXU matmul)
        out_ref[...] = (jnp.sum(h1 * fcw[...], axis=1, keepdims=True)
                        + fcb[...])

    return kernel


# ------------------------------ JAX wrapper ------------------------------- #
def stock_lstm_forward(x, w_slab, *, hp=HP):
    """x: (B, T, 1) float32, returns (B, 1) float32 (matches StockLSTM.forward)."""
    B, T, I = x.shape
    assert I == 1
    offs = _row_offsets(hp)
    assert w_slab.shape == (offs["rows"], 4 * hp), w_slab.shape

    Bp = max(8, ((B + 7) // 8) * 8)                       # pad batch to sublanes
    x_tm = jnp.transpose(x, (1, 0, 2)).astype(jnp.float32)        # (T, B, 1)
    x_tm = jnp.pad(x_tm, ((0, 0), (0, Bp - B), (0, 0)))           # (T, Bp, 1)
    x2d = x_tm.reshape(T * Bp, I)                                 # (T*Bp, 1)

    vmem = pl.BlockSpec(memory_space=pltpu.MemorySpace.VMEM)
    out = pl.pallas_call(
        _build_kernel(T, Bp, hp, offs),
        out_shape=jax.ShapeDtypeStruct((Bp, 1), jnp.float32),
        in_specs=[vmem, vmem],
        out_specs=vmem,
        scratch_shapes=[pltpu.VMEM((T * Bp, 4 * hp), jnp.float32)],
    )(x2d, w_slab)
    return out[:B]


# ----------------------- deterministic parameter init --------------------- #
def init_params(key, input_size=1, hidden_size=HIDDEN):
    """PyTorch-layout LSTM/Linear params (gate order i, f, g, o)."""
    H = hidden_size
    bound = 1.0 / float(H) ** 0.5
    keys = jax.random.split(key, 10)

    def unif(kk, shape):
        return jax.random.uniform(kk, shape, jnp.float32, minval=-bound, maxval=bound)

    return {
        "w_ih_l0": unif(keys[0], (4 * H, input_size)),
        "w_hh_l0": unif(keys[1], (4 * H, H)),
        "b_ih_l0": unif(keys[2], (4 * H,)),
        "b_hh_l0": unif(keys[3], (4 * H,)),
        "w_ih_l1": unif(keys[4], (4 * H, H)),
        "w_hh_l1": unif(keys[5], (4 * H, H)),
        "b_ih_l1": unif(keys[6], (4 * H,)),
        "b_hh_l1": unif(keys[7], (4 * H,)),
        "fc_w": unif(keys[8], (1, H)),
        "fc_b": unif(keys[9], (1,)),
    }


def pack_params(raw, *, hp=HP):
    """Pack all params into one lane-tile-padded VMEM slab (rows, 4*hp)."""
    H = raw["w_hh_l0"].shape[1]
    perm = jnp.array([0, 1, 3, 2])       # PyTorch (i, f, g, o) -> kernel (i, f, o, g)
    offs = _row_offsets(hp)

    def gate_w(w, in_dim, in_pad):
        # (4H, in) -> (in_pad, 4*hp); zero-padded rows AND per-gate columns
        w4 = w.reshape(4, H, in_dim)[perm]                       # (4, H, in)
        w4 = jnp.transpose(w4, (2, 0, 1))                        # (in, 4, H)
        w4 = jnp.pad(w4, ((0, in_pad - in_dim), (0, 0), (0, hp - H)))
        return w4.reshape(in_pad, 4 * hp)

    def gate_b(b_ih, b_hh):
        b = (b_ih + b_hh).reshape(4, H)[perm]                    # (4, H)
        return jnp.pad(b, ((0, 0), (0, hp - H))).reshape(4 * hp)

    W = jnp.zeros((offs["rows"], 4 * hp), jnp.float32)
    W = W.at[offs["wih0"]].set(gate_w(raw["w_ih_l0"], raw["w_ih_l0"].shape[1], 1)[0])
    W = W.at[offs["b0"]].set(gate_b(raw["b_ih_l0"], raw["b_hh_l0"]))
    W = W.at[offs["whh0"]:offs["whh0"] + hp].set(gate_w(raw["w_hh_l0"], H, hp))
    W = W.at[offs["wih1"]:offs["wih1"] + hp].set(gate_w(raw["w_ih_l1"], H, hp))
    W = W.at[offs["whh1"]:offs["whh1"] + hp].set(gate_w(raw["w_hh_l1"], H, hp))
    W = W.at[offs["b1"]].set(gate_b(raw["b_ih_l1"], raw["b_hh_l1"]))
    W = W.at[offs["fcw"], 0:hp].set(jnp.pad(raw["fc_w"][0], (0, hp - H)))
    W = W.at[offs["fcb"], 0].set(raw["fc_b"][0])
    return W


# -------------------------- pure-JAX reference ----------------------------- #
def reference_forward(x, raw):
    """Classic PyTorch-layout LSTM math (gate order i, f, g, o)."""
    B, T, I = x.shape
    H = raw["w_hh_l0"].shape[1]

    def cell(x_t, h, c, w_ih, w_hh, b_ih, b_hh):
        z = x_t @ w_ih.T + h @ w_hh.T + b_ih + b_hh              # (B, 4H)
        i = jax.nn.sigmoid(z[:, 0:H])
        f = jax.nn.sigmoid(z[:, H:2 * H])
        g = jnp.tanh(z[:, 2 * H:3 * H])
        o = jax.nn.sigmoid(z[:, 3 * H:4 * H])
        c_new = f * c + i * g
        return o * jnp.tanh(c_new), c_new

    h0 = c0 = h1 = c1 = jnp.zeros((B, H), jnp.float32)
    for t in range(T):
        x_t = x[:, t, :]
        h0, c0 = cell(x_t, h0, c0, raw["w_ih_l0"], raw["w_hh_l0"],
                      raw["b_ih_l0"], raw["b_hh_l0"])
        h1, c1 = cell(h0, h1, c1, raw["w_ih_l1"], raw["w_hh_l1"],
                      raw["b_ih_l1"], raw["b_hh_l1"])
    return h1 @ raw["fc_w"].T + raw["fc_b"]


if __name__ == "__main__":
    B, T, I, H = 4, 8, 1, HIDDEN
    key = jax.random.PRNGKey(0)
    k_x, k_p = jax.random.split(key)

    x = jax.random.normal(k_x, (B, T, I), jnp.float32)
    raw = init_params(k_p, input_size=I, hidden_size=H)
    w_slab = pack_params(raw)

    out = stock_lstm_forward(x, w_slab)
    out = jax.block_until_ready(out)

    ref = reference_forward(x, raw)
    assert out.shape == (B, 1), out.shape
    assert jnp.allclose(out, ref, atol=2e-3, rtol=2e-3), (out, ref)

    print("KERNEL_OK")
</pallas_src>

<mosaic_0001>
module attributes {stable_mosaic.version = 11 : i64} {
  func.func @kernel(%arg0: memref<64x1xf32, #tpu.memory_space<vmem>>, %arg1: memref<424x512xf32, #tpu.memory_space<vmem>>, %arg2: memref<8x1xf32, #tpu.memory_space<vmem>>, %arg3: memref<64x512xf32, #tpu.memory_space<vmem>>) attributes {dimension_semantics = [], scalar_prefetch = 0 : i64, scratch_operands = 1 : i64, tpu.core_type = #tpu.core_type<tc>} {
    %c0 = arith.constant 0 : index
    %c0_0 = arith.constant 0 : index
    %0 = vector.load %arg0[%c0, %c0_0] : memref<64x1xf32, #tpu.memory_space<vmem>>, vector<64x1xf32>
    %c0_1 = arith.constant 0 : index
    %c0_2 = arith.constant 0 : index
    %1 = vector.load %arg1[%c0_1, %c0_2] : memref<424x512xf32, #tpu.memory_space<vmem>>, vector<1x512xf32>
    %2 = vector.broadcast %0 : vector<64x1xf32> to vector<64x512xf32>
    %3 = vector.broadcast %1 : vector<1x512xf32> to vector<64x512xf32>
    %4 = arith.mulf %2, %3 : vector<64x512xf32>
    %c8 = arith.constant 8 : index
    %c0_3 = arith.constant 0 : index
    %5 = vector.load %arg1[%c8, %c0_3] : memref<424x512xf32, #tpu.memory_space<vmem>>, vector<1x512xf32>
    %6 = vector.broadcast %5 : vector<1x512xf32> to vector<64x512xf32>
    %7 = arith.addf %4, %6 : vector<64x512xf32>
    %c0_4 = arith.constant 0 : index
    %c0_5 = arith.constant 0 : index
    %8 = vector.load %arg3[%c0_4, %c0_5] : memref<64x512xf32, #tpu.memory_space<vmem>>, vector<64x512xf32>
    tpu.vector_store %arg3[%c0_4, %c0_5], %7 {strides = array<i32>} : memref<64x512xf32, #tpu.memory_space<vmem>>, vector<64x512xf32>,
    %c400 = arith.constant 400 : index
    %c0_6 = arith.constant 0 : index
    %9 = vector.load %arg1[%c400, %c0_6] : memref<424x512xf32, #tpu.memory_space<vmem>>, vector<1x512xf32>
    %10 = vector.shape_cast %9 : vector<1x512xf32> to vector<1x512xf32>
    %11 = vector.broadcast %10 : vector<1x512xf32> to vector<8x512xf32>
    %cst = arith.constant 0.000000e+00 : f32
    %12 = vector.broadcast %cst : f32 to vector<8x128xf32>
    %c0_i32 = arith.constant 0 : i32
    %c8_i32 = arith.constant 8 : i32
    %13 = arith.muli %c0_i32, %c8_i32 : i32
    %14 = tpu.assume_multiple %13, 8 : i32
    %15 = arith.index_cast %14 : i32 to index
    %c0_7 = arith.constant 0 : index
    %16 = vector.load %arg3[%15, %c0_7] : memref<64x512xf32, #tpu.memory_space<vmem>>, vector<8x512xf32>
    %c16 = arith.constant 16 : index
    %c0_8 = arith.constant 0 : index
    %17 = vector.load %arg1[%c16, %c0_8] : memref<424x512xf32, #tpu.memory_space<vmem>>, vector<128x512xf32>
    %cst_9 = arith.constant dense<0.000000e+00> : vector<8x512xf32>
    %18 = tpu.matmul %12, %17, %cst_9 {dimension_numbers = #tpu.dot_dimension_numbers<[1], [0], [0], [1], [0, 0, 1, 1], [], []>} : vector<8x128xf32>, vector<128x512xf32>, vector<8x512xf32> -> vector<8x512xf32>
    %19 = arith.addf %16, %18 : vector<8x512xf32>
    %20 = vector.extract_strided_slice %19 {offsets = [0, 0], sizes = [8, 384], strides = [1, 1]} : vector<8x512xf32> to vector<8x384xf32>
    %21 = arith.negf %20 : vector<8x384xf32>
    %22 = math.exp %21 : vector<8x384xf32>
    %cst_10 = arith.constant 1.000000e+00 : f32
    %23 = vector.broadcast %cst_10 : f32 to vector<8x384xf32>
    %24 = arith.addf %23, %22 : vector<8x384xf32>
    %25 = arith.divf %23, %24 : vector<8x384xf32>
    %26 = vector.extract_strided_slice %19 {offsets = [0, 384], sizes = [8, 128], strides = [1, 1]} : vector<8x512xf32> to vector<8x128xf32>
    %27 = math.tanh %26 : vector<8x128xf32>
    %28 = vector.extract_strided_slice %25 {offsets = [0, 0], sizes = [8, 128], strides = [1, 1]} : vector<8x384xf32> to vector<8x128xf32>
    %29 = vector.extract_strided_slice %25 {offsets = [0, 128], sizes = [8, 128], strides = [1, 1]} : vector<8x384xf32> to vector<8x128xf32>
    %30 = vector.extract_strided_slice %25 {offsets = [0, 256], sizes = [8, 128], strides = [1, 1]} : vector<8x384xf32> to vector<8x128xf32>
    %31 = arith.mulf %29, %12 : vector<8x128xf32>
    %32 = arith.mulf %28, %27 : vector<8x128xf32>
    %33 = arith.addf %31, %32 : vector<8x128xf32>
    %34 = math.tanh %33 : vector<8x128xf32>
    %35 = arith.mulf %30, %34 : vector<8x128xf32>
    %c144 = arith.constant 144 : index
    %c0_11 = arith.constant 0 : index
    %36 = vector.load %arg1[%c144, %c0_11] : memref<424x512xf32, #tpu.memory_space<vmem>>, vector<128x512xf32>
    %cst_12 = arith.constant dense<0.000000e+00> : vector<8x512xf32>
    %37 = tpu.matmul %35, %36, %cst_12 {dimension_numbers = #tpu.dot_dimension_numbers<[1], [0], [0], [1], [0, 0, 1, 1], [], []>} : vector<8x128xf32>, vector<128x512xf32>, vector<8x512xf32> -> vector<8x512xf32>
    %c272 = arith.constant 272 : index
    %c0_13 = arith.constant 0 : index
    %38 = vector.load %arg1[%c272, %c0_13] : memref<424x512xf32, #tpu.memory_space<vmem>>, vector<128x512xf32>
    %cst_14 = arith.constant dense<0.000000e+00> : vector<8x512xf32>
    %39 = tpu.matmul %12, %38, %cst_14 {dimension_numbers = #tpu.dot_dimension_numbers<[1], [0], [0], [1], [0, 0, 1, 1], [], []>} : vector<8x128xf32>, vector<128x512xf32>, vector<8x512xf32> -> vector<8x512xf32>
    %40 = arith.addf %37, %39 : vector<8x512xf32>
    %41 = arith.addf %40, %11 : vector<8x512xf32>
    %42 = vector.extract_strided_slice %41 {offsets = [0, 0], sizes = [8, 384], strides = [1, 1]} : vector<8x512xf32> to vector<8x384xf32>
    %43 = arith.negf %42 : vector<8x384xf32>
    %44 = math.exp %43 : vector<8x384xf32>
    %cst_15 = arith.constant 1.000000e+00 : f32
    %45 = vector.broadcast %cst_15 : f32 to vector<8x384xf32>
    %46 = arith.addf %45, %44 : vector<8x384xf32>
    %47 = arith.divf %45, %46 : vector<8x384xf32>
    %48 = vector.extract_strided_slice %41 {offsets = [0, 384], sizes = [8, 128], strides = [1, 1]} : vector<8x512xf32> to vector<8x128xf32>
    %49 = math.tanh %48 : vector<8x128xf32>
    %50 = vector.extract_strided_slice %47 {offsets = [0, 0], sizes = [8, 128], strides = [1, 1]} : vector<8x384xf32> to vector<8x128xf32>
    %51 = vector.extract_strided_slice %47 {offsets = [0, 128], sizes = [8, 128], strides = [1, 1]} : vector<8x384xf32> to vector<8x128xf32>
    %52 = vector.extract_strided_slice %47 {offsets = [0, 256], sizes = [8, 128], strides = [1, 1]} : vector<8x384xf32> to vector<8x128xf32>
    %53 = arith.mulf %51, %12 : vector<8x128xf32>
    %54 = arith.mulf %50, %49 : vector<8x128xf32>
    %55 = arith.addf %53, %54 : vector<8x128xf32>
    %56 = math.tanh %55 : vector<8x128xf32>
    %57 = arith.mulf %52, %56 : vector<8x128xf32>
    %c1_i32 = arith.constant 1 : i32
    %c8_i32_16 = arith.constant 8 : i32
    %58 = arith.muli %c1_i32, %c8_i32_16 : i32
    %59 = tpu.assume_multiple %58, 8 : i32
    %60 = arith.index_cast %59 : i32 to index
    %c0_17 = arith.constant 0 : index
    %61 = vector.load %arg3[%60, %c0_17] : memref<64x512xf32, #tpu.memory_space<vmem>>, vector<8x512xf32>
    %c16_18 = arith.constant 16 : index
    %c0_19 = arith.constant 0 : index
    %62 = vector.load %arg1[%c16_18, %c0_19] : memref<424x512xf32, #tpu.memory_space<vmem>>, vector<128x512xf32>
    %cst_20 = arith.constant dense<0.000000e+00> : vector<8x512xf32>
    %63 = tpu.matmul %35, %62, %cst_20 {dimension_numbers = #tpu.dot_dimension_numbers<[1], [0], [0], [1], [0, 0, 1, 1], [], []>} : vector<8x128xf32>, vector<128x512xf32>, vector<8x512xf32> -> vector<8x512xf32>
    %64 = arith.addf %61, %63 : vector<8x512xf32>
    %65 = vector.extract_strided_slice %64 {offsets = [0, 0], sizes = [8, 384], strides = [1, 1]} : vector<8x512xf32> to vector<8x384xf32>
    %66 = arith.negf %65 : vector<8x384xf32>
    %67 = math.exp %66 : vector<8x384xf32>
    %cst_21 = arith.constant 1.000000e+00 : f32
    %68 = vector.broadcast %cst_21 : f32 to vector<8x384xf32>
    %69 = arith.addf %68, %67 : vector<8x384xf32>
    %70 = arith.divf %68, %69 : vector<8x384xf32>
    %71 = vector.extract_strided_slice %64 {offsets = [0, 384], sizes = [8, 128], strides = [1, 1]} : vector<8x512xf32> to vector<8x128xf32>
    %72 = math.tanh %71 : vector<8x128xf32>
    %73 = vector.extract_strided_slice %70 {offsets = [0, 0], sizes = [8, 128], strides = [1, 1]} : vector<8x384xf32> to vector<8x128xf32>
    %74 = vector.extract_strided_slice %70 {offsets = [0, 128], sizes = [8, 128], strides = [1, 1]} : vector<8x384xf32> to vector<8x128xf32>
    %75 = vector.extract_strided_slice %70 {offsets = [0, 256], sizes = [8, 128], strides = [1, 1]} : vector<8x384xf32> to vector<8x128xf32>
    %76 = arith.mulf %74, %33 : vector<8x128xf32>
    %77 = arith.mulf %73, %72 : vector<8x128xf32>
    %78 = arith.addf %76, %77 : vector<8x128xf32>
    %79 = math.tanh %78 : vector<8x128xf32>
    %80 = arith.mulf %75, %79 : vector<8x128xf32>
    %c144_22 = arith.constant 144 : index
    %c0_23 = arith.constant 0 : index
    %81 = vector.load %arg1[%c144_22, %c0_23] : memref<424x512xf32, #tpu.memory_space<vmem>>, vector<128x512xf32>
    %cst_24 = arith.constant dense<0.000000e+00> : vector<8x512xf32>
    %82 = tpu.matmul %80, %81, %cst_24 {dimension_numbers = #tpu.dot_dimension_numbers<[1], [0], [0], [1], [0, 0, 1, 1], [], []>} : vector<8x128xf32>, vector<128x512xf32>, vector<8x512xf32> -> vector<8x512xf32>
    %c272_25 = arith.constant 272 : index
    %c0_26 = arith.constant 0 : index
    %83 = vector.load %arg1[%c272_25, %c0_26] : memref<424x512xf32, #tpu.memory_space<vmem>>, vector<128x512xf32>
    %cst_27 = arith.constant dense<0.000000e+00> : vector<8x512xf32>
    %84 = tpu.matmul %57, %83, %cst_27 {dimension_numbers = #tpu.dot_dimension_numbers<[1], [0], [0], [1], [0, 0, 1, 1], [], []>} : vector<8x128xf32>, vector<128x512xf32>, vector<8x512xf32> -> vector<8x512xf32>
    %85 = arith.addf %82, %84 : vector<8x512xf32>
    %86 = arith.addf %85, %11 : vector<8x512xf32>
    %87 = vector.extract_strided_slice %86 {offsets = [0, 0], sizes = [8, 384], strides = [1, 1]} : vector<8x512xf32> to vector<8x384xf32>
    %88 = arith.negf %87 : vector<8x384xf32>
    %89 = math.exp %88 : vector<8x384xf32>
    %cst_28 = arith.constant 1.000000e+00 : f32
    %90 = vector.broadcast %cst_28 : f32 to vector<8x384xf32>
    %91 = arith.addf %90, %89 : vector<8x384xf32>
    %92 = arith.divf %90, %91 : vector<8x384xf32>
    %93 = vector.extract_strided_slice %86 {offsets = [0, 384], sizes = [8, 128], strides = [1, 1]} : vector<8x512xf32> to vector<8x128xf32>
    %94 = math.tanh %93 : vector<8x128xf32>
    %95 = vector.extract_strided_slice %92 {offsets = [0, 0], sizes = [8, 128], strides = [1, 1]} : vector<8x384xf32> to vector<8x128xf32>
    %96 = vector.extract_strided_slice %92 {offsets = [0, 128], sizes = [8, 128], strides = [1, 1]} : vector<8x384xf32> to vector<8x128xf32>
    %97 = vector.extract_strided_slice %92 {offsets = [0, 256], sizes = [8, 128], strides = [1, 1]} : vector<8x384xf32> to vector<8x128xf32>
    %98 = arith.mulf %96, %55 : vector<8x128xf32>
    %99 = arith.mulf %95, %94 : vector<8x128xf32>
    %100 = arith.addf %98, %99 : vector<8x128xf32>
    %101 = math.tanh %100 : vector<8x128xf32>
    %102 = arith.mulf %97, %101 : vector<8x128xf32>
    %c2_i32 = arith.constant 2 : i32
    %c8_i32_29 = arith.constant 8 : i32
    %103 = arith.muli %c2_i32, %c8_i32_29 : i32
    %104 = tpu.assume_multiple %103, 8 : i32
    %105 = arith.index_cast %104 : i32 to index
    %c0_30 = arith.constant 0 : index
    %106 = vector.load %arg3[%105, %c0_30] : memref<64x512xf32, #tpu.memory_space<vmem>>, vector<8x512xf32>
    %c16_31 = arith.constant 16 : index
    %c0_32 = arith.constant 0 : index
    %107 = vector.load %arg1[%c16_31, %c0_32] : memref<424x512xf32, #tpu.memory_space<vmem>>, vector<128x512xf32>
    %cst_33 = arith.constant dense<0.000000e+00> : vector<8x512xf32>
    %108 = tpu.matmul %80, %107, %cst_33 {dimension_numbers = #tpu.dot_dimension_numbers<[1], [0], [0], [1], [0, 0, 1, 1], [], []>} : vector<8x128xf32>, vector<128x512xf32>, vector<8x512xf32> -> vector<8x512xf32>
    %109 = arith.addf %106, %108 : vector<8x512xf32>
    %110 = vector.extract_strided_slice %109 {offsets = [0, 0], sizes = [8, 384], strides = [1, 1]} : vector<8x512xf32> to vector<8x384xf32>
    %111 = arith.negf %110 : vector<8x384xf32>
    %112 = math.exp %111 : vector<8x384xf32>
    %cst_34 = arith.constant 1.000000e+00 : f32
    %113 = vector.broadcast %cst_34 : f32 to vector<8x384xf32>
    %114 = arith.addf %113, %112 : vector<8x384xf32>
    %115 = arith.divf %113, %114 : vector<8x384xf32>
    %116 = vector.extract_strided_slice %109 {offsets = [0, 384], sizes = [8, 128], strides = [1, 1]} : vector<8x512xf32> to vector<8x128xf32>
    %117 = math.tanh %116 : vector<8x128xf32>
    %118 = vector.extract_strided_slice %115 {offsets = [0, 0], sizes = [8, 128], strides = [1, 1]} : vector<8x384xf32> to vector<8x128xf32>
    %119 = vector.extract_strided_slice %115 {offsets = [0, 128], sizes = [8, 128], strides = [1, 1]} : vector<8x384xf32> to vector<8x128xf32>
    %120 = vector.extract_strided_slice %115 {offsets = [0, 256], sizes = [8, 128], strides = [1, 1]} : vector<8x384xf32> to vector<8x128xf32>
    %121 = arith.mulf %119, %78 : vector<8x128xf32>
    %122 = arith.mulf %118, %117 : vector<8x128xf32>
    %123 = arith.addf %121, %122 : vector<8x128xf32>
    %124 = math.tanh %123 : vector<8x128xf32>
    %125 = arith.mulf %120, %124 : vector<8x128xf32>
    %c144_35 = arith.constant 144 : index
    %c0_36 = arith.constant 0 : index
    %126 = vector.load %arg1[%c144_35, %c0_36] : memref<424x512xf32, #tpu.memory_space<vmem>>, vector<128x512xf32>
    %cst_37 = arith.constant dense<0.000000e+00> : vector<8x512xf32>
    %127 = tpu.matmul %125, %126, %cst_37 {dimension_numbers = #tpu.dot_dimension_numbers<[1], [0], [0], [1], [0, 0, 1, 1], [], []>} : vector<8x128xf32>, vector<128x512xf32>, vector<8x512xf32> -> vector<8x512xf32>
    %c272_38 = arith.constant 272 : index
    %c0_39 = arith.constant 0 : index
    %128 = vector.load %arg1[%c272_38, %c0_39] : memref<424x512xf32, #tpu.memory_space<vmem>>, vector<128x512xf32>
    %cst_40 = arith.constant dense<0.000000e+00> : vector<8x512xf32>
    %129 = tpu.matmul %102, %128, %cst_40 {dimension_numbers = #tpu.dot_dimension_numbers<[1], [0], [0], [1], [0, 0, 1, 1], [], []>} : vector<8x128xf32>, vector<128x512xf32>, vector<8x512xf32> -> vector<8x512xf32>
    %130 = arith.addf %127, %129 : vector<8x512xf32>
    %131 = arith.addf %130, %11 : vector<8x512xf32>
    %132 = vector.extract_strided_slice %131 {offsets = [0, 0], sizes = [8, 384], strides = [1, 1]} : vector<8x512xf32> to vector<8x384xf32>
    %133 = arith.negf %132 : vector<8x384xf32>
    %134 = math.exp %133 : vector<8x384xf32>
    %cst_41 = arith.constant 1.000000e+00 : f32
    %135 = vector.broadcast %cst_41 : f32 to vector<8x384xf32>
    %136 = arith.addf %135, %134 : vector<8x384xf32>
    %137 = arith.divf %135, %136 : vector<8x384xf32>
    %138 = vector.extract_strided_slice %131 {offsets = [0, 384], sizes = [8, 128], strides = [1, 1]} : vector<8x512xf32> to vector<8x128xf32>
    %139 = math.tanh %138 : vector<8x128xf32>
    %140 = vector.extract_strided_slice %137 {offsets = [0, 0], sizes = [8, 128], strides = [1, 1]} : vector<8x384xf32> to vector<8x128xf32>
    %141 = vector.extract_strided_slice %137 {offsets = [0, 128], sizes = [8, 128], strides = [1, 1]} : vector<8x384xf32> to vector<8x128xf32>
    %142 = vector.extract_strided_slice %137 {offsets = [0, 256], sizes = [8, 128], strides = [1, 1]} : vector<8x384xf32> to vector<8x128xf32>
    %143 = arith.mulf %141, %100 : vector<8x128xf32>
    %144 = arith.mulf %140, %139 : vector<8x128xf32>
    %145 = arith.addf %143, %144 : vector<8x128xf32>
    %146 = math.tanh %145 : vector<8x128xf32>
    %147 = arith.mulf %142, %146 : vector<8x128xf32>
    %c3_i32 = arith.constant 3 : i32
    %c8_i32_42 = arith.constant 8 : i32
    %148 = arith.muli %c3_i32, %c8_i32_42 : i32
    %149 = tpu.assume_multiple %148, 8 : i32
    %150 = arith.index_cast %149 : i32 to index
    %c0_43 = arith.constant 0 : index
    %151 = vector.load %arg3[%150, %c0_43] : memref<64x512xf32, #tpu.memory_space<vmem>>, vector<8x512xf32>
    %c16_44 = arith.constant 16 : index
    %c0_45 = arith.constant 0 : index
    %152 = vector.load %arg1[%c16_44, %c0_45] : memref<424x512xf32, #tpu.memory_space<vmem>>, vector<128x512xf32>
    %cst_46 = arith.constant dense<0.000000e+00> : vector<8x512xf32>
    %153 = tpu.matmul %125, %152, %cst_46 {dimension_numbers = #tpu.dot_dimension_numbers<[1], [0], [0], [1], [0, 0, 1, 1], [], []>} : vector<8x128xf32>, vector<128x512xf32>, vector<8x512xf32> -> vector<8x512xf32>
    %154 = arith.addf %151, %153 : vector<8x512xf32>
    %155 = vector.extract_strided_slice %154 {offsets = [0, 0], sizes = [8, 384], strides = [1, 1]} : vector<8x512xf32> to vector<8x384xf32>
    %156 = arith.negf %155 : vector<8x384xf32>
    %157 = math.exp %156 : vector<8x384xf32>
    %cst_47 = arith.constant 1.000000e+00 : f32
    %158 = vector.broadcast %cst_47 : f32 to vector<8x384xf32>
    %159 = arith.addf %158, %157 : vector<8x384xf32>
    %160 = arith.divf %158, %159 : vector<8x384xf32>
    %161 = vector.extract_strided_slice %154 {offsets = [0, 384], sizes = [8, 128], strides = [1, 1]} : vector<8x512xf32> to vector<8x128xf32>
    %162 = math.tanh %161 : vector<8x128xf32>
    %163 = vector.extract_strided_slice %160 {offsets = [0, 0], sizes = [8, 128], strides = [1, 1]} : vector<8x384xf32> to vector<8x128xf32>
    %164 = vector.extract_strided_slice %160 {offsets = [0, 128], sizes = [8, 128], strides = [1, 1]} : vector<8x384xf32> to vector<8x128xf32>
    %165 = vector.extract_strided_slice %160 {offsets = [0, 256], sizes = [8, 128], strides = [1, 1]} : vector<8x384xf32> to vector<8x128xf32>
    %166 = arith.mulf %164, %123 : vector<8x128xf32>
    %167 = arith.mulf %163, %162 : vector<8x128xf32>
    %168 = arith.addf %166, %167 : vector<8x128xf32>
    %169 = math.tanh %168 : vector<8x128xf32>
    %170 = arith.mulf %165, %169 : vector<8x128xf32>
    %c144_48 = arith.constant 144 : index
    %c0_49 = arith.constant 0 : index
    %171 = vector.load %arg1[%c144_48, %c0_49] : memref<424x512xf32, #tpu.memory_space<vmem>>, vector<128x512xf32>
    %cst_50 = arith.constant dense<0.000000e+00> : vector<8x512xf32>
    %172 = tpu.matmul %170, %171, %cst_50 {dimension_numbers = #tpu.dot_dimension_numbers<[1], [0], [0], [1], [0, 0, 1, 1], [], []>} : vector<8x128xf32>, vector<128x512xf32>, vector<8x512xf32> -> vector<8x512xf32>
    %c272_51 = arith.constant 272 : index
    %c0_52 = arith.constant 0 : index
    %173 = vector.load %arg1[%c272_51, %c0_52] : memref<424x512xf32, #tpu.memory_space<vmem>>, vector<128x512xf32>
    %cst_53 = arith.constant dense<0.000000e+00> : vector<8x512xf32>
    %174 = tpu.matmul %147, %173, %cst_53 {dimension_numbers = #tpu.dot_dimension_numbers<[1], [0], [0], [1], [0, 0, 1, 1], [], []>} : vector<8x128xf32>, vector<128x512xf32>, vector<8x512xf32> -> vector<8x512xf32>
    %175 = arith.addf %172, %174 : vector<8x512xf32>
    %176 = arith.addf %175, %11 : vector<8x512xf32>
    %177 = vector.extract_strided_slice %176 {offsets = [0, 0], sizes = [8, 384], strides = [1, 1]} : vector<8x512xf32> to vector<8x384xf32>
    %178 = arith.negf %177 : vector<8x384xf32>
    %179 = math.exp %178 : vector<8x384xf32>
    %cst_54 = arith.constant 1.000000e+00 : f32
    %180 = vector.broadcast %cst_54 : f32 to vector<8x384xf32>
    %181 = arith.addf %180, %179 : vector<8x384xf32>
    %182 = arith.divf %180, %181 : vector<8x384xf32>
    %183 = vector.extract_strided_slice %176 {offsets = [0, 384], sizes = [8, 128], strides = [1, 1]} : vector<8x512xf32> to vector<8x128xf32>
    %184 = math.tanh %183 : vector<8x128xf32>
    %185 = vector.extract_strided_slice %182 {offsets = [0, 0], sizes = [8, 128], strides = [1, 1]} : vector<8x384xf32> to vector<8x128xf32>
    %186 = vector.extract_strided_slice %182 {offsets = [0, 128], sizes = [8, 128], strides = [1, 1]} : vector<8x384xf32> to vector<8x128xf32>
    %187 = vector.extract_strided_slice %182 {offsets = [0, 256], sizes = [8, 128], strides = [1, 1]} : vector<8x384xf32> to vector<8x128xf32>
    %188 = arith.mulf %186, %145 : vector<8x128xf32>
    %189 = arith.mulf %185, %184 : vector<8x128xf32>
    %190 = arith.addf %188, %189 : vector<8x128xf32>
    %191 = math.tanh %190 : vector<8x128xf32>
    %192 = arith.mulf %187, %191 : vector<8x128xf32>
    %c4_i32 = arith.constant 4 : i32
    %c8_i32_55 = arith.constant 8 : i32
    %193 = arith.muli %c4_i32, %c8_i32_55 : i32
    %194 = tpu.assume_multiple %193, 8 : i32
    %195 = arith.index_cast %194 : i32 to index
    %c0_56 = arith.constant 0 : index
    %196 = vector.load %arg3[%195, %c0_56] : memref<64x512xf32, #tpu.memory_space<vmem>>, vector<8x512xf32>
    %c16_57 = arith.constant 16 : index
    %c0_58 = arith.constant 0 : index
    %197 = vector.load %arg1[%c16_57, %c0_58] : memref<424x512xf32, #tpu.memory_space<vmem>>, vector<128x512xf32>
    %cst_59 = arith.constant dense<0.000000e+00> : vector<8x512xf32>
    %198 = tpu.matmul %170, %197, %cst_59 {dimension_numbers = #tpu.dot_dimension_numbers<[1], [0], [0], [1], [0, 0, 1, 1], [], []>} : vector<8x128xf32>, vector<128x512xf32>, vector<8x512xf32> -> vector<8x512xf32>
    %199 = arith.addf %196, %198 : vector<8x512xf32>
    %200 = vector.extract_strided_slice %199 {offsets = [0, 0], sizes = [8, 384], strides = [1, 1]} : vector<8x512xf32> to vector<8x384xf32>
    %201 = arith.negf %200 : vector<8x384xf32>
    %202 = math.exp %201 : vector<8x384xf32>
    %cst_60 = arith.constant 1.000000e+00 : f32
    %203 = vector.broadcast %cst_60 : f32 to vector<8x384xf32>
    %204 = arith.addf %203, %202 : vector<8x384xf32>
    %205 = arith.divf %203, %204 : vector<8x384xf32>
    %206 = vector.extract_strided_slice %199 {offsets = [0, 384], sizes = [8, 128], strides = [1, 1]} : vector<8x512xf32> to vector<8x128xf32>
    %207 = math.tanh %206 : vector<8x128xf32>
    %208 = vector.extract_strided_slice %205 {offsets = [0, 0], sizes = [8, 128], strides = [1, 1]} : vector<8x384xf32> to vector<8x128xf32>
    %209 = vector.extract_strided_slice %205 {offsets = [0, 128], sizes = [8, 128], strides = [1, 1]} : vector<8x384xf32> to vector<8x128xf32>
    %210 = vector.extract_strided_slice %205 {offsets = [0, 256], sizes = [8, 128], strides = [1, 1]} : vector<8x384xf32> to vector<8x128xf32>
    %211 = arith.mulf %209, %168 : vector<8x128xf32>
    %212 = arith.mulf %208, %207 : vector<8x128xf32>
    %213 = arith.addf %211, %212 : vector<8x128xf32>
    %214 = math.tanh %213 : vector<8x128xf32>
    %215 = arith.mulf %210, %214 : vector<8x128xf32>
    %c144_61 = arith.constant 144 : index
    %c0_62 = arith.constant 0 : index
    %216 = vector.load %arg1[%c144_61, %c0_62] : memref<424x512xf32, #tpu.memory_space<vmem>>, vector<128x512xf32>
    %cst_63 = arith.constant dense<0.000000e+00> : vector<8x512xf32>
    %217 = tpu.matmul %215, %216, %cst_63 {dimension_numbers = #tpu.dot_dimension_numbers<[1], [0], [0], [1], [0, 0, 1, 1], [], []>} : vector<8x128xf32>, vector<128x512xf32>, vector<8x512xf32> -> vector<8x512xf32>
    %c272_64 = arith.constant 272 : index
    %c0_65 = arith.constant 0 : index
    %218 = vector.load %arg1[%c272_64, %c0_65] : memref<424x512xf32, #tpu.memory_space<vmem>>, vector<128x512xf32>
    %cst_66 = arith.constant dense<0.000000e+00> : vector<8x512xf32>
    %219 = tpu.matmul %192, %218, %cst_66 {dimension_numbers = #tpu.dot_dimension_numbers<[1], [0], [0], [1], [0, 0, 1, 1], [], []>} : vector<8x128xf32>, vector<128x512xf32>, vector<8x512xf32> -> vector<8x512xf32>
    %220 = arith.addf %217, %219 : vector<8x512xf32>
    %221 = arith.addf %220, %11 : vector<8x512xf32>
    %222 = vector.extract_strided_slice %221 {offsets = [0, 0], sizes = [8, 384], strides = [1, 1]} : vector<8x512xf32> to vector<8x384xf32>
    %223 = arith.negf %222 : vector<8x384xf32>
    %224 = math.exp %223 : vector<8x384xf32>
    %cst_67 = arith.constant 1.000000e+00 : f32
    %225 = vector.broadcast %cst_67 : f32 to vector<8x384xf32>
    %226 = arith.addf %225, %224 : vector<8x384xf32>
    %227 = arith.divf %225, %226 : vector<8x384xf32>
    %228 = vector.extract_strided_slice %221 {offsets = [0, 384], sizes = [8, 128], strides = [1, 1]} : vector<8x512xf32> to vector<8x128xf32>
    %229 = math.tanh %228 : vector<8x128xf32>
    %230 = vector.extract_strided_slice %227 {offsets = [0, 0], sizes = [8, 128], strides = [1, 1]} : vector<8x384xf32> to vector<8x128xf32>
    %231 = vector.extract_strided_slice %227 {offsets = [0, 128], sizes = [8, 128], strides = [1, 1]} : vector<8x384xf32> to vector<8x128xf32>
    %232 = vector.extract_strided_slice %227 {offsets = [0, 256], sizes = [8, 128], strides = [1, 1]} : vector<8x384xf32> to vector<8x128xf32>
    %233 = arith.mulf %231, %190 : vector<8x128xf32>
    %234 = arith.mulf %230, %229 : vector<8x128xf32>
    %235 = arith.addf %233, %234 : vector<8x128xf32>
    %236 = math.tanh %235 : vector<8x128xf32>
    %237 = arith.mulf %232, %236 : vector<8x128xf32>
    %c5_i32 = arith.constant 5 : i32
    %c8_i32_68 = arith.constant 8 : i32
    %238 = arith.muli %c5_i32, %c8_i32_68 : i32
    %239 = tpu.assume_multiple %238, 8 : i32
    %240 = arith.index_cast %239 : i32 to index
    %c0_69 = arith.constant 0 : index
    %241 = vector.load %arg3[%240, %c0_69] : memref<64x512xf32, #tpu.memory_space<vmem>>, vector<8x512xf32>
    %c16_70 = arith.constant 16 : index
    %c0_71 = arith.constant 0 : index
    %242 = vector.load %arg1[%c16_70, %c0_71] : memref<424x512xf32, #tpu.memory_space<vmem>>, vector<128x512xf32>
    %cst_72 = arith.constant dense<0.000000e+00> : vector<8x512xf32>
    %243 = tpu.matmul %215, %242, %cst_72 {dimension_numbers = #tpu.dot_dimension_numbers<[1], [0], [0], [1], [0, 0, 1, 1], [], []>} : vector<8x128xf32>, vector<128x512xf32>, vector<8x512xf32> -> vector<8x512xf32>
    %244 = arith.addf %241, %243 : vector<8x512xf32>
    %245 = vector.extract_strided_slice %244 {offsets = [0, 0], sizes = [8, 384], strides = [1, 1]} : vector<8x512xf32> to vector<8x384xf32>
    %246 = arith.negf %245 : vector<8x384xf32>
    %247 = math.exp %246 : vector<8x384xf32>
    %cst_73 = arith.constant 1.000000e+00 : f32
    %248 = vector.broadcast %cst_73 : f32 to vector<8x384xf32>
    %249 = arith.addf %248, %247 : vector<8x384xf32>
    %250 = arith.divf %248, %249 : vector<8x384xf32>
    %251 = vector.extract_strided_slice %244 {offsets = [0, 384], sizes = [8, 128], strides = [1, 1]} : vector<8x512xf32> to vector<8x128xf32>
    %252 = math.tanh %251 : vector<8x128xf32>
    %253 = vector.extract_strided_slice %250 {offsets = [0, 0], sizes = [8, 128], strides = [1, 1]} : vector<8x384xf32> to vector<8x128xf32>
    %254 = vector.extract_strided_slice %250 {offsets = [0, 128], sizes = [8, 128], strides = [1, 1]} : vector<8x384xf32> to vector<8x128xf32>
    %255 = vector.extract_strided_slice %250 {offsets = [0, 256], sizes = [8, 128], strides = [1, 1]} : vector<8x384xf32> to vector<8x128xf32>
    %256 = arith.mulf %254, %213 : vector<8x128xf32>
    %257 = arith.mulf %253, %252 : vector<8x128xf32>
    %258 = arith.addf %256, %257 : vector<8x128xf32>
    %259 = math.tanh %258 : vector<8x128xf32>
    %260 = arith.mulf %255, %259 : vector<8x128xf32>
    %c144_74 = arith.constant 144 : index
    %c0_75 = arith.constant 0 : index
    %261 = vector.load %arg1[%c144_74, %c0_75] : memref<424x512xf32, #tpu.memory_space<vmem>>, vector<128x512xf32>
    %cst_76 = arith.constant dense<0.000000e+00> : vector<8x512xf32>
    %262 = tpu.matmul %260, %261, %cst_76 {dimension_numbers = #tpu.dot_dimension_numbers<[1], [0], [0], [1], [0, 0, 1, 1], [], []>} : vector<8x128xf32>, vector<128x512xf32>, vector<8x512xf32> -> vector<8x512xf32>
    %c272_77 = arith.constant 272 : index
    %c0_78 = arith.constant 0 : index
    %263 = vector.load %arg1[%c272_77, %c0_78] : memref<424x512xf32, #tpu.memory_space<vmem>>, vector<128x512xf32>
    %cst_79 = arith.constant dense<0.000000e+00> : vector<8x512xf32>
    %264 = tpu.matmul %237, %263, %cst_79 {dimension_numbers = #tpu.dot_dimension_numbers<[1], [0], [0], [1], [0, 0, 1, 1], [], []>} : vector<8x128xf32>, vector<128x512xf32>, vector<8x512xf32> -> vector<8x512xf32>
    %265 = arith.addf %262, %264 : vector<8x512xf32>
    %266 = arith.addf %265, %11 : vector<8x512xf32>
    %267 = vector.extract_strided_slice %266 {offsets = [0, 0], sizes = [8, 384], strides = [1, 1]} : vector<8x512xf32> to vector<8x384xf32>
    %268 = arith.negf %267 : vector<8x384xf32>
    %269 = math.exp %268 : vector<8x384xf32>
    %cst_80 = arith.constant 1.000000e+00 : f32
    %270 = vector.broadcast %cst_80 : f32 to vector<8x384xf32>
    %271 = arith.addf %270, %269 : vector<8x384xf32>
    %272 = arith.divf %270, %271 : vector<8x384xf32>
    %273 = vector.extract_strided_slice %266 {offsets = [0, 384], sizes = [8, 128], strides = [1, 1]} : vector<8x512xf32> to vector<8x128xf32>
    %274 = math.tanh %273 : vector<8x128xf32>
    %275 = vector.extract_strided_slice %272 {offsets = [0, 0], sizes = [8, 128], strides = [1, 1]} : vector<8x384xf32> to vector<8x128xf32>
    %276 = vector.extract_strided_slice %272 {offsets = [0, 128], sizes = [8, 128], strides = [1, 1]} : vector<8x384xf32> to vector<8x128xf32>
    %277 = vector.extract_strided_slice %272 {offsets = [0, 256], sizes = [8, 128], strides = [1, 1]} : vector<8x384xf32> to vector<8x128xf32>
    %278 = arith.mulf %276, %235 : vector<8x128xf32>
    %279 = arith.mulf %275, %274 : vector<8x128xf32>
    %280 = arith.addf %278, %279 : vector<8x128xf32>
    %281 = math.tanh %280 : vector<8x128xf32>
    %282 = arith.mulf %277, %281 : vector<8x128xf32>
    %c6_i32 = arith.constant 6 : i32
    %c8_i32_81 = arith.constant 8 : i32
    %283 = arith.muli %c6_i32, %c8_i32_81 : i32
    %284 = tpu.assume_multiple %283, 8 : i32
    %285 = arith.index_cast %284 : i32 to index
    %c0_82 = arith.constant 0 : index
    %286 = vector.load %arg3[%285, %c0_82] : memref<64x512xf32, #tpu.memory_space<vmem>>, vector<8x512xf32>
    %c16_83 = arith.constant 16 : index
    %c0_84 = arith.constant 0 : index
    %287 = vector.load %arg1[%c16_83, %c0_84] : memref<424x512xf32, #tpu.memory_space<vmem>>, vector<128x512xf32>
    %cst_85 = arith.constant dense<0.000000e+00> : vector<8x512xf32>
    %288 = tpu.matmul %260, %287, %cst_85 {dimension_numbers = #tpu.dot_dimension_numbers<[1], [0], [0], [1], [0, 0, 1, 1], [], []>} : vector<8x128xf32>, vector<128x512xf32>, vector<8x512xf32> -> vector<8x512xf32>
    %289 = arith.addf %286, %288 : vector<8x512xf32>
    %290 = vector.extract_strided_slice %289 {offsets = [0, 0], sizes = [8, 384], strides = [1, 1]} : vector<8x512xf32> to vector<8x384xf32>
    %291 = arith.negf %290 : vector<8x384xf32>
    %292 = math.exp %291 : vector<8x384xf32>
    %cst_86 = arith.constant 1.000000e+00 : f32
    %293 = vector.broadcast %cst_86 : f32 to vector<8x384xf32>
    %294 = arith.addf %293, %292 : vector<8x384xf32>
    %295 = arith.divf %293, %294 : vector<8x384xf32>
    %296 = vector.extract_strided_slice %289 {offsets = [0, 384], sizes = [8, 128], strides = [1, 1]} : vector<8x512xf32> to vector<8x128xf32>
    %297 = math.tanh %296 : vector<8x128xf32>
    %298 = vector.extract_strided_slice %295 {offsets = [0, 0], sizes = [8, 128], strides = [1, 1]} : vector<8x384xf32> to vector<8x128xf32>
    %299 = vector.extract_strided_slice %295 {offsets = [0, 128], sizes = [8, 128], strides = [1, 1]} : vector<8x384xf32> to vector<8x128xf32>
    %300 = vector.extract_strided_slice %295 {offsets = [0, 256], sizes = [8, 128], strides = [1, 1]} : vector<8x384xf32> to vector<8x128xf32>
    %301 = arith.mulf %299, %258 : vector<8x128xf32>
    %302 = arith.mulf %298, %297 : vector<8x128xf32>
    %303 = arith.addf %301, %302 : vector<8x128xf32>
    %304 = math.tanh %303 : vector<8x128xf32>
    %305 = arith.mulf %300, %304 : vector<8x128xf32>
    %c144_87 = arith.constant 144 : index
    %c0_88 = arith.constant 0 : index
    %306 = vector.load %arg1[%c144_87, %c0_88] : memref<424x512xf32, #tpu.memory_space<vmem>>, vector<128x512xf32>
    %cst_89 = arith.constant dense<0.000000e+00> : vector<8x512xf32>
    %307 = tpu.matmul %305, %306, %cst_89 {dimension_numbers = #tpu.dot_dimension_numbers<[1], [0], [0], [1], [0, 0, 1, 1], [], []>} : vector<8x128xf32>, vector<128x512xf32>, vector<8x512xf32> -> vector<8x512xf32>
    %c272_90 = arith.constant 272 : index
    %c0_91 = arith.constant 0 : index
    %308 = vector.load %arg1[%c272_90, %c0_91] : memref<424x512xf32, #tpu.memory_space<vmem>>, vector<128x512xf32>
    %cst_92 = arith.constant dense<0.000000e+00> : vector<8x512xf32>
    %309 = tpu.matmul %282, %308, %cst_92 {dimension_numbers = #tpu.dot_dimension_numbers<[1], [0], [0], [1], [0, 0, 1, 1], [], []>} : vector<8x128xf32>, vector<128x512xf32>, vector<8x512xf32> -> vector<8x512xf32>
    %310 = arith.addf %307, %309 : vector<8x512xf32>
    %311 = arith.addf %310, %11 : vector<8x512xf32>
    %312 = vector.extract_strided_slice %311 {offsets = [0, 0], sizes = [8, 384], strides = [1, 1]} : vector<8x512xf32> to vector<8x384xf32>
    %313 = arith.negf %312 : vector<8x384xf32>
    %314 = math.exp %313 : vector<8x384xf32>
    %cst_93 = arith.constant 1.000000e+00 : f32
    %315 = vector.broadcast %cst_93 : f32 to vector<8x384xf32>
    %316 = arith.addf %315, %314 : vector<8x384xf32>
    %317 = arith.divf %315, %316 : vector<8x384xf32>
    %318 = vector.extract_strided_slice %311 {offsets = [0, 384], sizes = [8, 128], strides = [1, 1]} : vector<8x512xf32> to vector<8x128xf32>
    %319 = math.tanh %318 : vector<8x128xf32>
    %320 = vector.extract_strided_slice %317 {offsets = [0, 0], sizes = [8, 128], strides = [1, 1]} : vector<8x384xf32> to vector<8x128xf32>
    %321 = vector.extract_strided_slice %317 {offsets = [0, 128], sizes = [8, 128], strides = [1, 1]} : vector<8x384xf32> to vector<8x128xf32>
    %322 = vector.extract_strided_slice %317 {offsets = [0, 256], sizes = [8, 128], strides = [1, 1]} : vector<8x384xf32> to vector<8x128xf32>
    %323 = arith.mulf %321, %280 : vector<8x128xf32>
    %324 = arith.mulf %320, %319 : vector<8x128xf32>
    %325 = arith.addf %323, %324 : vector<8x128xf32>
    %326 = math.tanh %325 : vector<8x128xf32>
    %327 = arith.mulf %322, %326 : vector<8x128xf32>
    %c7_i32 = arith.constant 7 : i32
    %c8_i32_94 = arith.constant 8 : i32
    %328 = arith.muli %c7_i32, %c8_i32_94 : i32
    %329 = tpu.assume_multiple %328, 8 : i32
    %330 = arith.index_cast %329 : i32 to index
    %c0_95 = arith.constant 0 : index
    %331 = vector.load %arg3[%330, %c0_95] : memref<64x512xf32, #tpu.memory_space<vmem>>, vector<8x512xf32>
    %c16_96 = arith.constant 16 : index
    %c0_97 = arith.constant 0 : index
    %332 = vector.load %arg1[%c16_96, %c0_97] : memref<424x512xf32, #tpu.memory_space<vmem>>, vector<128x512xf32>
    %cst_98 = arith.constant dense<0.000000e+00> : vector<8x512xf32>
    %333 = tpu.matmul %305, %332, %cst_98 {dimension_numbers = #tpu.dot_dimension_numbers<[1], [0], [0], [1], [0, 0, 1, 1], [], []>} : vector<8x128xf32>, vector<128x512xf32>, vector<8x512xf32> -> vector<8x512xf32>
    %334 = arith.addf %331, %333 : vector<8x512xf32>
    %335 = vector.extract_strided_slice %334 {offsets = [0, 0], sizes = [8, 384], strides = [1, 1]} : vector<8x512xf32> to vector<8x384xf32>
    %336 = arith.negf %335 : vector<8x384xf32>
    %337 = math.exp %336 : vector<8x384xf32>
    %cst_99 = arith.constant 1.000000e+00 : f32
    %338 = vector.broadcast %cst_99 : f32 to vector<8x384xf32>
    %339 = arith.addf %338, %337 : vector<8x384xf32>
    %340 = arith.divf %338, %339 : vector<8x384xf32>
    %341 = vector.extract_strided_slice %334 {offsets = [0, 384], sizes = [8, 128], strides = [1, 1]} : vector<8x512xf32> to vector<8x128xf32>
    %342 = math.tanh %341 : vector<8x128xf32>
    %343 = vector.extract_strided_slice %340 {offsets = [0, 0], sizes = [8, 128], strides = [1, 1]} : vector<8x384xf32> to vector<8x128xf32>
    %344 = vector.extract_strided_slice %340 {offsets = [0, 128], sizes = [8, 128], strides = [1, 1]} : vector<8x384xf32> to vector<8x128xf32>
    %345 = vector.extract_strided_slice %340 {offsets = [0, 256], sizes = [8, 128], strides = [1, 1]} : vector<8x384xf32> to vector<8x128xf32>
    %346 = arith.mulf %344, %303 : vector<8x128xf32>
    %347 = arith.mulf %343, %342 : vector<8x128xf32>
    %348 = arith.addf %346, %347 : vector<8x128xf32>
    %349 = math.tanh %348 : vector<8x128xf32>
    %350 = arith.mulf %345, %349 : vector<8x128xf32>
    %c144_100 = arith.constant 144 : index
    %c0_101 = arith.constant 0 : index
    %351 = vector.load %arg1[%c144_100, %c0_101] : memref<424x512xf32, #tpu.memory_space<vmem>>, vector<128x512xf32>
    %cst_102 = arith.constant dense<0.000000e+00> : vector<8x512xf32>
    %352 = tpu.matmul %350, %351, %cst_102 {dimension_numbers = #tpu.dot_dimension_numbers<[1], [0], [0], [1], [0, 0, 1, 1], [], []>} : vector<8x128xf32>, vector<128x512xf32>, vector<8x512xf32> -> vector<8x512xf32>
    %c272_103 = arith.constant 272 : index
    %c0_104 = arith.constant 0 : index
    %353 = vector.load %arg1[%c272_103, %c0_104] : memref<424x512xf32, #tpu.memory_space<vmem>>, vector<128x512xf32>
    %cst_105 = arith.constant dense<0.000000e+00> : vector<8x512xf32>
    %354 = tpu.matmul %327, %353, %cst_105 {dimension_numbers = #tpu.dot_dimension_numbers<[1], [0], [0], [1], [0, 0, 1, 1], [], []>} : vector<8x128xf32>, vector<128x512xf32>, vector<8x512xf32> -> vector<8x512xf32>
    %355 = arith.addf %352, %354 : vector<8x512xf32>
    %356 = arith.addf %355, %11 : vector<8x512xf32>
    %357 = vector.extract_strided_slice %356 {offsets = [0, 0], sizes = [8, 384], strides = [1, 1]} : vector<8x512xf32> to vector<8x384xf32>
    %358 = arith.negf %357 : vector<8x384xf32>
    %359 = math.exp %358 : vector<8x384xf32>
    %cst_106 = arith.constant 1.000000e+00 : f32
    %360 = vector.broadcast %cst_106 : f32 to vector<8x384xf32>
    %361 = arith.addf %360, %359 : vector<8x384xf32>
    %362 = arith.divf %360, %361 : vector<8x384xf32>
    %363 = vector.extract_strided_slice %356 {offsets = [0, 384], sizes = [8, 128], strides = [1, 1]} : vector<8x512xf32> to vector<8x128xf32>
    %364 = math.tanh %363 : vector<8x128xf32>
    %365 = vector.extract_strided_slice %362 {offsets = [0, 0], sizes = [8, 128], strides = [1, 1]} : vector<8x384xf32> to vector<8x128xf32>
    %366 = vector.extract_strided_slice %362 {offsets = [0, 128], sizes = [8, 128], strides = [1, 1]} : vector<8x384xf32> to vector<8x128xf32>
    %367 = vector.extract_strided_slice %362 {offsets = [0, 256], sizes = [8, 128], strides = [1, 1]} : vector<8x384xf32> to vector<8x128xf32>
    %368 = arith.mulf %366, %325 : vector<8x128xf32>
    %369 = arith.mulf %365, %364 : vector<8x128xf32>
    %370 = arith.addf %368, %369 : vector<8x128xf32>
    %371 = math.tanh %370 : vector<8x128xf32>
    %372 = arith.mulf %367, %371 : vector<8x128xf32>
    %c8_i32_107 = arith.constant 8 : i32
    %c408 = arith.constant 408 : index
    %c0_108 = arith.constant 0 : index
    %373 = vector.load %arg1[%c408, %c0_108] : memref<424x512xf32, #tpu.memory_space<vmem>>, vector<1x128xf32>
    %374 = vector.broadcast %373 : vector<1x128xf32> to vector<8x128xf32>
    %375 = arith.mulf %372, %374 : vector<8x128xf32>
    %cst_109 = arith.constant dense<0.000000e+00> : vector<8xf32>
    %376 = vector.multi_reduction <add>, %375, %cst_109 [1] : vector<8x128xf32> to vector<8xf32>
    %377 = vector.shape_cast %376 : vector<8xf32> to vector<8x1xf32>
    %c416 = arith.constant 416 : index
    %c0_110 = arith.constant 0 : index
    %378 = vector.load %arg1[%c416, %c0_110] : memref<424x512xf32, #tpu.memory_space<vmem>>, vector<1x1xf32>
    %379 = vector.broadcast %378 : vector<1x1xf32> to vector<8x1xf32>
    %380 = arith.addf %377, %379 : vector<8x1xf32>
    %c0_111 = arith.constant 0 : index
    %c0_112 = arith.constant 0 : index
    %381 = vector.load %arg2[%c0_111, %c0_112] : memref<8x1xf32, #tpu.memory_space<vmem>>, vector<8x1xf32>
    tpu.vector_store %arg2[%c0_111, %c0_112], %380 {strides = array<i32>} : memref<8x1xf32, #tpu.memory_space<vmem>>, vector<8x1xf32>,
    return
  }
}

</mosaic_0001>

<llo_original>
// kernel: tpu_custom_call.1
$region0: #{tpu_custom_call.1}
  #allocation0 [shape = 'u32[]', space=smem, size = 0x4, offset = 0x4, fixed_abs, tag = 'smem constant byte address 0x4 - core index']
  #allocation1 [shape = 'u32[144,128]{1,0:T(1,128)}', space=vmem, size = 0x12000, scoped, tag = 'internal scratch']
  #allocation2 [shape = 'f32[64,512]{1,0:T(8,128)}', space=vmem, size = 0x20000, scoped, tag = 'scratch operand']
  %s0 = inlined_call_operand.vmem [shape: f32[64,1], index: 0, kind: input, shape index: {}]
  %s1 = inlined_call_operand.hbm [shape: f32[424,512], index: 1, kind: input, shape index: {}]
  %s2 = inlined_call_operand.vmem [shape: f32[8,1], index: 2, kind: output, shape index: {}]
  %s3 = sld [smem:[#allocation0]]
  $region22: #{tpu_custom_call.1} parent=0
    _
  %s5 = ssub.s32 1, %s3
  %s6 = scalar_select 0, %s5, %s3
  $region1: #{tpu_custom_call.1} parent=0
    #allocation3 [shape = 'u8[868352]{0}', space=vmem, size = 0xd4000, scoped, tag = 'input window, operand 1, single buffered']
    #allocation4 [shape = 's32[1]{0}', space=sflag, size = 0x4, scoped, tag = 'scoped memory for tpu_custom_call.1']
    %7 = vsyncpa [#allocation4], 0
    // Predicated region
    $region2: #{tpu_custom_call.1} parent=1 // pred_check
      _
    $region3: #{tpu_custom_call.1} parent=1 // pred_check_branch
      %9 = sbr.rel (0) target = $region5
    $region4: #{tpu_custom_call.1} parent=1 // pred_region
      _
    $region5: #{tpu_custom_call.1} parent=1 // pred_fallthru
      _
    // Predicated region
    $region6: #{tpu_custom_call.1} parent=1 // pred_check
      _
    $region7: #{tpu_custom_call.1} parent=1 // pred_check_branch
      %11 = sbr.rel (0) target = $region9
    $region8: #{tpu_custom_call.1} parent=1 // pred_region
      %s13 = ssub.s32 27136, 27136
      %14 = vsyncadd [#allocation4], %s13
      %s15 = sshll.u32 [#allocation3], 4
      %s16 = int_to_ptr.vmem [resolvable:$true] %s15
      %21 = dma.hbm_to_vmem [thread:$0]  %s1, 27136, %s16, [#allocation4], 512, 512, 32
    $region9: #{tpu_custom_call.1} parent=1 // pred_fallthru
      _
    // Predicated region
    $region10: #{tpu_custom_call.1} parent=1 // pred_check
      _
    $region11: #{tpu_custom_call.1} parent=1 // pred_check_branch
      %23 = sbr.rel (0) target = $region13
    $region12: #{tpu_custom_call.1} parent=1 // pred_region
      %24 = dma.done [#allocation4], 27136
    $region13: #{tpu_custom_call.1} parent=1 // pred_fallthru
      _
    %v25 = vld [vmem:[%s0] sm:$0xff]
    %v26 = vld [vmem:[%s0 + $0x8] sm:$0xff]
    %v27 = vld [vmem:[%s0 + $0x10] sm:$0xff]
    %v28 = vld [vmem:[%s0 + $0x18] sm:$0xff]
    %v29 = vld [vmem:[%s0 + $0x20] sm:$0xff]
    %v30 = vld [vmem:[%s0 + $0x28] sm:$0xff]
    %v31 = vld [vmem:[%s0 + $0x30] sm:$0xff]
    %v32 = vld [vmem:[%s0 + $0x38] sm:$0xff]
    %v33 = vld [vmem:[#allocation3] ss:$8 sm:$0xf]
    %35 = vset.pattern.permute.xlu0 0
    %36 = vperm.xlu0 %35, %v25
    %v37 = vpop.permute.xlu0 %36
    %40 = vset.pattern.permute.xlu0 0
    %41 = vperm.xlu0 %40, %v26
    %v42 = vpop.permute.xlu0 %41
    %45 = vset.pattern.permute.xlu0 0
    %46 = vperm.xlu0 %45, %v27
    %v47 = vpop.permute.xlu0 %46
    %50 = vset.pattern.permute.xlu0 0
    %51 = vperm.xlu0 %50, %v28
    %v52 = vpop.permute.xlu0 %51
    %55 = vset.pattern.permute.xlu0 0
    %56 = vperm.xlu0 %55, %v29
    %v57 = vpop.permute.xlu0 %56
    %60 = vset.pattern.permute.xlu0 0
    %61 = vperm.xlu0 %60, %v30
    %v62 = vpop.permute.xlu0 %61
    %65 = vset.pattern.permute.xlu0 0
    %66 = vperm.xlu0 %65, %v31
    %v67 = vpop.permute.xlu0 %66
    %70 = vset.pattern.permute.xlu0 0
    %71 = vperm.xlu0 %70, %v32
    %v72 = vpop.permute.xlu0 %71
    %v75 = vlaneseq
    %v76 = vshrl.u32 %v75, 7
    %v77 = vsub.s32 0, %v76
    %v78 = vrot.slane %v33, %v77
    %v79 = vlaneseq
    %v80 = vshrl.u32 %v79, 7
    %v81 = vsub.s32 1, %v80
    %v82 = vrot.slane %v33, %v81
    %v83 = vlaneseq
    %v84 = vshrl.u32 %v83, 7
    %v85 = vsub.s32 2, %v84
    %v86 = vrot.slane %v33, %v85
    %v87 = vlaneseq
    %v88 = vshrl.u32 %v87, 7
    %v89 = vsub.s32 3, %v88
    %v90 = vrot.slane %v33, %v89
    %v95 = vmul.f32 %v37, %v78
    %v96 = vmul.f32 %v37, %v82
    %v97 = vmul.f32 %v37, %v86
    %v98 = vmul.f32 %v37, %v90
    %v99 = vmul.f32 %v42, %v78
    %v100 = vmul.f32 %v42, %v82
    %v101 = vmul.f32 %v42, %v86
    %v102 = vmul.f32 %v42, %v90
    %v103 = vmul.f32 %v47, %v78
    %v104 = vmul.f32 %v47, %v82
    %v105 = vmul.f32 %v47, %v86
    %v106 = vmul.f32 %v47, %v90
    %v107 = vmul.f32 %v52, %v78
    %v108 = vmul.f32 %v52, %v82
    %v109 = vmul.f32 %v52, %v86
    %v110 = vmul.f32 %v52, %v90
    %v111 = vmul.f32 %v57, %v78
    %v112 = vmul.f32 %v57, %v82
    %v113 = vmul.f32 %v57, %v86
    %v114 = vmul.f32 %v57, %v90
    %v115 = vmul.f32 %v62, %v78
    %v116 = vmul.f32 %v62, %v82
    %v117 = vmul.f32 %v62, %v86
    %v118 = vmul.f32 %v62, %v90
    %v119 = vmul.f32 %v67, %v78
    %v120 = vmul.f32 %v67, %v82
    %v121 = vmul.f32 %v67, %v86
    %v122 = vmul.f32 %v67, %v90
    %v123 = vmul.f32 %v72, %v78
    %v124 = vmul.f32 %v72, %v82
    %v125 = vmul.f32 %v72, %v86
    %v126 = vmul.f32 %v72, %v90
    %s127 = scalar_lea.vmem [#allocation3], 32
    %v128 = vld [vmem:[%s127] ss:$8 sm:$0xf]
    %v130 = vlaneseq
    %v131 = vshrl.u32 %v130, 7
    %v132 = vsub.s32 0, %v131
    %v133 = vrot.slane %v128, %v132
    %v134 = vlaneseq
    %v135 = vshrl.u32 %v134, 7
    %v136 = vsub.s32 1, %v135
    %v137 = vrot.slane %v128, %v136
    %v138 = vlaneseq
    %v139 = vshrl.u32 %v138, 7
    %v140 = vsub.s32 2, %v139
    %v141 = vrot.slane %v128, %v140
    %v142 = vlaneseq
    %v143 = vshrl.u32 %v142, 7
    %v144 = vsub.s32 3, %v143
    %v145 = vrot.slane %v128, %v144
    %v150 = vadd.f32 %v95, %v133
    %v151 = vadd.f32 %v96, %v137
    %v152 = vadd.f32 %v97, %v141
    %v153 = vadd.f32 %v98, %v145
    %v154 = vadd.f32 %v99, %v133
    %v155 = vadd.f32 %v100, %v137
    %v156 = vadd.f32 %v101, %v141
    %v157 = vadd.f32 %v102, %v145
    %v158 = vadd.f32 %v103, %v133
    %v159 = vadd.f32 %v104, %v137
    %v160 = vadd.f32 %v105, %v141
    %v161 = vadd.f32 %v106, %v145
    %v162 = vadd.f32 %v107, %v133
    %v163 = vadd.f32 %v108, %v137
    %v164 = vadd.f32 %v109, %v141
    %v165 = vadd.f32 %v110, %v145
    %v166 = vadd.f32 %v111, %v133
    %v167 = vadd.f32 %v112, %v137
    %v168 = vadd.f32 %v113, %v141
    %v169 = vadd.f32 %v114, %v145
    %v170 = vadd.f32 %v115, %v133
    %v171 = vadd.f32 %v116, %v137
    %v172 = vadd.f32 %v117, %v141
    %v173 = vadd.f32 %v118, %v145
    %v174 = vadd.f32 %v119, %v133
    %v175 = vadd.f32 %v120, %v137
    %v176 = vadd.f32 %v121, %v141
    %v177 = vadd.f32 %v122, %v145
    %v178 = vadd.f32 %v123, %v133
    %v179 = vadd.f32 %v124, %v137
    %v180 = vadd.f32 %v125, %v141
    %v181 = vadd.f32 %v126, %v145
    %182 = vst [vmem:[#allocation2] sm:$0xff] %v150
    %183 = vst [vmem:[#allocation2 + $0x8] sm:$0xff] %v151
    %184 = vst [vmem:[#allocation2 + $0x10] sm:$0xff] %v152
    %185 = vst [vmem:[#allocation2 + $0x18] sm:$0xff] %v153
    %186 = vst [vmem:[#allocation2 + $0x20] sm:$0xff] %v154
    %187 = vst [vmem:[#allocation2 + $0x28] sm:$0xff] %v155
    %188 = vst [vmem:[#allocation2 + $0x30] sm:$0xff] %v156
    %189 = vst [vmem:[#allocation2 + $0x38] sm:$0xff] %v157
    %190 = vst [vmem:[#allocation2 + $0x40] sm:$0xff] %v158
    %191 = vst [vmem:[#allocation2 + $0x48] sm:$0xff] %v159
    %192 = vst [vmem:[#allocation2 + $0x50] sm:$0xff] %v160
    %193 = vst [vmem:[#allocation2 + $0x58] sm:$0xff] %v161
    %194 = vst [vmem:[#allocation2 + $0x60] sm:$0xff] %v162
    %195 = vst [vmem:[#allocation2 + $0x68] sm:$0xff] %v163
    %196 = vst [vmem:[#allocation2 + $0x70] sm:$0xff] %v164
    %197 = vst [vmem:[#allocation2 + $0x78] sm:$0xff] %v165
    %198 = vst [vmem:[#allocation2 + $0x80] sm:$0xff] %v166
    %199 = vst [vmem:[#allocation2 + $0x88] sm:$0xff] %v167
    %200 = vst [vmem:[#allocation2 + $0x90] sm:$0xff] %v168
    %201 = vst [vmem:[#allocation2 + $0x98] sm:$0xff] %v169
    %202 = vst [vmem:[#allocation2 + $0xa0] sm:$0xff] %v170
    %203 = vst [vmem:[#allocation2 + $0xa8] sm:$0xff] %v171
    %204 = vst [vmem:[#allocation2 + $0xb0] sm:$0xff] %v172
    %205 = vst [vmem:[#allocation2 + $0xb8] sm:$0xff] %v173
    %206 = vst [vmem:[#allocation2 + $0xc0] sm:$0xff] %v174
    %207 = vst [vmem:[#allocation2 + $0xc8] sm:$0xff] %v175
    %208 = vst [vmem:[#allocation2 + $0xd0] sm:$0xff] %v176
    %209 = vst [vmem:[#allocation2 + $0xd8] sm:$0xff] %v177
    %210 = vst [vmem:[#allocation2 + $0xe0] sm:$0xff] %v178
    %211 = vst [vmem:[#allocation2 + $0xe8] sm:$0xff] %v179
    %212 = vst [vmem:[#allocation2 + $0xf0] sm:$0xff] %v180
    %213 = vst [vmem:[#allocation2 + $0xf8] sm:$0xff] %v181
    %s214 = scalar_lea.vmem [#allocation3], 1600
    %v215 = vld [vmem:[%s214] ss:$8 sm:$0xf]
    %v217 = vlaneseq
    %v218 = vshrl.u32 %v217, 7
    %v219 = vsub.s32 0, %v218
    %v220 = vrot.slane %v215, %v219
    %v221 = vlaneseq
    %v222 = vshrl.u32 %v221, 7
    %v223 = vsub.s32 1, %v222
    %v224 = vrot.slane %v215, %v223
    %v225 = vlaneseq
    %v226 = vshrl.u32 %v225, 7
    %v227 = vsub.s32 2, %v226
    %v228 = vrot.slane %v215, %v227
    %v229 = vlaneseq
    %v230 = vshrl.u32 %v229, 7
    %v231 = vsub.s32 3, %v230
    %v232 = vrot.slane %v215, %v231
    %s237 = smul.u32 0, 4
    %s238 = smul.addr %s237, 8
    %s239 = scalar_lea.vmem [#allocation2], %s238
    %v240 = vld [vmem:[%s239] sm:$0xff]
    %v241 = vld [vmem:[%s239 + $0x8] sm:$0xff]
    %v242 = vld [vmem:[%s239 + $0x10] sm:$0xff]
    %v243 = vld [vmem:[%s239 + $0x18] sm:$0xff]
    %v244 = vld [vmem:[#allocation3 + $0x40] sm:$0xff]
    %v245 = vld [vmem:[#allocation3 + $0x48] sm:$0xff]
    %v246 = vld [vmem:[#allocation3 + $0x50] sm:$0xff]
    %v247 = vld [vmem:[#allocation3 + $0x58] sm:$0xff]
    %v248 = vld [vmem:[#allocation3 + $0x60] sm:$0xff]
    %v249 = vld [vmem:[#allocation3 + $0x68] sm:$0xff]
    %v250 = vld [vmem:[#allocation3 + $0x70] sm:$0xff]
    %v251 = vld [vmem:[#allocation3 + $0x78] sm:$0xff]
    %v252 = vld [vmem:[#allocation3 + $0x80] sm:$0xff]
    %v253 = vld [vmem:[#allocation3 + $0x88] sm:$0xff]
    %v254 = vld [vmem:[#allocation3 + $0x90] sm:$0xff]
    %v255 = vld [vmem:[#allocation3 + $0x98] sm:$0xff]
    %v256 = vld [vmem:[#allocation3 + $0xa0] sm:$0xff]
    %v257 = vld [vmem:[#allocation3 + $0xa8] sm:$0xff]
    %v258 = vld [vmem:[#allocation3 + $0xb0] sm:$0xff]
    %v259 = vld [vmem:[#allocation3 + $0xb8] sm:$0xff]
    %v260 = vld [vmem:[#allocation3 + $0xc0] sm:$0xff]
    %v261 = vld [vmem:[#allocation3 + $0xc8] sm:$0xff]
    %v262 = vld [vmem:[#allocation3 + $0xd0] sm:$0xff]
    %v263 = vld [vmem:[#allocation3 + $0xd8] sm:$0xff]
    %v264 = vld [vmem:[#allocation3 + $0xe0] sm:$0xff]
    %v265 = vld [vmem:[#allocation3 + $0xe8] sm:$0xff]
    %v266 = vld [vmem:[#allocation3 + $0xf0] sm:$0xff]
    %v267 = vld [vmem:[#allocation3 + $0xf8] sm:$0xff]
    %v268 = vld [vmem:[#allocation3 + $0x100] sm:$0xff]
    %v269 = vld [vmem:[#allocation3 + $0x108] sm:$0xff]
    %v270 = vld [vmem:[#allocation3 + $0x110] sm:$0xff]
    %v271 = vld [vmem:[#allocation3 + $0x118] sm:$0xff]
    %v272 = vld [vmem:[#allocation3 + $0x120] sm:$0xff]
    %v273 = vld [vmem:[#allocation3 + $0x128] sm:$0xff]
    %v274 = vld [vmem:[#allocation3 + $0x130] sm:$0xff]
    %v275 = vld [vmem:[#allocation3 + $0x138] sm:$0xff]
    %v276 = vld [vmem:[#allocation3 + $0x140] sm:$0xff]
    %v277 = vld [vmem:[#allocation3 + $0x148] sm:$0xff]
    %v278 = vld [vmem:[#allocation3 + $0x150] sm:$0xff]
    %v279 = vld [vmem:[#allocation3 + $0x158] sm:$0xff]
    %v280 = vld [vmem:[#allocation3 + $0x160] sm:$0xff]
    %v281 = vld [vmem:[#allocation3 + $0x168] sm:$0xff]
    %v282 = vld [vmem:[#allocation3 + $0x170] sm:$0xff]
    %v283 = vld [vmem:[#allocation3 + $0x178] sm:$0xff]
    %v284 = vld [vmem:[#allocation3 + $0x180] sm:$0xff]
    %v285 = vld [vmem:[#allocation3 + $0x188] sm:$0xff]
    %v286 = vld [vmem:[#allocation3 + $0x190] sm:$0xff]
    %v287 = vld [vmem:[#allocation3 + $0x198] sm:$0xff]
    %v288 = vld [vmem:[#allocation3 + $0x1a0] sm:$0xff]
    %v289 = vld [vmem:[#allocation3 + $0x1a8] sm:$0xff]
    %v290 = vld [vmem:[#allocation3 + $0x1b0] sm:$0xff]
    %v291 = vld [vmem:[#allocation3 + $0x1b8] sm:$0xff]
    %v292 = vld [vmem:[#allocation3 + $0x1c0] sm:$0xff]
    %v293 = vld [vmem:[#allocation3 + $0x1c8] sm:$0xff]
    %v294 = vld [vmem:[#allocation3 + $0x1d0] sm:$0xff]
    %v295 = vld [vmem:[#allocation3 + $0x1d8] sm:$0xff]
    %v296 = vld [vmem:[#allocation3 + $0x1e0] sm:$0xff]
    %v297 = vld [vmem:[#allocation3 + $0x1e8] sm:$0xff]
    %v298 = vld [vmem:[#allocation3 + $0x1f0] sm:$0xff]
    %v299 = vld [vmem:[#allocation3 + $0x1f8] sm:$0xff]
    %v300 = vld [vmem:[#allocation3 + $0x200] sm:$0xff]
    %v301 = vld [vmem:[#allocation3 + $0x208] sm:$0xff]
    %v302 = vld [vmem:[#allocation3 + $0x210] sm:$0xff]
    %v303 = vld [vmem:[#allocation3 + $0x218] sm:$0xff]
    %v304 = vld [vmem:[#allocation3 + $0x220] sm:$0xff]
    %v305 = vld [vmem:[#allocation3 + $0x228] sm:$0xff]
    %v306 = vld [vmem:[#allocation3 + $0x230] sm:$0xff]
    %v307 = vld [vmem:[#allocation3 + $0x238] sm:$0xff]
    %308 = vmatprep.subr.mxu0 %v245
    %309 = vmatpush1.msra.mxu0 %v244
    %310 = vmatprep.subr.mxu0 %v249
    %311 = vmatpush1.msra.mxu0 %v248
    %312 = vmatprep.subr.mxu0 %v253
    %313 = vmatpush1.msra.mxu0 %v252
    %314 = vmatprep.subr.mxu0 %v257
    %315 = vmatpush1.msra.mxu0 %v256
    %316 = vmatprep.subr.mxu0 %v261
    %317 = vmatpush1.msra.mxu0 %v260
    %318 = vmatprep.subr.mxu0 %v265
    %319 = vmatpush1.msra.mxu0 %v264
    %320 = vmatprep.subr.mxu0 %v269
    %321 = vmatpush1.msra.mxu0 %v268
    %322 = vmatprep.subr.mxu0 %v273
    %323 = vmatpush1.msra.mxu0 %v272
    %324 = vmatprep.subr.mxu0 %v277
    %325 = vmatpush1.msra.mxu0 %v276
    %326 = vmatprep.subr.mxu0 %v281
    %327 = vmatpush1.msra.mxu0 %v280
    %328 = vmatprep.subr.mxu0 %v285
    %329 = vmatpush1.msra.mxu0 %v284
    %330 = vmatprep.subr.mxu0 %v289
    %331 = vmatpush1.msra.mxu0 %v288
    %332 = vmatprep.subr.mxu0 %v293
    %333 = vmatpush1.msra.mxu0 %v292
    %334 = vmatprep.subr.mxu0 %v297
    %335 = vmatpush1.msra.mxu0 %v296
    %336 = vmatprep.subr.mxu0 %v301
    %337 = vmatpush1.msra.mxu0 %v300
    %338 = vmatprep.subr.mxu0 %v305
    %339 = vmatpush1.msra.mxu0 %v304
    %340 = vmatprep.subr.mxu0 0.0
    %341 = vmatpush1.msra.mxu0 0.0
    %342 = vmatprep.subr.mxu0 0.0
    %343 = vmatpush1.msra.mxu0 0.0
    %344 = vmatprep.subr.mxu0 0.0
    %345 = vmatpush1.msra.mxu0 0.0
    %346 = vmatprep.subr.mxu0 0.0
    %347 = vmatpush1.msra.mxu0 0.0
    %348 = vmatprep.subr.mxu0 0.0
    %349 = vmatpush1.msra.mxu0 0.0
    %350 = vmatprep.subr.mxu0 0.0
    %351 = vmatpush1.msra.mxu0 0.0
    %352 = vmatprep.subr.mxu0 0.0
    %353 = vmatpush1.msra.mxu0 0.0
    %354 = vmatprep.subr.mxu0 0.0
    %355 = vmatpush1.msra.mxu0 0.0
    %356 = vmatprep.subr.mxu0 0.0
    %357 = vmatpush1.msra.mxu0 0.0
    %358 = vmatprep.subr.mxu0 0.0
    %359 = vmatpush1.msra.mxu0 0.0
    %360 = vmatprep.subr.mxu0 0.0
    %361 = vmatpush1.msra.mxu0 0.0
    %362 = vmatprep.subr.mxu0 0.0
    %363 = vmatpush1.msra.mxu0 0.0
    %364 = vmatprep.subr.mxu0 0.0
    %365 = vmatpush1.msra.mxu0 0.0
    %366 = vmatprep.subr.mxu0 0.0
    %367 = vmatpush1.msra.mxu0 0.0
    %368 = vmatprep.subr.mxu0 0.0
    %369 = vmatpush1.msra.mxu0 0.0
    %370 = vmatprep.subr.mxu0 0.0
    %371 = vmatpush1.msra.mxu0 0.0
    %372 = vmatprep.mubr.f32.mxu0 0.0
    %373 = vmatmul.mubr.f32.gmra.mrb[0].mxu0 0.0
    %v374 = vpop.f32.mrb[0].mxu0
    %v375 = vadd.f32 0.0, %v374
    %v376 = vpop.f32.mrb[0].mxu0
    %v377 = vadd.f32 0.0, %v376
    %378 = vdwg.mxu0
    %379 = vmatprep.subr.mxu0 %v247
    %380 = vmatpush1.msra.mxu0 %v246
    %381 = vmatprep.subr.mxu0 %v251
    %382 = vmatpush1.msra.mxu0 %v250
    %383 = vmatprep.subr.mxu0 %v255
    %384 = vmatpush1.msra.mxu0 %v254
    %385 = vmatprep.subr.mxu0 %v259
    %386 = vmatpush1.msra.mxu0 %v258
    %387 = vmatprep.subr.mxu0 %v263
    %388 = vmatpush1.msra.mxu0 %v262
    %389 = vmatprep.subr.mxu0 %v267
    %390 = vmatpush1.msra.mxu0 %v266
    %391 = vmatprep.subr.mxu0 %v271
    %392 = vmatpush1.msra.mxu0 %v270
    %393 = vmatprep.subr.mxu0 %v275
    %394 = vmatpush1.msra.mxu0 %v274
    %395 = vmatprep.subr.mxu0 %v279
    %396 = vmatpush1.msra.mxu0 %v278
    %397 = vmatprep.subr.mxu0 %v283
    %398 = vmatpush1.msra.mxu0 %v282
    %399 = vmatprep.subr.mxu0 %v287
    %400 = vmatpush1.msra.mxu0 %v286
    %401 = vmatprep.subr.mxu0 %v291
    %402 = vmatpush1.msra.mxu0 %v290
    %403 = vmatprep.subr.mxu0 %v295
    %404 = vmatpush1.msra.mxu0 %v294
    %405 = vmatprep.subr.mxu0 %v299
    %406 = vmatpush1.msra.mxu0 %v298
    %407 = vmatprep.subr.mxu0 %v303
    %408 = vmatpush1.msra.mxu0 %v302
    %409 = vmatprep.subr.mxu0 %v307
    %410 = vmatpush1.msra.mxu0 %v306
    %411 = vmatprep.subr.mxu0 0.0
    %412 = vmatpush1.msra.mxu0 0.0
    %413 = vmatprep.subr.mxu0 0.0
    %414 = vmatpush1.msra.mxu0 0.0
    %415 = vmatprep.subr.mxu0 0.0
    %416 = vmatpush1.msra.mxu0 0.0
    %417 = vmatprep.subr.mxu0 0.0
    %418 = vmatpush1.msra.mxu0 0.0
    %419 = vmatprep.subr.mxu0 0.0
    %420 = vmatpush1.msra.mxu0 0.0
    %421 = vmatprep.subr.mxu0 0.0
    %422 = vmatpush1.msra.mxu0 0.0
    %423 = vmatprep.subr.mxu0 0.0
    %424 = vmatpush1.msra.mxu0 0.0
    %425 = vmatprep.subr.mxu0 0.0
    %426 = vmatpush1.msra.mxu0 0.0
    %427 = vmatprep.subr.mxu0 0.0
    %428 = vmatpush1.msra.mxu0 0.0
    %429 = vmatprep.subr.mxu0 0.0
    %430 = vmatpush1.msra.mxu0 0.0
    %431 = vmatprep.subr.mxu0 0.0
    %432 = vmatpush1.msra.mxu0 0.0
    %433 = vmatprep.subr.mxu0 0.0
    %434 = vmatpush1.msra.mxu0 0.0
    %435 = vmatprep.subr.mxu0 0.0
    %436 = vmatpush1.msra.mxu0 0.0
    %437 = vmatprep.subr.mxu0 0.0
    %438 = vmatpush1.msra.mxu0 0.0
    %439 = vmatprep.subr.mxu0 0.0
    %440 = vmatpush1.msra.mxu0 0.0
    %441 = vmatprep.subr.mxu0 0.0
    %442 = vmatpush1.msra.mxu0 0.0
    %443 = vmatprep.mubr.f32.mxu0 0.0
    %444 = vmatmul.mubr.f32.gmra.mrb[0].mxu0 0.0
    %v445 = vpop.f32.mrb[0].mxu0
    %v446 = vadd.f32 0.0, %v445
    %v447 = vpop.f32.mrb[0].mxu0
    %v448 = vadd.f32 0.0, %v447
    %449 = vdwg.mxu0
    %v450 = vadd.f32 %v240, %v375
    %v451 = vadd.f32 %v241, %v377
    %v452 = vadd.f32 %v242, %v446
    %v453 = vadd.f32 %v243, %v448
    %v454 = vxor.u32 %v450, 2147483648
    %v455 = vxor.u32 %v451, 2147483648
    %v456 = vxor.u32 %v452, 2147483648
    %v457 = vmul.f32 %v454, 1.442695
    %v458 = vpow.pop %v457
    %v459 = vmul.f32 %v455, 1.442695
    %v460 = vpow.pop %v459
    %v461 = vmul.f32 %v456, 1.442695
    %v462 = vpow.pop %v461
    %v463 = vadd.f32 %v458, 1.0
    %v464 = vadd.f32 %v460, 1.0
    %v465 = vadd.f32 %v462, 1.0
    %v466 = vrcp.pop %v463
    %v467 = vmul.f32 1.0, %v466
    %v468 = vrcp.pop %v464
    %v469 = vmul.f32 1.0, %v468
    %v470 = vrcp.pop %v465
    %v471 = vmul.f32 1.0, %v470
    %v472 = vtanh.pop %v453
    %v473 = vmul.f32 %v469, 0.0
    %v474 = vmul.f32 %v467, %v472
    %v475 = vadd.f32 %v473, %v474
    %v476 = vtanh.pop %v475
    %v477 = vmul.f32 %v471, %v476
    %v478 = vld [vmem:[#allocation3 + $0x240] sm:$0xff]
    %v479 = vld [vmem:[#allocation3 + $0x248] sm:$0xff]
    %v480 = vld [vmem:[#allocation3 + $0x250] sm:$0xff]
    %v481 = vld [vmem:[#allocation3 + $0x258] sm:$0xff]
    %v482 = vld [vmem:[#allocation3 + $0x260] sm:$0xff]
    %v483 = vld [vmem:[#allocation3 + $0x268] sm:$0xff]
    %v484 = vld [vmem:[#allocation3 + $0x270] sm:$0xff]
    %v485 = vld [vmem:[#allocation3 + $0x278] sm:$0xff]
    %v486 = vld [vmem:[#allocation3 + $0x280] sm:$0xff]
    %v487 = vld [vmem:[#allocation3 + $0x288] sm:$0xff]
    %v488 = vld [vmem:[#allocation3 + $0x290] sm:$0xff]
    %v489 = vld [vmem:[#allocation3 + $0x298] sm:$0xff]
    %v490 = vld [vmem:[#allocation3 + $0x2a0] sm:$0xff]
    %v491 = vld [vmem:[#allocation3 + $0x2a8] sm:$0xff]
    %v492 = vld [vmem:[#allocation3 + $0x2b0] sm:$0xff]
    %v493 = vld [vmem:[#allocation3 + $0x2b8] sm:$0xff]
    %v494 = vld [vmem:[#allocation3 + $0x2c0] sm:$0xff]
    %v495 = vld [vmem:[#allocation3 + $0x2c8] sm:$0xff]
    %v496 = vld [vmem:[#allocation3 + $0x2d0] sm:$0xff]
    %v497 = vld [vmem:[#allocation3 + $0x2d8] sm:$0xff]
    %v498 = vld [vmem:[#allocation3 + $0x2e0] sm:$0xff]
    %v499 = vld [vmem:[#allocation3 + $0x2e8] sm:$0xff]
    %v500 = vld [vmem:[#allocation3 + $0x2f0] sm:$0xff]
    %v501 = vld [vmem:[#allocation3 + $0x2f8] sm:$0xff]
    %v502 = vld [vmem:[#allocation3 + $0x300] sm:$0xff]
    %v503 = vld [vmem:[#allocation3 + $0x308] sm:$0xff]
    %v504 = vld [vmem:[#allocation3 + $0x310] sm:$0xff]
    %v505 = vld [vmem:[#allocation3 + $0x318] sm:$0xff]
    %v506 = vld [vmem:[#allocation3 + $0x320] sm:$0xff]
    %v507 = vld [vmem:[#allocation3 + $0x328] sm:$0xff]
    %v508 = vld [vmem:[#allocation3 + $0x330] sm:$0xff]
    %v509 = vld [vmem:[#allocation3 + $0x338] sm:$0xff]
    %v510 = vld [vmem:[#allocation3 + $0x340] sm:$0xff]
    %v511 = vld [vmem:[#allocation3 + $0x348] sm:$0xff]
    %v512 = vld [vmem:[#allocation3 + $0x350] sm:$0xff]
    %v513 = vld [vmem:[#allocation3 + $0x358] sm:$0xff]
    %v514 = vld [vmem:[#allocation3 + $0x360] sm:$0xff]
    %v515 = vld [vmem:[#allocation3 + $0x368] sm:$0xff]
    %v516 = vld [vmem:[#allocation3 + $0x370] sm:$0xff]
    %v517 = vld [vmem:[#allocation3 + $0x378] sm:$0xff]
    %v518 = vld [vmem:[#allocation3 + $0x380] sm:$0xff]
    %v519 = vld [vmem:[#allocation3 + $0x388] sm:$0xff]
    %v520 = vld [vmem:[#allocation3 + $0x390] sm:$0xff]
    %v521 = vld [vmem:[#allocation3 + $0x398] sm:$0xff]
    %v522 = vld [vmem:[#allocation3 + $0x3a0] sm:$0xff]
    %v523 = vld [vmem:[#allocation3 + $0x3a8] sm:$0xff]
    %v524 = vld [vmem:[#allocation3 + $0x3b0] sm:$0xff]
    %v525 = vld [vmem:[#allocation3 + $0x3b8] sm:$0xff]
    %v526 = vld [vmem:[#allocation3 + $0x3c0] sm:$0xff]
    %v527 = vld [vmem:[#allocation3 + $0x3c8] sm:$0xff]
    %v528 = vld [vmem:[#allocation3 + $0x3d0] sm:$0xff]
    %v529 = vld [vmem:[#allocation3 + $0x3d8] sm:$0xff]
    %v530 = vld [vmem:[#allocation3 + $0x3e0] sm:$0xff]
    %v531 = vld [vmem:[#allocation3 + $0x3e8] sm:$0xff]
    %v532 = vld [vmem:[#allocation3 + $0x3f0] sm:$0xff]
    %v533 = vld [vmem:[#allocation3 + $0x3f8] sm:$0xff]
    %v534 = vld [vmem:[#allocation3 + $0x400] sm:$0xff]
    %v535 = vld [vmem:[#allocation3 + $0x408] sm:$0xff]
    %v536 = vld [vmem:[#allocation3 + $0x410] sm:$0xff]
    %v537 = vld [vmem:[#allocation3 + $0x418] sm:$0xff]
    %v538 = vld [vmem:[#allocation3 + $0x420] sm:$0xff]
    %v539 = vld [vmem:[#allocation3 + $0x428] sm:$0xff]
    %v540 = vld [vmem:[#allocation3 + $0x430] sm:$0xff]
    %v541 = vld [vmem:[#allocation3 + $0x438] sm:$0xff]
    %v542 = vld [vmem:[#allocation3 + $0x440] sm:$0xff]
    %v543 = vld [vmem:[#allocation3 + $0x448] sm:$0xff]
    %v544 = vld [vmem:[#allocation3 + $0x450] sm:$0xff]
    %v545 = vld [vmem:[#allocation3 + $0x458] sm:$0xff]
    %v546 = vld [vmem:[#allocation3 + $0x460] sm:$0xff]
    %v547 = vld [vmem:[#allocation3 + $0x468] sm:$0xff]
    %v548 = vld [vmem:[#allocation3 + $0x470] sm:$0xff]
    %v549 = vld [vmem:[#allocation3 + $0x478] sm:$0xff]
    %v550 = vld [vmem:[#allocation3 + $0x480] sm:$0xff]
    %v551 = vld [vmem:[#allocation3 + $0x488] sm:$0xff]
    %v552 = vld [vmem:[#allocation3 + $0x490] sm:$0xff]
    %v553 = vld [vmem:[#allocation3 + $0x498] sm:$0xff]
    %v554 = vld [vmem:[#allocation3 + $0x4a0] sm:$0xff]
    %v555 = vld [vmem:[#allocation3 + $0x4a8] sm:$0xff]
    %v556 = vld [vmem:[#allocation3 + $0x4b0] sm:$0xff]
    %v557 = vld [vmem:[#allocation3 + $0x4b8] sm:$0xff]
    %v558 = vld [vmem:[#allocation3 + $0x4c0] sm:$0xff]
    %v559 = vld [vmem:[#allocation3 + $0x4c8] sm:$0xff]
    %v560 = vld [vmem:[#allocation3 + $0x4d0] sm:$0xff]
    %v561 = vld [vmem:[#allocation3 + $0x4d8] sm:$0xff]
    %v562 = vld [vmem:[#allocation3 + $0x4e0] sm:$0xff]
    %v563 = vld [vmem:[#allocation3 + $0x4e8] sm:$0xff]
    %v564 = vld [vmem:[#allocation3 + $0x4f0] sm:$0xff]
    %v565 = vld [vmem:[#allocation3 + $0x4f8] sm:$0xff]
    %v566 = vld [vmem:[#allocation3 + $0x500] sm:$0xff]
    %v567 = vld [vmem:[#allocation3 + $0x508] sm:$0xff]
    %v568 = vld [vmem:[#allocation3 + $0x510] sm:$0xff]
    %v569 = vld [vmem:[#allocation3 + $0x518] sm:$0xff]
    %v570 = vld [vmem:[#allocation3 + $0x520] sm:$0xff]
    %v571 = vld [vmem:[#allocation3 + $0x528] sm:$0xff]
    %v572 = vld [vmem:[#allocation3 + $0x530] sm:$0xff]
    %v573 = vld [vmem:[#allocation3 + $0x538] sm:$0xff]
    %v574 = vld [vmem:[#allocation3 + $0x540] sm:$0xff]
    %v575 = vld [vmem:[#allocation3 + $0x548] sm:$0xff]
    %v576 = vld [vmem:[#allocation3 + $0x550] sm:$0xff]
    %v577 = vld [vmem:[#allocation3 + $0x558] sm:$0xff]
    %v578 = vld [vmem:[#allocation3 + $0x560] sm:$0xff]
    %v579 = vld [vmem:[#allocation3 + $0x568] sm:$0xff]
    %v580 = vld [vmem:[#allocation3 + $0x570] sm:$0xff]
    %v581 = vld [vmem:[#allocation3 + $0x578] sm:$0xff]
    %v582 = vld [vmem:[#allocation3 + $0x580] sm:$0xff]
    %v583 = vld [vmem:[#allocation3 + $0x588] sm:$0xff]
    %v584 = vld [vmem:[#allocation3 + $0x590] sm:$0xff]
    %v585 = vld [vmem:[#allocation3 + $0x598] sm:$0xff]
    %v586 = vld [vmem:[#allocation3 + $0x5a0] sm:$0xff]
    %v587 = vld [vmem:[#allocation3 + $0x5a8] sm:$0xff]
    %v588 = vld [vmem:[#allocation3 + $0x5b0] sm:$0xff]
    %v589 = vld [vmem:[#allocation3 + $0x5b8] sm:$0xff]
    %v590 = vld [vmem:[#allocation3 + $0x5c0] sm:$0xff]
    %v591 = vld [vmem:[#allocation3 + $0x5c8] sm:$0xff]
    %v592 = vld [vmem:[#allocation3 + $0x5d0] sm:$0xff]
    %v593 = vld [vmem:[#allocation3 + $0x5d8] sm:$0xff]
    %v594 = vld [vmem:[#allocation3 + $0x5e0] sm:$0xff]
    %v595 = vld [vmem:[#allocation3 + $0x5e8] sm:$0xff]
    %v596 = vld [vmem:[#allocation3 + $0x5f0] sm:$0xff]
    %v597 = vld [vmem:[#allocation3 + $0x5f8] sm:$0xff]
    %v598 = vld [vmem:[#allocation3 + $0x600] sm:$0xff]
    %v599 = vld [vmem:[#allocation3 + $0x608] sm:$0xff]
    %v600 = vld [vmem:[#allocation3 + $0x610] sm:$0xff]
    %v601 = vld [vmem:[#allocation3 + $0x618] sm:$0xff]
    %v602 = vld [vmem:[#allocation3 + $0x620] sm:$0xff]
    %v603 = vld [vmem:[#allocation3 + $0x628] sm:$0xff]
    %v604 = vld [vmem:[#allocation3 + $0x630] sm:$0xff]
    %v605 = vld [vmem:[#allocation3 + $0x638] sm:$0xff]
    %606 = vmatprep.subr.mxu0 %v543
    %607 = vmatpush1.msra.mxu0 %v542
    %608 = vmatprep.subr.mxu0 %v547
    %609 = vmatpush1.msra.mxu0 %v546
    %610 = vmatprep.subr.mxu0 %v551
    %611 = vmatpush1.msra.mxu0 %v550
    %612 = vmatprep.subr.mxu0 %v555
    %613 = vmatpush1.msra.mxu0 %v554
    %614 = vmatprep.subr.mxu0 %v559
    %615 = vmatpush1.msra.mxu0 %v558
    %616 = vmatprep.subr.mxu0 %v563
    %617 = vmatpush1.msra.mxu0 %v562
    %618 = vmatprep.subr.mxu0 %v567
    %619 = vmatpush1.msra.mxu0 %v566
    %620 = vmatprep.subr.mxu0 %v571
    %621 = vmatpush1.msra.mxu0 %v570
    %622 = vmatprep.subr.mxu0 %v575
    %623 = vmatpush1.msra.mxu0 %v574
    %624 = vmatprep.subr.mxu0 %v579
    %625 = vmatpush1.msra.mxu0 %v578
    %626 = vmatprep.subr.mxu0 %v583
    %627 = vmatpush1.msra.mxu0 %v582
    %628 = vmatprep.subr.mxu0 %v587
    %629 = vmatpush1.msra.mxu0 %v586
    %630 = vmatprep.subr.mxu0 %v591
    %631 = vmatpush1.msra.mxu0 %v590
    %632 = vmatprep.subr.mxu0 %v595
    %633 = vmatpush1.msra.mxu0 %v594
    %634 = vmatprep.subr.mxu0 %v599
    %635 = vmatpush1.msra.mxu0 %v598
    %636 = vmatprep.subr.mxu0 %v603
    %637 = vmatpush1.msra.mxu0 %v602
    %638 = vmatprep.subr.mxu0 0.0
    %639 = vmatpush1.msra.mxu0 0.0
    %640 = vmatprep.subr.mxu0 0.0
    %641 = vmatpush1.msra.mxu0 0.0
    %642 = vmatprep.subr.mxu0 0.0
    %643 = vmatpush1.msra.mxu0 0.0
    %644 = vmatprep.subr.mxu0 0.0
    %645 = vmatpush1.msra.mxu0 0.0
    %646 = vmatprep.subr.mxu0 0.0
    %647 = vmatpush1.msra.mxu0 0.0
    %648 = vmatprep.subr.mxu0 0.0
    %649 = vmatpush1.msra.mxu0 0.0
    %650 = vmatprep.subr.mxu0 0.0
    %651 = vmatpush1.msra.mxu0 0.0
    %652 = vmatprep.subr.mxu0 0.0
    %653 = vmatpush1.msra.mxu0 0.0
    %654 = vmatprep.subr.mxu0 0.0
    %655 = vmatpush1.msra.mxu0 0.0
    %656 = vmatprep.subr.mxu0 0.0
    %657 = vmatpush1.msra.mxu0 0.0
    %658 = vmatprep.subr.mxu0 0.0
    %659 = vmatpush1.msra.mxu0 0.0
    %660 = vmatprep.subr.mxu0 0.0
    %661 = vmatpush1.msra.mxu0 0.0
    %662 = vmatprep.subr.mxu0 0.0
    %663 = vmatpush1.msra.mxu0 0.0
    %664 = vmatprep.subr.mxu0 0.0
    %665 = vmatpush1.msra.mxu0 0.0
    %666 = vmatprep.subr.mxu0 0.0
    %667 = vmatpush1.msra.mxu0 0.0
    %668 = vmatprep.subr.mxu0 0.0
    %669 = vmatpush1.msra.mxu0 0.0
    %670 = vmatprep.mubr.f32.mxu0 0.0
    %671 = vmatmul.mubr.f32.gmra.mrb[0].mxu0 0.0
    %v672 = vpop.f32.mrb[0].mxu0
    %v673 = vadd.f32 0.0, %v672
    %v674 = vpop.f32.mrb[0].mxu0
    %v675 = vadd.f32 0.0, %v674
    %676 = vdwg.mxu0
    %677 = vmatprep.subr.mxu0 %v545
    %678 = vmatpush1.msra.mxu0 %v544
    %679 = vmatprep.subr.mxu0 %v549
    %680 = vmatpush1.msra.mxu0 %v548
    %681 = vmatprep.subr.mxu0 %v553
    %682 = vmatpush1.msra.mxu0 %v552
    %683 = vmatprep.subr.mxu0 %v557
    %684 = vmatpush1.msra.mxu0 %v556
    %685 = vmatprep.subr.mxu0 %v561
    %686 = vmatpush1.msra.mxu0 %v560
    %687 = vmatprep.subr.mxu0 %v565
    %688 = vmatpush1.msra.mxu0 %v564
    %689 = vmatprep.subr.mxu0 %v569
    %690 = vmatpush1.msra.mxu0 %v568
    %691 = vmatprep.subr.mxu0 %v573
    %692 = vmatpush1.msra.mxu0 %v572
    %693 = vmatprep.subr.mxu0 %v577
    %694 = vmatpush1.msra.mxu0 %v576
    %695 = vmatprep.subr.mxu0 %v581
    %696 = vmatpush1.msra.mxu0 %v580
    %697 = vmatprep.subr.mxu0 %v585
    %698 = vmatpush1.msra.mxu0 %v584
    %699 = vmatprep.subr.mxu0 %v589
    %700 = vmatpush1.msra.mxu0 %v588
    %701 = vmatprep.subr.mxu0 %v593
    %702 = vmatpush1.msra.mxu0 %v592
    %703 = vmatprep.subr.mxu0 %v597
    %704 = vmatpush1.msra.mxu0 %v596
    %705 = vmatprep.subr.mxu0 %v601
    %706 = vmatpush1.msra.mxu0 %v600
    %707 = vmatprep.subr.mxu0 %v605
    %708 = vmatpush1.msra.mxu0 %v604
    %709 = vmatprep.subr.mxu0 0.0
    %710 = vmatpush1.msra.mxu0 0.0
    %711 = vmatprep.subr.mxu0 0.0
    %712 = vmatpush1.msra.mxu0 0.0
    %713 = vmatprep.subr.mxu0 0.0
    %714 = vmatpush1.msra.mxu0 0.0
    %715 = vmatprep.subr.mxu0 0.0
    %716 = vmatpush1.msra.mxu0 0.0
    %717 = vmatprep.subr.mxu0 0.0
    %718 = vmatpush1.msra.mxu0 0.0
    %719 = vmatprep.subr.mxu0 0.0
    %720 = vmatpush1.msra.mxu0 0.0
    %721 = vmatprep.subr.mxu0 0.0
    %722 = vmatpush1.msra.mxu0 0.0
    %723 = vmatprep.subr.mxu0 0.0
    %724 = vmatpush1.msra.mxu0 0.0
    %725 = vmatprep.subr.mxu0 0.0
    %726 = vmatpush1.msra.mxu0 0.0
    %727 = vmatprep.subr.mxu0 0.0
    %728 = vmatpush1.msra.mxu0 0.0
    %729 = vmatprep.subr.mxu0 0.0
    %730 = vmatpush1.msra.mxu0 0.0
    %731 = vmatprep.subr.mxu0 0.0
    %732 = vmatpush1.msra.mxu0 0.0
    %733 = vmatprep.subr.mxu0 0.0
    %734 = vmatpush1.msra.mxu0 0.0
    %735 = vmatprep.subr.mxu0 0.0
    %736 = vmatpush1.msra.mxu0 0.0
    %737 = vmatprep.subr.mxu0 0.0
    %738 = vmatpush1.msra.mxu0 0.0
    %739 = vmatprep.subr.mxu0 0.0
    %740 = vmatpush1.msra.mxu0 0.0
    %741 = vmatprep.mubr.f32.mxu0 0.0
    %742 = vmatmul.mubr.f32.gmra.mrb[0].mxu0 0.0
    %v743 = vpop.f32.mrb[0].mxu0
    %v744 = vadd.f32 0.0, %v743
    %v745 = vpop.f32.mrb[0].mxu0
    %v746 = vadd.f32 0.0, %v745
    %747 = vdwg.mxu0
    %748 = vmatprep.subr.mxu0 %v479
    %749 = vmatpush1.msra.mxu0 %v478
    %750 = vmatprep.subr.mxu0 %v483
    %751 = vmatpush1.msra.mxu0 %v482
    %752 = vmatprep.subr.mxu0 %v487
    %753 = vmatpush1.msra.mxu0 %v486
    %754 = vmatprep.subr.mxu0 %v491
    %755 = vmatpush1.msra.mxu0 %v490
    %756 = vmatprep.subr.mxu0 %v495
    %757 = vmatpush1.msra.mxu0 %v494
    %758 = vmatprep.subr.mxu0 %v499
    %759 = vmatpush1.msra.mxu0 %v498
    %760 = vmatprep.subr.mxu0 %v503
    %761 = vmatpush1.msra.mxu0 %v502
    %762 = vmatprep.subr.mxu0 %v507
    %763 = vmatpush1.msra.mxu0 %v506
    %764 = vmatprep.subr.mxu0 %v511
    %765 = vmatpush1.msra.mxu0 %v510
    %766 = vmatprep.subr.mxu0 %v515
    %767 = vmatpush1.msra.mxu0 %v514
    %768 = vmatprep.subr.mxu0 %v519
    %769 = vmatpush1.msra.mxu0 %v518
    %770 = vmatprep.subr.mxu0 %v523
    %771 = vmatpush1.msra.mxu0 %v522
    %772 = vmatprep.subr.mxu0 %v527
    %773 = vmatpush1.msra.mxu0 %v526
    %774 = vmatprep.subr.mxu0 %v531
    %775 = vmatpush1.msra.mxu0 %v530
    %776 = vmatprep.subr.mxu0 %v535
    %777 = vmatpush1.msra.mxu0 %v534
    %778 = vmatprep.subr.mxu0 %v539
    %779 = vmatpush1.msra.mxu0 %v538
    %780 = vmatprep.subr.mxu0 0.0
    %781 = vmatpush1.msra.mxu0 0.0
    %782 = vmatprep.subr.mxu0 0.0
    %783 = vmatpush1.msra.mxu0 0.0
    %784 = vmatprep.subr.mxu0 0.0
    %785 = vmatpush1.msra.mxu0 0.0
    %786 = vmatprep.subr.mxu0 0.0
    %787 = vmatpush1.msra.mxu0 0.0
    %788 = vmatprep.subr.mxu0 0.0
    %789 = vmatpush1.msra.mxu0 0.0
    %790 = vmatprep.subr.mxu0 0.0
    %791 = vmatpush1.msra.mxu0 0.0
    %792 = vmatprep.subr.mxu0 0.0
    %793 = vmatpush1.msra.mxu0 0.0
    %794 = vmatprep.subr.mxu0 0.0
    %795 = vmatpush1.msra.mxu0 0.0
    %796 = vmatprep.subr.mxu0 0.0
    %797 = vmatpush1.msra.mxu0 0.0
    %798 = vmatprep.subr.mxu0 0.0
    %799 = vmatpush1.msra.mxu0 0.0
    %800 = vmatprep.subr.mxu0 0.0
    %801 = vmatpush1.msra.mxu0 0.0
    %802 = vmatprep.subr.mxu0 0.0
    %803 = vmatpush1.msra.mxu0 0.0
    %804 = vmatprep.subr.mxu0 0.0
    %805 = vmatpush1.msra.mxu0 0.0
    %806 = vmatprep.subr.mxu0 0.0
    %807 = vmatpush1.msra.mxu0 0.0
    %808 = vmatprep.subr.mxu0 0.0
    %809 = vmatpush1.msra.mxu0 0.0
    %810 = vmatprep.subr.mxu0 0.0
    %811 = vmatpush1.msra.mxu0 0.0
    %812 = vmatprep.mubr.f32.mxu0 0.0
    %813 = vmatmul.mubr.f32.gmra.mrb[0].mxu0 %v477
    %v814 = vpop.f32.mrb[0].mxu0
    %v815 = vadd.f32 %v673, %v814
    %v816 = vpop.f32.mrb[0].mxu0
    %v817 = vadd.f32 %v675, %v816
    %818 = vdwg.mxu0
    %819 = vmatprep.subr.mxu0 %v481
    %820 = vmatpush1.msra.mxu0 %v480
    %821 = vmatprep.subr.mxu0 %v485
    %822 = vmatpush1.msra.mxu0 %v484
    %823 = vmatprep.subr.mxu0 %v489
    %824 = vmatpush1.msra.mxu0 %v488
    %825 = vmatprep.subr.mxu0 %v493
    %826 = vmatpush1.msra.mxu0 %v492
    %827 = vmatprep.subr.mxu0 %v497
    %828 = vmatpush1.msra.mxu0 %v496
    %829 = vmatprep.subr.mxu0 %v501
    %830 = vmatpush1.msra.mxu0 %v500
    %831 = vmatprep.subr.mxu0 %v505
    %832 = vmatpush1.msra.mxu0 %v504
    %833 = vmatprep.subr.mxu0 %v509
    %834 = vmatpush1.msra.mxu0 %v508
    %835 = vmatprep.subr.mxu0 %v513
    %836 = vmatpush1.msra.mxu0 %v512
    %837 = vmatprep.subr.mxu0 %v517
    %838 = vmatpush1.msra.mxu0 %v516
    %839 = vmatprep.subr.mxu0 %v521
    %840 = vmatpush1.msra.mxu0 %v520
    %841 = vmatprep.subr.mxu0 %v525
    %842 = vmatpush1.msra.mxu0 %v524
    %843 = vmatprep.subr.mxu0 %v529
    %844 = vmatpush1.msra.mxu0 %v528
    %845 = vmatprep.subr.mxu0 %v533
    %846 = vmatpush1.msra.mxu0 %v532
    %847 = vmatprep.subr.mxu0 %v537
    %848 = vmatpush1.msra.mxu0 %v536
    %849 = vmatprep.subr.mxu0 %v541
    %850 = vmatpush1.msra.mxu0 %v540
    %851 = vmatprep.subr.mxu0 0.0
    %852 = vmatpush1.msra.mxu0 0.0
    %853 = vmatprep.subr.mxu0 0.0
    %854 = vmatpush1.msra.mxu0 0.0
    %855 = vmatprep.subr.mxu0 0.0
    %856 = vmatpush1.msra.mxu0 0.0
    %857 = vmatprep.subr.mxu0 0.0
    %858 = vmatpush1.msra.mxu0 0.0
    %859 = vmatprep.subr.mxu0 0.0
    %860 = vmatpush1.msra.mxu0 0.0
    %861 = vmatprep.subr.mxu0 0.0
    %862 = vmatpush1.msra.mxu0 0.0
    %863 = vmatprep.subr.mxu0 0.0
    %864 = vmatpush1.msra.mxu0 0.0
    %865 = vmatprep.subr.mxu0 0.0
    %866 = vmatpush1.msra.mxu0 0.0
    %867 = vmatprep.subr.mxu0 0.0
    %868 = vmatpush1.msra.mxu0 0.0
    %869 = vmatprep.subr.mxu0 0.0
    %870 = vmatpush1.msra.mxu0 0.0
    %871 = vmatprep.subr.mxu0 0.0
    %872 = vmatpush1.msra.mxu0 0.0
    %873 = vmatprep.subr.mxu0 0.0
    %874 = vmatpush1.msra.mxu0 0.0
    %875 = vmatprep.subr.mxu0 0.0
    %876 = vmatpush1.msra.mxu0 0.0
    %877 = vmatprep.subr.mxu0 0.0
    %878 = vmatpush1.msra.mxu0 0.0
    %879 = vmatprep.subr.mxu0 0.0
    %880 = vmatpush1.msra.mxu0 0.0
    %881 = vmatprep.subr.mxu0 0.0
    %882 = vmatpush1.msra.mxu0 0.0
    %883 = vmatprep.mubr.f32.mxu0 0.0
    %884 = vmatmul.mubr.f32.gmra.mrb[0].mxu0 %v477
    %v885 = vpop.f32.mrb[0].mxu0
    %v886 = vadd.f32 %v744, %v885
    %v887 = vpop.f32.mrb[0].mxu0
    %v888 = vadd.f32 %v746, %v887
    %889 = vdwg.mxu0
    %v890 = vadd.f32 %v815, %v220
    %v891 = vadd.f32 %v817, %v224
    %v892 = vadd.f32 %v886, %v228
    %v893 = vadd.f32 %v888, %v232
    %v894 = vxor.u32 %v890, 2147483648
    %v895 = vxor.u32 %v891, 2147483648
    %v896 = vxor.u32 %v892, 2147483648
    %v897 = vmul.f32 %v894, 1.442695
    %v898 = vpow.pop %v897
    %v899 = vmul.f32 %v895, 1.442695
    %v900 = vpow.pop %v899
    %v901 = vmul.f32 %v896, 1.442695
    %v902 = vpow.pop %v901
    %v903 = vadd.f32 %v898, 1.0
    %v904 = vadd.f32 %v900, 1.0
    %v905 = vadd.f32 %v902, 1.0
    %v906 = vrcp.pop %v903
    %v907 = vmul.f32 1.0, %v906
    %v908 = vrcp.pop %v904
    %v909 = vmul.f32 1.0, %v908
    %v910 = vrcp.pop %v905
    %v911 = vmul.f32 1.0, %v910
    %v912 = vtanh.pop %v893
    %v913 = vmul.f32 %v909, 0.0
    %v914 = vmul.f32 %v907, %v912
    %v915 = vadd.f32 %v913, %v914
    %v916 = vtanh.pop %v915
    %v917 = vmul.f32 %v911, %v916
    %s918 = smul.u32 1, 4
    %s919 = smul.addr %s918, 8
    %s920 = scalar_lea.vmem [#allocation2], %s919
    %v921 = vld [vmem:[%s920] sm:$0xff]
    %v922 = vld [vmem:[%s920 + $0x8] sm:$0xff]
    %v923 = vld [vmem:[%s920 + $0x10] sm:$0xff]
    %v924 = vld [vmem:[%s920 + $0x18] sm:$0xff]
    %925 = vmatprep.subr.mxu0 %v245
    %926 = vmatpush1.msra.mxu0 %v244
    %927 = vmatprep.subr.mxu0 %v249
    %928 = vmatpush1.msra.mxu0 %v248
    %929 = vmatprep.subr.mxu0 %v253
    %930 = vmatpush1.msra.mxu0 %v252
    %931 = vmatprep.subr.mxu0 %v257
    %932 = vmatpush1.msra.mxu0 %v256
    %933 = vmatprep.subr.mxu0 %v261
    %934 = vmatpush1.msra.mxu0 %v260
    %935 = vmatprep.subr.mxu0 %v265
    %936 = vmatpush1.msra.mxu0 %v264
    %937 = vmatprep.subr.mxu0 %v269
    %938 = vmatpush1.msra.mxu0 %v268
    %939 = vmatprep.subr.mxu0 %v273
    %940 = vmatpush1.msra.mxu0 %v272
    %941 = vmatprep.subr.mxu0 %v277
    %942 = vmatpush1.msra.mxu0 %v276
    %943 = vmatprep.subr.mxu0 %v281
    %944 = vmatpush1.msra.mxu0 %v280
    %945 = vmatprep.subr.mxu0 %v285
    %946 = vmatpush1.msra.mxu0 %v284
    %947 = vmatprep.subr.mxu0 %v289
    %948 = vmatpush1.msra.mxu0 %v288
    %949 = vmatprep.subr.mxu0 %v293
    %950 = vmatpush1.msra.mxu0 %v292
    %951 = vmatprep.subr.mxu0 %v297
    %952 = vmatpush1.msra.mxu0 %v296
    %953 = vmatprep.subr.mxu0 %v301
    %954 = vmatpush1.msra.mxu0 %v300
    %955 = vmatprep.subr.mxu0 %v305
    %956 = vmatpush1.msra.mxu0 %v304
    %957 = vmatprep.subr.mxu0 0.0
    %958 = vmatpush1.msra.mxu0 0.0
    %959 = vmatprep.subr.mxu0 0.0
    %960 = vmatpush1.msra.mxu0 0.0
    %961 = vmatprep.subr.mxu0 0.0
    %962 = vmatpush1.msra.mxu0 0.0
    %963 = vmatprep.subr.mxu0 0.0
    %964 = vmatpush1.msra.mxu0 0.0
    %965 = vmatprep.subr.mxu0 0.0
    %966 = vmatpush1.msra.mxu0 0.0
    %967 = vmatprep.subr.mxu0 0.0
    %968 = vmatpush1.msra.mxu0 0.0
    %969 = vmatprep.subr.mxu0 0.0
    %970 = vmatpush1.msra.mxu0 0.0
    %971 = vmatprep.subr.mxu0 0.0
    %972 = vmatpush1.msra.mxu0 0.0
    %973 = vmatprep.subr.mxu0 0.0
    %974 = vmatpush1.msra.mxu0 0.0
    %975 = vmatprep.subr.mxu0 0.0
    %976 = vmatpush1.msra.mxu0 0.0
    %977 = vmatprep.subr.mxu0 0.0
    %978 = vmatpush1.msra.mxu0 0.0
    %979 = vmatprep.subr.mxu0 0.0
    %980 = vmatpush1.msra.mxu0 0.0
    %981 = vmatprep.subr.mxu0 0.0
    %982 = vmatpush1.msra.mxu0 0.0
    %983 = vmatprep.subr.mxu0 0.0
    %984 = vmatpush1.msra.mxu0 0.0
    %985 = vmatprep.subr.mxu0 0.0
    %986 = vmatpush1.msra.mxu0 0.0
    %987 = vmatprep.subr.mxu0 0.0
    %988 = vmatpush1.msra.mxu0 0.0
    %989 = vmatprep.mubr.f32.mxu0 0.0
    %990 = vmatmul.mubr.f32.gmra.mrb[0].mxu0 %v477
    %v991 = vpop.f32.mrb[0].mxu0
    %v992 = vadd.f32 0.0, %v991
    %v993 = vpop.f32.mrb[0].mxu0
    %v994 = vadd.f32 0.0, %v993
    %995 = vdwg.mxu0
    %996 = vmatprep.subr.mxu0 %v247
    %997 = vmatpush1.msra.mxu0 %v246
    %998 = vmatprep.subr.mxu0 %v251
    %999 = vmatpush1.msra.mxu0 %v250
    %1000 = vmatprep.subr.mxu0 %v255
    %1001 = vmatpush1.msra.mxu0 %v254
    %1002 = vmatprep.subr.mxu0 %v259
    %1003 = vmatpush1.msra.mxu0 %v258
    %1004 = vmatprep.subr.mxu0 %v263
    %1005 = vmatpush1.msra.mxu0 %v262
    %1006 = vmatprep.subr.mxu0 %v267
    %1007 = vmatpush1.msra.mxu0 %v266
    %1008 = vmatprep.subr.mxu0 %v271
    %1009 = vmatpush1.msra.mxu0 %v270
    %1010 = vmatprep.subr.mxu0 %v275
    %1011 = vmatpush1.msra.mxu0 %v274
    %1012 = vmatprep.subr.mxu0 %v279
    %1013 = vmatpush1.msra.mxu0 %v278
    %1014 = vmatprep.subr.mxu0 %v283
    %1015 = vmatpush1.msra.mxu0 %v282
    %1016 = vmatprep.subr.mxu0 %v287
    %1017 = vmatpush1.msra.mxu0 %v286
    %1018 = vmatprep.subr.mxu0 %v291
    %1019 = vmatpush1.msra.mxu0 %v290
    %1020 = vmatprep.subr.mxu0 %v295
    %1021 = vmatpush1.msra.mxu0 %v294
    %1022 = vmatprep.subr.mxu0 %v299
    %1023 = vmatpush1.msra.mxu0 %v298
    %1024 = vmatprep.subr.mxu0 %v303
    %1025 = vmatpush1.msra.mxu0 %v302
    %1026 = vmatprep.subr.mxu0 %v307
    %1027 = vmatpush1.msra.mxu0 %v306
    %1028 = vmatprep.subr.mxu0 0.0
    %1029 = vmatpush1.msra.mxu0 0.0
    %1030 = vmatprep.subr.mxu0 0.0
    %1031 = vmatpush1.msra.mxu0 0.0
    %1032 = vmatprep.subr.mxu0 0.0
    %1033 = vmatpush1.msra.mxu0 0.0
    %1034 = vmatprep.subr.mxu0 0.0
    %1035 = vmatpush1.msra.mxu0 0.0
    %1036 = vmatprep.subr.mxu0 0.0
    %1037 = vmatpush1.msra.mxu0 0.0
    %1038 = vmatprep.subr.mxu0 0.0
    %1039 = vmatpush1.msra.mxu0 0.0
    %1040 = vmatprep.subr.mxu0 0.0
    %1041 = vmatpush1.msra.mxu0 0.0
    %1042 = vmatprep.subr.mxu0 0.0
    %1043 = vmatpush1.msra.mxu0 0.0
    %1044 = vmatprep.subr.mxu0 0.0
    %1045 = vmatpush1.msra.mxu0 0.0
    %1046 = vmatprep.subr.mxu0 0.0
    %1047 = vmatpush1.msra.mxu0 0.0
    %1048 = vmatprep.subr.mxu0 0.0
    %1049 = vmatpush1.msra.mxu0 0.0
    %1050 = vmatprep.subr.mxu0 0.0
    %1051 = vmatpush1.msra.mxu0 0.0
    %1052 = vmatprep.subr.mxu0 0.0
    %1053 = vmatpush1.msra.mxu0 0.0
    %1054 = vmatprep.subr.mxu0 0.0
    %1055 = vmatpush1.msra.mxu0 0.0
    %1056 = vmatprep.subr.mxu0 0.0
    %1057 = vmatpush1.msra.mxu0 0.0
    %1058 = vmatprep.subr.mxu0 0.0
    %1059 = vmatpush1.msra.mxu0 0.0
    %1060 = vmatprep.mubr.f32.mxu0 0.0
    %1061 = vmatmul.mubr.f32.gmra.mrb[0].mxu0 %v477
    %v1062 = vpop.f32.mrb[0].mxu0
    %v1063 = vadd.f32 0.0, %v1062
    %v1064 = vpop.f32.mrb[0].mxu0
    %v1065 = vadd.f32 0.0, %v1064
    %1066 = vdwg.mxu0
    %v1067 = vadd.f32 %v921, %v992
    %v1068 = vadd.f32 %v922, %v994
    %v1069 = vadd.f32 %v923, %v1063
    %v1070 = vadd.f32 %v924, %v1065
    %v1071 = vxor.u32 %v1067, 2147483648
    %v1072 = vxor.u32 %v1068, 2147483648
    %v1073 = vxor.u32 %v1069, 2147483648
    %v1074 = vmul.f32 %v1071, 1.442695
    %v1075 = vpow.pop %v1074
    %v1076 = vmul.f32 %v1072, 1.442695
    %v1077 = vpow.pop %v1076
    %v1078 = vmul.f32 %v1073, 1.442695
    %v1079 = vpow.pop %v1078
    %v1080 = vadd.f32 %v1075, 1.0
    %v1081 = vadd.f32 %v1077, 1.0
    %v1082 = vadd.f32 %v1079, 1.0
    %v1083 = vrcp.pop %v1080
    %v1084 = vmul.f32 1.0, %v1083
    %v1085 = vrcp.pop %v1081
    %v1086 = vmul.f32 1.0, %v1085
    %v1087 = vrcp.pop %v1082
    %v1088 = vmul.f32 1.0, %v1087
    %v1089 = vtanh.pop %v1070
    %v1090 = vmul.f32 %v1086, %v475
    %v1091 = vmul.f32 %v1084, %v1089
    %v1092 = vadd.f32 %v1090, %v1091
    %v1093 = vtanh.pop %v1092
    %v1094 = vmul.f32 %v1088, %v1093
    %1095 = vmatprep.subr.mxu0 %v543
    %1096 = vmatpush1.msra.mxu0 %v542
    %1097 = vmatprep.subr.mxu0 %v547
    %1098 = vmatpush1.msra.mxu0 %v546
    %1099 = vmatprep.subr.mxu0 %v551
    %1100 = vmatpush1.msra.mxu0 %v550
    %1101 = vmatprep.subr.mxu0 %v555
    %1102 = vmatpush1.msra.mxu0 %v554
    %1103 = vmatprep.subr.mxu0 %v559
    %1104 = vmatpush1.msra.mxu0 %v558
    %1105 = vmatprep.subr.mxu0 %v563
    %1106 = vmatpush1.msra.mxu0 %v562
    %1107 = vmatprep.subr.mxu0 %v567
    %1108 = vmatpush1.msra.mxu0 %v566
    %1109 = vmatprep.subr.mxu0 %v571
    %1110 = vmatpush1.msra.mxu0 %v570
    %1111 = vmatprep.subr.mxu0 %v575
    %1112 = vmatpush1.msra.mxu0 %v574
    %1113 = vmatprep.subr.mxu0 %v579
    %1114 = vmatpush1.msra.mxu0 %v578
    %1115 = vmatprep.subr.mxu0 %v583
    %1116 = vmatpush1.msra.mxu0 %v582
    %1117 = vmatprep.subr.mxu0 %v587
    %1118 = vmatpush1.msra.mxu0 %v586
    %1119 = vmatprep.subr.mxu0 %v591
    %1120 = vmatpush1.msra.mxu0 %v590
    %1121 = vmatprep.subr.mxu0 %v595
    %1122 = vmatpush1.msra.mxu0 %v594
    %1123 = vmatprep.subr.mxu0 %v599
    %1124 = vmatpush1.msra.mxu0 %v598
    %1125 = vmatprep.subr.mxu0 %v603
    %1126 = vmatpush1.msra.mxu0 %v602
    %1127 = vmatprep.subr.mxu0 0.0
    %1128 = vmatpush1.msra.mxu0 0.0
    %1129 = vmatprep.subr.mxu0 0.0
    %1130 = vmatpush1.msra.mxu0 0.0
    %1131 = vmatprep.subr.mxu0 0.0
    %1132 = vmatpush1.msra.mxu0 0.0
    %1133 = vmatprep.subr.mxu0 0.0
    %1134 = vmatpush1.msra.mxu0 0.0
    %1135 = vmatprep.subr.mxu0 0.0
    %1136 = vmatpush1.msra.mxu0 0.0
    %1137 = vmatprep.subr.mxu0 0.0
    %1138 = vmatpush1.msra.mxu0 0.0
    %1139 = vmatprep.subr.mxu0 0.0
    %1140 = vmatpush1.msra.mxu0 0.0
    %1141 = vmatprep.subr.mxu0 0.0
    %1142 = vmatpush1.msra.mxu0 0.0
    %1143 = vmatprep.subr.mxu0 0.0
    %1144 = vmatpush1.msra.mxu0 0.0
    %1145 = vmatprep.subr.mxu0 0.0
    %1146 = vmatpush1.msra.mxu0 0.0
    %1147 = vmatprep.subr.mxu0 0.0
    %1148 = vmatpush1.msra.mxu0 0.0
    %1149 = vmatprep.subr.mxu0 0.0
    %1150 = vmatpush1.msra.mxu0 0.0
    %1151 = vmatprep.subr.mxu0 0.0
    %1152 = vmatpush1.msra.mxu0 0.0
    %1153 = vmatprep.subr.mxu0 0.0
    %1154 = vmatpush1.msra.mxu0 0.0
    %1155 = vmatprep.subr.mxu0 0.0
    %1156 = vmatpush1.msra.mxu0 0.0
    %1157 = vmatprep.subr.mxu0 0.0
    %1158 = vmatpush1.msra.mxu0 0.0
    %1159 = vmatprep.mubr.f32.mxu0 0.0
    %1160 = vmatmul.mubr.f32.gmra.mrb[0].mxu0 %v917
    %v1161 = vpop.f32.mrb[0].mxu0
    %v1162 = vadd.f32 0.0, %v1161
    %v1163 = vpop.f32.mrb[0].mxu0
    %v1164 = vadd.f32 0.0, %v1163
    %1165 = vdwg.mxu0
    %1166 = vmatprep.subr.mxu0 %v545
    %1167 = vmatpush1.msra.mxu0 %v544
    %1168 = vmatprep.subr.mxu0 %v549
    %1169 = vmatpush1.msra.mxu0 %v548
    %1170 = vmatprep.subr.mxu0 %v553
    %1171 = vmatpush1.msra.mxu0 %v552
    %1172 = vmatprep.subr.mxu0 %v557
    %1173 = vmatpush1.msra.mxu0 %v556
    %1174 = vmatprep.subr.mxu0 %v561
    %1175 = vmatpush1.msra.mxu0 %v560
    %1176 = vmatprep.subr.mxu0 %v565
    %1177 = vmatpush1.msra.mxu0 %v564
    %1178 = vmatprep.subr.mxu0 %v569
    %1179 = vmatpush1.msra.mxu0 %v568
    %1180 = vmatprep.subr.mxu0 %v573
    %1181 = vmatpush1.msra.mxu0 %v572
    %1182 = vmatprep.subr.mxu0 %v577
    %1183 = vmatpush1.msra.mxu0 %v576
    %1184 = vmatprep.subr.mxu0 %v581
    %1185 = vmatpush1.msra.mxu0 %v580
    %1186 = vmatprep.subr.mxu0 %v585
    %1187 = vmatpush1.msra.mxu0 %v584
    %1188 = vmatprep.subr.mxu0 %v589
    %1189 = vmatpush1.msra.mxu0 %v588
    %1190 = vmatprep.subr.mxu0 %v593
    %1191 = vmatpush1.msra.mxu0 %v592
    %1192 = vmatprep.subr.mxu0 %v597
    %1193 = vmatpush1.msra.mxu0 %v596
    %1194 = vmatprep.subr.mxu0 %v601
    %1195 = vmatpush1.msra.mxu0 %v600
    %1196 = vmatprep.subr.mxu0 %v605
    %1197 = vmatpush1.msra.mxu0 %v604
    %1198 = vmatprep.subr.mxu0 0.0
    %1199 = vmatpush1.msra.mxu0 0.0
    %1200 = vmatprep.subr.mxu0 0.0
    %1201 = vmatpush1.msra.mxu0 0.0
    %1202 = vmatprep.subr.mxu0 0.0
    %1203 = vmatpush1.msra.mxu0 0.0
    %1204 = vmatprep.subr.mxu0 0.0
    %1205 = vmatpush1.msra.mxu0 0.0
    %1206 = vmatprep.subr.mxu0 0.0
    %1207 = vmatpush1.msra.mxu0 0.0
    %1208 = vmatprep.subr.mxu0 0.0
    %1209 = vmatpush1.msra.mxu0 0.0
    %1210 = vmatprep.subr.mxu0 0.0
    %1211 = vmatpush1.msra.mxu0 0.0
    %1212 = vmatprep.subr.mxu0 0.0
    %1213 = vmatpush1.msra.mxu0 0.0
    %1214 = vmatprep.subr.mxu0 0.0
    %1215 = vmatpush1.msra.mxu0 0.0
    %1216 = vmatprep.subr.mxu0 0.0
    %1217 = vmatpush1.msra.mxu0 0.0
    %1218 = vmatprep.subr.mxu0 0.0
    %1219 = vmatpush1.msra.mxu0 0.0
    %1220 = vmatprep.subr.mxu0 0.0
    %1221 = vmatpush1.msra.mxu0 0.0
    %1222 = vmatprep.subr.mxu0 0.0
    %1223 = vmatpush1.msra.mxu0 0.0
    %1224 = vmatprep.subr.mxu0 0.0
    %1225 = vmatpush1.msra.mxu0 0.0
    %1226 = vmatprep.subr.mxu0 0.0
    %1227 = vmatpush1.msra.mxu0 0.0
    %1228 = vmatprep.subr.mxu0 0.0
    %1229 = vmatpush1.msra.mxu0 0.0
    %1230 = vmatprep.mubr.f32.mxu0 0.0
    %1231 = vmatmul.mubr.f32.gmra.mrb[0].mxu0 %v917
    %v1232 = vpop.f32.mrb[0].mxu0
    %v1233 = vadd.f32 0.0, %v1232
    %v1234 = vpop.f32.mrb[0].mxu0
    %v1235 = vadd.f32 0.0, %v1234
    %1236 = vdwg.mxu0
    %1237 = vmatprep.subr.mxu0 %v479
    %1238 = vmatpush1.msra.mxu0 %v478
    %1239 = vmatprep.subr.mxu0 %v483
    %1240 = vmatpush1.msra.mxu0 %v482
    %1241 = vmatprep.subr.mxu0 %v487
    %1242 = vmatpush1.msra.mxu0 %v486
    %1243 = vmatprep.subr.mxu0 %v491
    %1244 = vmatpush1.msra.mxu0 %v490
    %1245 = vmatprep.subr.mxu0 %v495
    %1246 = vmatpush1.msra.mxu0 %v494
    %1247 = vmatprep.subr.mxu0 %v499
    %1248 = vmatpush1.msra.mxu0 %v498
    %1249 = vmatprep.subr.mxu0 %v503
    %1250 = vmatpush1.msra.mxu0 %v502
    %1251 = vmatprep.subr.mxu0 %v507
    %1252 = vmatpush1.msra.mxu0 %v506
    %1253 = vmatprep.subr.mxu0 %v511
    %1254 = vmatpush1.msra.mxu0 %v510
    %1255 = vmatprep.subr.mxu0 %v515
    %1256 = vmatpush1.msra.mxu0 %v514
    %1257 = vmatprep.subr.mxu0 %v519
    %1258 = vmatpush1.msra.mxu0 %v518
    %1259 = vmatprep.subr.mxu0 %v523
    %1260 = vmatpush1.msra.mxu0 %v522
    %1261 = vmatprep.subr.mxu0 %v527
    %1262 = vmatpush1.msra.mxu0 %v526
    %1263 = vmatprep.subr.mxu0 %v531
    %1264 = vmatpush1.msra.mxu0 %v530
    %1265 = vmatprep.subr.mxu0 %v535
    %1266 = vmatpush1.msra.mxu0 %v534
    %1267 = vmatprep.subr.mxu0 %v539
    %1268 = vmatpush1.msra.mxu0 %v538
    %1269 = vmatprep.subr.mxu0 0.0
    %1270 = vmatpush1.msra.mxu0 0.0
    %1271 = vmatprep.subr.mxu0 0.0
    %1272 = vmatpush1.msra.mxu0 0.0
    %1273 = vmatprep.subr.mxu0 0.0
    %1274 = vmatpush1.msra.mxu0 0.0
    %1275 = vmatprep.subr.mxu0 0.0
    %1276 = vmatpush1.msra.mxu0 0.0
    %1277 = vmatprep.subr.mxu0 0.0
    %1278 = vmatpush1.msra.mxu0 0.0
    %1279 = vmatprep.subr.mxu0 0.0
    %1280 = vmatpush1.msra.mxu0 0.0
    %1281 = vmatprep.subr.mxu0 0.0
    %1282 = vmatpush1.msra.mxu0 0.0
    %1283 = vmatprep.subr.mxu0 0.0
    %1284 = vmatpush1.msra.mxu0 0.0
    %1285 = vmatprep.subr.mxu0 0.0
    %1286 = vmatpush1.msra.mxu0 0.0
    %1287 = vmatprep.subr.mxu0 0.0
    %1288 = vmatpush1.msra.mxu0 0.0
    %1289 = vmatprep.subr.mxu0 0.0
    %1290 = vmatpush1.msra.mxu0 0.0
    %1291 = vmatprep.subr.mxu0 0.0
    %1292 = vmatpush1.msra.mxu0 0.0
    %1293 = vmatprep.subr.mxu0 0.0
    %1294 = vmatpush1.msra.mxu0 0.0
    %1295 = vmatprep.subr.mxu0 0.0
    %1296 = vmatpush1.msra.mxu0 0.0
    %1297 = vmatprep.subr.mxu0 0.0
    %1298 = vmatpush1.msra.mxu0 0.0
    %1299 = vmatprep.subr.mxu0 0.0
    %1300 = vmatpush1.msra.mxu0 0.0
    %1301 = vmatprep.mubr.f32.mxu0 0.0
    %1302 = vmatmul.mubr.f32.gmra.mrb[0].mxu0 %v1094
    %v1303 = vpop.f32.mrb[0].mxu0
    %v1304 = vadd.f32 %v1162, %v1303
    %v1305 = vpop.f32.mrb[0].mxu0
    %v1306 = vadd.f32 %v1164, %v1305
    %1307 = vdwg.mxu0
    %1308 = vmatprep.subr.mxu0 %v481
    %1309 = vmatpush1.msra.mxu0 %v480
    %1310 = vmatprep.subr.mxu0 %v485
    %1311 = vmatpush1.msra.mxu0 %v484
    %1312 = vmatprep.subr.mxu0 %v489
    %1313 = vmatpush1.msra.mxu0 %v488
    %1314 = vmatprep.subr.mxu0 %v493
    %1315 = vmatpush1.msra.mxu0 %v492
    %1316 = vmatprep.subr.mxu0 %v497
    %1317 = vmatpush1.msra.mxu0 %v496
    %1318 = vmatprep.subr.mxu0 %v501
    %1319 = vmatpush1.msra.mxu0 %v500
    %1320 = vmatprep.subr.mxu0 %v505
    %1321 = vmatpush1.msra.mxu0 %v504
    %1322 = vmatprep.subr.mxu0 %v509
    %1323 = vmatpush1.msra.mxu0 %v508
    %1324 = vmatprep.subr.mxu0 %v513
    %1325 = vmatpush1.msra.mxu0 %v512
    %1326 = vmatprep.subr.mxu0 %v517
    %1327 = vmatpush1.msra.mxu0 %v516
    %1328 = vmatprep.subr.mxu0 %v521
    %1329 = vmatpush1.msra.mxu0 %v520
    %1330 = vmatprep.subr.mxu0 %v525
    %1331 = vmatpush1.msra.mxu0 %v524
    %1332 = vmatprep.subr.mxu0 %v529
    %1333 = vmatpush1.msra.mxu0 %v528
    %1334 = vmatprep.subr.mxu0 %v533
    %1335 = vmatpush1.msra.mxu0 %v532
    %1336 = vmatprep.subr.mxu0 %v537
    %1337 = vmatpush1.msra.mxu0 %v536
    %1338 = vmatprep.subr.mxu0 %v541
    %1339 = vmatpush1.msra.mxu0 %v540
    %1340 = vmatprep.subr.mxu0 0.0
    %1341 = vmatpush1.msra.mxu0 0.0
    %1342 = vmatprep.subr.mxu0 0.0
    %1343 = vmatpush1.msra.mxu0 0.0
    %1344 = vmatprep.subr.mxu0 0.0
    %1345 = vmatpush1.msra.mxu0 0.0
    %1346 = vmatprep.subr.mxu0 0.0
    %1347 = vmatpush1.msra.mxu0 0.0
    %1348 = vmatprep.subr.mxu0 0.0
    %1349 = vmatpush1.msra.mxu0 0.0
    %1350 = vmatprep.subr.mxu0 0.0
    %1351 = vmatpush1.msra.mxu0 0.0
    %1352 = vmatprep.subr.mxu0 0.0
    %1353 = vmatpush1.msra.mxu0 0.0
    %1354 = vmatprep.subr.mxu0 0.0
    %1355 = vmatpush1.msra.mxu0 0.0
    %1356 = vmatprep.subr.mxu0 0.0
    %1357 = vmatpush1.msra.mxu0 0.0
    %1358 = vmatprep.subr.mxu0 0.0
    %1359 = vmatpush1.msra.mxu0 0.0
    %1360 = vmatprep.subr.mxu0 0.0
    %1361 = vmatpush1.msra.mxu0 0.0
    %1362 = vmatprep.subr.mxu0 0.0
    %1363 = vmatpush1.msra.mxu0 0.0
    %1364 = vmatprep.subr.mxu0 0.0
    %1365 = vmatpush1.msra.mxu0 0.0
    %1366 = vmatprep.subr.mxu0 0.0
    %1367 = vmatpush1.msra.mxu0 0.0
    %1368 = vmatprep.subr.mxu0 0.0
    %1369 = vmatpush1.msra.mxu0 0.0
    %1370 = vmatprep.subr.mxu0 0.0
    %1371 = vmatpush1.msra.mxu0 0.0
    %1372 = vmatprep.mubr.f32.mxu0 0.0
    %1373 = vmatmul.mubr.f32.gmra.mrb[0].mxu0 %v1094
    %v1374 = vpop.f32.mrb[0].mxu0
    %v1375 = vadd.f32 %v1233, %v1374
    %v1376 = vpop.f32.mrb[0].mxu0
    %v1377 = vadd.f32 %v1235, %v1376
    %1378 = vdwg.mxu0
    %v1379 = vadd.f32 %v1304, %v220
    %v1380 = vadd.f32 %v1306, %v224
    %v1381 = vadd.f32 %v1375, %v228
    %v1382 = vadd.f32 %v1377, %v232
    %v1383 = vxor.u32 %v1379, 2147483648
    %v1384 = vxor.u32 %v1380, 2147483648
    %v1385 = vxor.u32 %v1381, 2147483648
    %v1386 = vmul.f32 %v1383, 1.442695
    %v1387 = vpow.pop %v1386
    %v1388 = vmul.f32 %v1384, 1.442695
    %v1389 = vpow.pop %v1388
    %v1390 = vmul.f32 %v1385, 1.442695
    %v1391 = vpow.pop %v1390
    %v1392 = vadd.f32 %v1387, 1.0
    %v1393 = vadd.f32 %v1389, 1.0
    %v1394 = vadd.f32 %v1391, 1.0
    %v1395 = vrcp.pop %v1392
    %v1396 = vmul.f32 1.0, %v1395
    %v1397 = vrcp.pop %v1393
    %v1398 = vmul.f32 1.0, %v1397
    %v1399 = vrcp.pop %v1394
    %v1400 = vmul.f32 1.0, %v1399
    %v1401 = vtanh.pop %v1382
    %v1402 = vmul.f32 %v1398, %v915
    %v1403 = vmul.f32 %v1396, %v1401
    %v1404 = vadd.f32 %v1402, %v1403
    %v1405 = vtanh.pop %v1404
    %v1406 = vmul.f32 %v1400, %v1405
    %s1407 = smul.u32 2, 4
    %s1408 = smul.addr %s1407, 8
    %s1409 = scalar_lea.vmem [#allocation2], %s1408
    %v1410 = vld [vmem:[%s1409] sm:$0xff]
    %v1411 = vld [vmem:[%s1409 + $0x8] sm:$0xff]
    %v1412 = vld [vmem:[%s1409 + $0x10] sm:$0xff]
    %v1413 = vld [vmem:[%s1409 + $0x18] sm:$0xff]
    %1414 = vmatprep.subr.mxu0 %v245
    %1415 = vmatpush1.msra.mxu0 %v244
    %1416 = vmatprep.subr.mxu0 %v249
    %1417 = vmatpush1.msra.mxu0 %v248
    %1418 = vmatprep.subr.mxu0 %v253
    %1419 = vmatpush1.msra.mxu0 %v252
    %1420 = vmatprep.subr.mxu0 %v257
    %1421 = vmatpush1.msra.mxu0 %v256
    %1422 = vmatprep.subr.mxu0 %v261
    %1423 = vmatpush1.msra.mxu0 %v260
    %1424 = vmatprep.subr.mxu0 %v265
    %1425 = vmatpush1.msra.mxu0 %v264
    %1426 = vmatprep.subr.mxu0 %v269
    %1427 = vmatpush1.msra.mxu0 %v268
    %1428 = vmatprep.subr.mxu0 %v273
    %1429 = vmatpush1.msra.mxu0 %v272
    %1430 = vmatprep.subr.mxu0 %v277
    %1431 = vmatpush1.msra.mxu0 %v276
    %1432 = vmatprep.subr.mxu0 %v281
    %1433 = vmatpush1.msra.mxu0 %v280
    %1434 = vmatprep.subr.mxu0 %v285
    %1435 = vmatpush1.msra.mxu0 %v284
    %1436 = vmatprep.subr.mxu0 %v289
    %1437 = vmatpush1.msra.mxu0 %v288
    %1438 = vmatprep.subr.mxu0 %v293
    %1439 = vmatpush1.msra.mxu0 %v292
    %1440 = vmatprep.subr.mxu0 %v297
    %1441 = vmatpush1.msra.mxu0 %v296
    %1442 = vmatprep.subr.mxu0 %v301
    %1443 = vmatpush1.msra.mxu0 %v300
    %1444 = vmatprep.subr.mxu0 %v305
    %1445 = vmatpush1.msra.mxu0 %v304
    %1446 = vmatprep.subr.mxu0 0.0
    %1447 = vmatpush1.msra.mxu0 0.0
    %1448 = vmatprep.subr.mxu0 0.0
    %1449 = vmatpush1.msra.mxu0 0.0
    %1450 = vmatprep.subr.mxu0 0.0
    %1451 = vmatpush1.msra.mxu0 0.0
    %1452 = vmatprep.subr.mxu0 0.0
    %1453 = vmatpush1.msra.mxu0 0.0
    %1454 = vmatprep.subr.mxu0 0.0
    %1455 = vmatpush1.msra.mxu0 0.0
    %1456 = vmatprep.subr.mxu0 0.0
    %1457 = vmatpush1.msra.mxu0 0.0
    %1458 = vmatprep.subr.mxu0 0.0
    %1459 = vmatpush1.msra.mxu0 0.0
    %1460 = vmatprep.subr.mxu0 0.0
    %1461 = vmatpush1.msra.mxu0 0.0
    %1462 = vmatprep.subr.mxu0 0.0
    %1463 = vmatpush1.msra.mxu0 0.0
    %1464 = vmatprep.subr.mxu0 0.0
    %1465 = vmatpush1.msra.mxu0 0.0
    %1466 = vmatprep.subr.mxu0 0.0
    %1467 = vmatpush1.msra.mxu0 0.0
    %1468 = vmatprep.subr.mxu0 0.0
    %1469 = vmatpush1.msra.mxu0 0.0
    %1470 = vmatprep.subr.mxu0 0.0
    %1471 = vmatpush1.msra.mxu0 0.0
    %1472 = vmatprep.subr.mxu0 0.0
    %1473 = vmatpush1.msra.mxu0 0.0
    %1474 = vmatprep.subr.mxu0 0.0
    %1475 = vmatpush1.msra.mxu0 0.0
    %1476 = vmatprep.subr.mxu0 0.0
    %1477 = vmatpush1.msra.mxu0 0.0
    %1478 = vmatprep.mubr.f32.mxu0 0.0
    %1479 = vmatmul.mubr.f32.gmra.mrb[0].mxu0 %v1094
    %v1480 = vpop.f32.mrb[0].mxu0
    %v1481 = vadd.f32 0.0, %v1480
    %v1482 = vpop.f32.mrb[0].mxu0
    %v1483 = vadd.f32 0.0, %v1482
    %1484 = vdwg.mxu0
    %1485 = vmatprep.subr.mxu0 %v247
    %1486 = vmatpush1.msra.mxu0 %v246
    %1487 = vmatprep.subr.mxu0 %v251
    %1488 = vmatpush1.msra.mxu0 %v250
    %1489 = vmatprep.subr.mxu0 %v255
    %1490 = vmatpush1.msra.mxu0 %v254
    %1491 = vmatprep.subr.mxu0 %v259
    %1492 = vmatpush1.msra.mxu0 %v258
    %1493 = vmatprep.subr.mxu0 %v263
    %1494 = vmatpush1.msra.mxu0 %v262
    %1495 = vmatprep.subr.mxu0 %v267
    %1496 = vmatpush1.msra.mxu0 %v266
    %1497 = vmatprep.subr.mxu0 %v271
    %1498 = vmatpush1.msra.mxu0 %v270
    %1499 = vmatprep.subr.mxu0 %v275
    %1500 = vmatpush1.msra.mxu0 %v274
    %1501 = vmatprep.subr.mxu0 %v279
    %1502 = vmatpush1.msra.mxu0 %v278
    %1503 = vmatprep.subr.mxu0 %v283
    %1504 = vmatpush1.msra.mxu0 %v282
    %1505 = vmatprep.subr.mxu0 %v287
    %1506 = vmatpush1.msra.mxu0 %v286
    %1507 = vmatprep.subr.mxu0 %v291
    %1508 = vmatpush1.msra.mxu0 %v290
    %1509 = vmatprep.subr.mxu0 %v295
    %1510 = vmatpush1.msra.mxu0 %v294
    %1511 = vmatprep.subr.mxu0 %v299
    %1512 = vmatpush1.msra.mxu0 %v298
    %1513 = vmatprep.subr.mxu0 %v303
    %1514 = vmatpush1.msra.mxu0 %v302
    %1515 = vmatprep.subr.mxu0 %v307
    %1516 = vmatpush1.msra.mxu0 %v306
    %1517 = vmatprep.subr.mxu0 0.0
    %1518 = vmatpush1.msra.mxu0 0.0
    %1519 = vmatprep.subr.mxu0 0.0
    %1520 = vmatpush1.msra.mxu0 0.0
    %1521 = vmatprep.subr.mxu0 0.0
    %1522 = vmatpush1.msra.mxu0 0.0
    %1523 = vmatprep.subr.mxu0 0.0
    %1524 = vmatpush1.msra.mxu0 0.0
    %1525 = vmatprep.subr.mxu0 0.0
    %1526 = vmatpush1.msra.mxu0 0.0
    %1527 = vmatprep.subr.mxu0 0.0
    %1528 = vmatpush1.msra.mxu0 0.0
    %1529 = vmatprep.subr.mxu0 0.0
    %1530 = vmatpush1.msra.mxu0 0.0
    %1531 = vmatprep.subr.mxu0 0.0
    %1532 = vmatpush1.msra.mxu0 0.0
    %1533 = vmatprep.subr.mxu0 0.0
    %1534 = vmatpush1.msra.mxu0 0.0
    %1535 = vmatprep.subr.mxu0 0.0
    %1536 = vmatpush1.msra.mxu0 0.0
    %1537 = vmatprep.subr.mxu0 0.0
    %1538 = vmatpush1.msra.mxu0 0.0
    %1539 = vmatprep.subr.mxu0 0.0
    %1540 = vmatpush1.msra.mxu0 0.0
    %1541 = vmatprep.subr.mxu0 0.0
    %1542 = vmatpush1.msra.mxu0 0.0
    %1543 = vmatprep.subr.mxu0 0.0
    %1544 = vmatpush1.msra.mxu0 0.0
    %1545 = vmatprep.subr.mxu0 0.0
    %1546 = vmatpush1.msra.mxu0 0.0
    %1547 = vmatprep.subr.mxu0 0.0
    %1548 = vmatpush1.msra.mxu0 0.0
    %1549 = vmatprep.mubr.f32.mxu0 0.0
    %1550 = vmatmul.mubr.f32.gmra.mrb[0].mxu0 %v1094
    %v1551 = vpop.f32.mrb[0].mxu0
    %v1552 = vadd.f32 0.0, %v1551
    %v1553 = vpop.f32.mrb[0].mxu0
    %v1554 = vadd.f32 0.0, %v1553
    %1555 = vdwg.mxu0
    %v1556 = vadd.f32 %v1410, %v1481
    %v1557 = vadd.f32 %v1411, %v1483
    %v1558 = vadd.f32 %v1412, %v1552
    %v1559 = vadd.f32 %v1413, %v1554
    %v1560 = vxor.u32 %v1556, 2147483648
    %v1561 = vxor.u32 %v1557, 2147483648
    %v1562 = vxor.u32 %v1558, 2147483648
    %v1563 = vmul.f32 %v1560, 1.442695
    %v1564 = vpow.pop %v1563
    %v1565 = vmul.f32 %v1561, 1.442695
    %v1566 = vpow.pop %v1565
    %v1567 = vmul.f32 %v1562, 1.442695
    %v1568 = vpow.pop %v1567
    %v1569 = vadd.f32 %v1564, 1.0
    %v1570 = vadd.f32 %v1566, 1.0
    %v1571 = vadd.f32 %v1568, 1.0
    %v1572 = vrcp.pop %v1569
    %v1573 = vmul.f32 1.0, %v1572
    %v1574 = vrcp.pop %v1570
    %v1575 = vmul.f32 1.0, %v1574
    %v1576 = vrcp.pop %v1571
    %v1577 = vmul.f32 1.0, %v1576
    %v1578 = vtanh.pop %v1559
    %v1579 = vmul.f32 %v1575, %v1092
    %v1580 = vmul.f32 %v1573, %v1578
    %v1581 = vadd.f32 %v1579, %v1580
    %v1582 = vtanh.pop %v1581
    %v1583 = vmul.f32 %v1577, %v1582
    %1584 = vmatprep.subr.mxu0 %v543
    %1585 = vmatpush1.msra.mxu0 %v542
    %1586 = vmatprep.subr.mxu0 %v547
    %1587 = vmatpush1.msra.mxu0 %v546
    %1588 = vmatprep.subr.mxu0 %v551
    %1589 = vmatpush1.msra.mxu0 %v550
    %1590 = vmatprep.subr.mxu0 %v555
    %1591 = vmatpush1.msra.mxu0 %v554
    %1592 = vmatprep.subr.mxu0 %v559
    %1593 = vmatpush1.msra.mxu0 %v558
    %1594 = vmatprep.subr.mxu0 %v563
    %1595 = vmatpush1.msra.mxu0 %v562
    %1596 = vmatprep.subr.mxu0 %v567
    %1597 = vmatpush1.msra.mxu0 %v566
    %1598 = vmatprep.subr.mxu0 %v571
    %1599 = vmatpush1.msra.mxu0 %v570
    %1600 = vmatprep.subr.mxu0 %v575
    %1601 = vmatpush1.msra.mxu0 %v574
    %1602 = vmatprep.subr.mxu0 %v579
    %1603 = vmatpush1.msra.mxu0 %v578
    %1604 = vmatprep.subr.mxu0 %v583
    %1605 = vmatpush1.msra.mxu0 %v582
    %1606 = vmatprep.subr.mxu0 %v587
    %1607 = vmatpush1.msra.mxu0 %v586
    %1608 = vmatprep.subr.mxu0 %v591
    %1609 = vmatpush1.msra.mxu0 %v590
    %1610 = vmatprep.subr.mxu0 %v595
    %1611 = vmatpush1.msra.mxu0 %v594
    %1612 = vmatprep.subr.mxu0 %v599
    %1613 = vmatpush1.msra.mxu0 %v598
    %1614 = vmatprep.subr.mxu0 %v603
    %1615 = vmatpush1.msra.mxu0 %v602
    %1616 = vmatprep.subr.mxu0 0.0
    %1617 = vmatpush1.msra.mxu0 0.0
    %1618 = vmatprep.subr.mxu0 0.0
    %1619 = vmatpush1.msra.mxu0 0.0
    %1620 = vmatprep.subr.mxu0 0.0
    %1621 = vmatpush1.msra.mxu0 0.0
    %1622 = vmatprep.subr.mxu0 0.0
    %1623 = vmatpush1.msra.mxu0 0.0
    %1624 = vmatprep.subr.mxu0 0.0
    %1625 = vmatpush1.msra.mxu0 0.0
    %1626 = vmatprep.subr.mxu0 0.0
    %1627 = vmatpush1.msra.mxu0 0.0
    %1628 = vmatprep.subr.mxu0 0.0
    %1629 = vmatpush1.msra.mxu0 0.0
    %1630 = vmatprep.subr.mxu0 0.0
    %1631 = vmatpush1.msra.mxu0 0.0
    %1632 = vmatprep.subr.mxu0 0.0
    %1633 = vmatpush1.msra.mxu0 0.0
    %1634 = vmatprep.subr.mxu0 0.0
    %1635 = vmatpush1.msra.mxu0 0.0
    %1636 = vmatprep.subr.mxu0 0.0
    %1637 = vmatpush1.msra.mxu0 0.0
    %1638 = vmatprep.subr.mxu0 0.0
    %1639 = vmatpush1.msra.mxu0 0.0
    %1640 = vmatprep.subr.mxu0 0.0
    %1641 = vmatpush1.msra.mxu0 0.0
    %1642 = vmatprep.subr.mxu0 0.0
    %1643 = vmatpush1.msra.mxu0 0.0
    %1644 = vmatprep.subr.mxu0 0.0
    %1645 = vmatpush1.msra.mxu0 0.0
    %1646 = vmatprep.subr.mxu0 0.0
    %1647 = vmatpush1.msra.mxu0 0.0
    %1648 = vmatprep.mubr.f32.mxu0 0.0
    %1649 = vmatmul.mubr.f32.gmra.mrb[0].mxu0 %v1406
    %v1650 = vpop.f32.mrb[0].mxu0
    %v1651 = vadd.f32 0.0, %v1650
    %v1652 = vpop.f32.mrb[0].mxu0
    %v1653 = vadd.f32 0.0, %v1652
    %1654 = vdwg.mxu0
    %1655 = vmatprep.subr.mxu0 %v545
    %1656 = vmatpush1.msra.mxu0 %v544
    %1657 = vmatprep.subr.mxu0 %v549
    %1658 = vmatpush1.msra.mxu0 %v548
    %1659 = vmatprep.subr.mxu0 %v553
    %1660 = vmatpush1.msra.mxu0 %v552
    %1661 = vmatprep.subr.mxu0 %v557
    %1662 = vmatpush1.msra.mxu0 %v556
    %1663 = vmatprep.subr.mxu0 %v561
    %1664 = vmatpush1.msra.mxu0 %v560
    %1665 = vmatprep.subr.mxu0 %v565
    %1666 = vmatpush1.msra.mxu0 %v564
    %1667 = vmatprep.subr.mxu0 %v569
    %1668 = vmatpush1.msra.mxu0 %v568
    %1669 = vmatprep.subr.mxu0 %v573
    %1670 = vmatpush1.msra.mxu0 %v572
    %1671 = vmatprep.subr.mxu0 %v577
    %1672 = vmatpush1.msra.mxu0 %v576
    %1673 = vmatprep.subr.mxu0 %v581
    %1674 = vmatpush1.msra.mxu0 %v580
    %1675 = vmatprep.subr.mxu0 %v585
    %1676 = vmatpush1.msra.mxu0 %v584
    %1677 = vmatprep.subr.mxu0 %v589
    %1678 = vmatpush1.msra.mxu0 %v588
    %1679 = vmatprep.subr.mxu0 %v593
    %1680 = vmatpush1.msra.mxu0 %v592
    %1681 = vmatprep.subr.mxu0 %v597
    %1682 = vmatpush1.msra.mxu0 %v596
    %1683 = vmatprep.subr.mxu0 %v601
    %1684 = vmatpush1.msra.mxu0 %v600
    %1685 = vmatprep.subr.mxu0 %v605
    %1686 = vmatpush1.msra.mxu0 %v604
    %1687 = vmatprep.subr.mxu0 0.0
    %1688 = vmatpush1.msra.mxu0 0.0
    %1689 = vmatprep.subr.mxu0 0.0
    %1690 = vmatpush1.msra.mxu0 0.0
    %1691 = vmatprep.subr.mxu0 0.0
    %1692 = vmatpush1.msra.mxu0 0.0
    %1693 = vmatprep.subr.mxu0 0.0
    %1694 = vmatpush1.msra.mxu0 0.0
    %1695 = vmatprep.subr.mxu0 0.0
    %1696 = vmatpush1.msra.mxu0 0.0
    %1697 = vmatprep.subr.mxu0 0.0
    %1698 = vmatpush1.msra.mxu0 0.0
    %1699 = vmatprep.subr.mxu0 0.0
    %1700 = vmatpush1.msra.mxu0 0.0
    %1701 = vmatprep.subr.mxu0 0.0
    %1702 = vmatpush1.msra.mxu0 0.0
    %1703 = vmatprep.subr.mxu0 0.0
    %1704 = vmatpush1.msra.mxu0 0.0
    %1705 = vmatprep.subr.mxu0 0.0
    %1706 = vmatpush1.msra.mxu0 0.0
    %1707 = vmatprep.subr.mxu0 0.0
    %1708 = vmatpush1.msra.mxu0 0.0
    %1709 = vmatprep.subr.mxu0 0.0
    %1710 = vmatpush1.msra.mxu0 0.0
    %1711 = vmatprep.subr.mxu0 0.0
    %1712 = vmatpush1.msra.mxu0 0.0
    %1713 = vmatprep.subr.mxu0 0.0
    %1714 = vmatpush1.msra.mxu0 0.0
    %1715 = vmatprep.subr.mxu0 0.0
    %1716 = vmatpush1.msra.mxu0 0.0
    %1717 = vmatprep.subr.mxu0 0.0
    %1718 = vmatpush1.msra.mxu0 0.0
    %1719 = vmatprep.mubr.f32.mxu0 0.0
    %1720 = vmatmul.mubr.f32.gmra.mrb[0].mxu0 %v1406
    %v1721 = vpop.f32.mrb[0].mxu0
    %v1722 = vadd.f32 0.0, %v1721
    %v1723 = vpop.f32.mrb[0].mxu0
    %v1724 = vadd.f32 0.0, %v1723
    %1725 = vdwg.mxu0
    %1726 = vmatprep.subr.mxu0 %v479
    %1727 = vmatpush1.msra.mxu0 %v478
    %1728 = vmatprep.subr.mxu0 %v483
    %1729 = vmatpush1.msra.mxu0 %v482
    %1730 = vmatprep.subr.mxu0 %v487
    %1731 = vmatpush1.msra.mxu0 %v486
    %1732 = vmatprep.subr.mxu0 %v491
    %1733 = vmatpush1.msra.mxu0 %v490
    %1734 = vmatprep.subr.mxu0 %v495
    %1735 = vmatpush1.msra.mxu0 %v494
    %1736 = vmatprep.subr.mxu0 %v499
    %1737 = vmatpush1.msra.mxu0 %v498
    %1738 = vmatprep.subr.mxu0 %v503
    %1739 = vmatpush1.msra.mxu0 %v502
    %1740 = vmatprep.subr.mxu0 %v507
    %1741 = vmatpush1.msra.mxu0 %v506
    %1742 = vmatprep.subr.mxu0 %v511
    %1743 = vmatpush1.msra.mxu0 %v510
    %1744 = vmatprep.subr.mxu0 %v515
    %1745 = vmatpush1.msra.mxu0 %v514
    %1746 = vmatprep.subr.mxu0 %v519
    %1747 = vmatpush1.msra.mxu0 %v518
    %1748 = vmatprep.subr.mxu0 %v523
    %1749 = vmatpush1.msra.mxu0 %v522
    %1750 = vmatprep.subr.mxu0 %v527
    %1751 = vmatpush1.msra.mxu0 %v526
    %1752 = vmatprep.subr.mxu0 %v531
    %1753 = vmatpush1.msra.mxu0 %v530
    %1754 = vmatprep.subr.mxu0 %v535
    %1755 = vmatpush1.msra.mxu0 %v534
    %1756 = vmatprep.subr.mxu0 %v539
    %1757 = vmatpush1.msra.mxu0 %v538
    %1758 = vmatprep.subr.mxu0 0.0
    %1759 = vmatpush1.msra.mxu0 0.0
    %1760 = vmatprep.subr.mxu0 0.0
    %1761 = vmatpush1.msra.mxu0 0.0
    %1762 = vmatprep.subr.mxu0 0.0
    %1763 = vmatpush1.msra.mxu0 0.0
    %1764 = vmatprep.subr.mxu0 0.0
    %1765 = vmatpush1.msra.mxu0 0.0
    %1766 = vmatprep.subr.mxu0 0.0
    %1767 = vmatpush1.msra.mxu0 0.0
    %1768 = vmatprep.subr.mxu0 0.0
    %1769 = vmatpush1.msra.mxu0 0.0
    %1770 = vmatprep.subr.mxu0 0.0
    %1771 = vmatpush1.msra.mxu0 0.0
    %1772 = vmatprep.subr.mxu0 0.0
    %1773 = vmatpush1.msra.mxu0 0.0
    %1774 = vmatprep.subr.mxu0 0.0
    %1775 = vmatpush1.msra.mxu0 0.0
    %1776 = vmatprep.subr.mxu0 0.0
    %1777 = vmatpush1.msra.mxu0 0.0
    %1778 = vmatprep.subr.mxu0 0.0
    %1779 = vmatpush1.msra.mxu0 0.0
    %1780 = vmatprep.subr.mxu0 0.0
    %1781 = vmatpush1.msra.mxu0 0.0
    %1782 = vmatprep.subr.mxu0 0.0
    %1783 = vmatpush1.msra.mxu0 0.0
    %1784 = vmatprep.subr.mxu0 0.0
    %1785 = vmatpush1.msra.mxu0 0.0
    %1786 = vmatprep.subr.mxu0 0.0
    %1787 = vmatpush1.msra.mxu0 0.0
    %1788 = vmatprep.subr.mxu0 0.0
    %1789 = vmatpush1.msra.mxu0 0.0
    %1790 = vmatprep.mubr.f32.mxu0 0.0
    %1791 = vmatmul.mubr.f32.gmra.mrb[0].mxu0 %v1583
    %v1792 = vpop.f32.mrb[0].mxu0
    %v1793 = vadd.f32 %v1651, %v1792
    %v1794 = vpop.f32.mrb[0].mxu0
    %v1795 = vadd.f32 %v1653, %v1794
    %1796 = vdwg.mxu0
    %1797 = vmatprep.subr.mxu0 %v481
    %1798 = vmatpush1.msra.mxu0 %v480
    %1799 = vmatprep.subr.mxu0 %v485
    %1800 = vmatpush1.msra.mxu0 %v484
    %1801 = vmatprep.subr.mxu0 %v489
    %1802 = vmatpush1.msra.mxu0 %v488
    %1803 = vmatprep.subr.mxu0 %v493
    %1804 = vmatpush1.msra.mxu0 %v492
    %1805 = vmatprep.subr.mxu0 %v497
    %1806 = vmatpush1.msra.mxu0 %v496
    %1807 = vmatprep.subr.mxu0 %v501
    %1808 = vmatpush1.msra.mxu0 %v500
    %1809 = vmatprep.subr.mxu0 %v505
    %1810 = vmatpush1.msra.mxu0 %v504
    %1811 = vmatprep.subr.mxu0 %v509
    %1812 = vmatpush1.msra.mxu0 %v508
    %1813 = vmatprep.subr.mxu0 %v513
    %1814 = vmatpush1.msra.mxu0 %v512
    %1815 = vmatprep.subr.mxu0 %v517
    %1816 = vmatpush1.msra.mxu0 %v516
    %1817 = vmatprep.subr.mxu0 %v521
    %1818 = vmatpush1.msra.mxu0 %v520
    %1819 = vmatprep.subr.mxu0 %v525
    %1820 = vmatpush1.msra.mxu0 %v524
    %1821 = vmatprep.subr.mxu0 %v529
    %1822 = vmatpush1.msra.mxu0 %v528
    %1823 = vmatprep.subr.mxu0 %v533
    %1824 = vmatpush1.msra.mxu0 %v532
    %1825 = vmatprep.subr.mxu0 %v537
    %1826 = vmatpush1.msra.mxu0 %v536
    %1827 = vmatprep.subr.mxu0 %v541
    %1828 = vmatpush1.msra.mxu0 %v540
    %1829 = vmatprep.subr.mxu0 0.0
    %1830 = vmatpush1.msra.mxu0 0.0
    %1831 = vmatprep.subr.mxu0 0.0
    %1832 = vmatpush1.msra.mxu0 0.0
    %1833 = vmatprep.subr.mxu0 0.0
    %1834 = vmatpush1.msra.mxu0 0.0
    %1835 = vmatprep.subr.mxu0 0.0
    %1836 = vmatpush1.msra.mxu0 0.0
    %1837 = vmatprep.subr.mxu0 0.0
    %1838 = vmatpush1.msra.mxu0 0.0
    %1839 = vmatprep.subr.mxu0 0.0
    %1840 = vmatpush1.msra.mxu0 0.0
    %1841 = vmatprep.subr.mxu0 0.0
    %1842 = vmatpush1.msra.mxu0 0.0
    %1843 = vmatprep.subr.mxu0 0.0
    %1844 = vmatpush1.msra.mxu0 0.0
    %1845 = vmatprep.subr.mxu0 0.0
    %1846 = vmatpush1.msra.mxu0 0.0
    %1847 = vmatprep.subr.mxu0 0.0
    %1848 = vmatpush1.msra.mxu0 0.0
    %1849 = vmatprep.subr.mxu0 0.0
    %1850 = vmatpush1.msra.mxu0 0.0
    %1851 = vmatprep.subr.mxu0 0.0
    %1852 = vmatpush1.msra.mxu0 0.0
    %1853 = vmatprep.subr.mxu0 0.0
    %1854 = vmatpush1.msra.mxu0 0.0
    %1855 = vmatprep.subr.mxu0 0.0
    %1856 = vmatpush1.msra.mxu0 0.0
    %1857 = vmatprep.subr.mxu0 0.0
    %1858 = vmatpush1.msra.mxu0 0.0
    %1859 = vmatprep.subr.mxu0 0.0
    %1860 = vmatpush1.msra.mxu0 0.0
    %1861 = vmatprep.mubr.f32.mxu0 0.0
    %1862 = vmatmul.mubr.f32.gmra.mrb[0].mxu0 %v1583
    %v1863 = vpop.f32.mrb[0].mxu0
    %v1864 = vadd.f32 %v1722, %v1863
    %v1865 = vpop.f32.mrb[0].mxu0
    %v1866 = vadd.f32 %v1724, %v1865
    %1867 = vdwg.mxu0
    %v1868 = vadd.f32 %v1793, %v220
    %v1869 = vadd.f32 %v1795, %v224
    %v1870 = vadd.f32 %v1864, %v228
    %v1871 = vadd.f32 %v1866, %v232
    %v1872 = vxor.u32 %v1868, 2147483648
    %v1873 = vxor.u32 %v1869, 2147483648
    %v1874 = vxor.u32 %v1870, 2147483648
    %v1875 = vmul.f32 %v1872, 1.442695
    %v1876 = vpow.pop %v1875
    %v1877 = vmul.f32 %v1873, 1.442695
    %v1878 = vpow.pop %v1877
    %v1879 = vmul.f32 %v1874, 1.442695
    %v1880 = vpow.pop %v1879
    %v1881 = vadd.f32 %v1876, 1.0
    %v1882 = vadd.f32 %v1878, 1.0
    %v1883 = vadd.f32 %v1880, 1.0
    %v1884 = vrcp.pop %v1881
    %v1885 = vmul.f32 1.0, %v1884
    %v1886 = vrcp.pop %v1882
    %v1887 = vmul.f32 1.0, %v1886
    %v1888 = vrcp.pop %v1883
    %v1889 = vmul.f32 1.0, %v1888
    %v1890 = vtanh.pop %v1871
    %v1891 = vmul.f32 %v1887, %v1404
    %v1892 = vmul.f32 %v1885, %v1890
    %v1893 = vadd.f32 %v1891, %v1892
    %v1894 = vtanh.pop %v1893
    %v1895 = vmul.f32 %v1889, %v1894
    %s1896 = smul.u32 3, 4
    %s1897 = smul.addr %s1896, 8
    %s1898 = scalar_lea.vmem [#allocation2], %s1897
    %v1899 = vld [vmem:[%s1898] sm:$0xff]
    %v1900 = vld [vmem:[%s1898 + $0x8] sm:$0xff]
    %v1901 = vld [vmem:[%s1898 + $0x10] sm:$0xff]
    %v1902 = vld [vmem:[%s1898 + $0x18] sm:$0xff]
    %1903 = vmatprep.subr.mxu0 %v245
    %1904 = vmatpush1.msra.mxu0 %v244
    %1905 = vmatprep.subr.mxu0 %v249
    %1906 = vmatpush1.msra.mxu0 %v248
    %1907 = vmatprep.subr.mxu0 %v253
    %1908 = vmatpush1.msra.mxu0 %v252
    %1909 = vmatprep.subr.mxu0 %v257
    %1910 = vmatpush1.msra.mxu0 %v256
    %1911 = vmatprep.subr.mxu0 %v261
    %1912 = vmatpush1.msra.mxu0 %v260
    %1913 = vmatprep.subr.mxu0 %v265
    %1914 = vmatpush1.msra.mxu0 %v264
    %1915 = vmatprep.subr.mxu0 %v269
    %1916 = vmatpush1.msra.mxu0 %v268
    %1917 = vmatprep.subr.mxu0 %v273
    %1918 = vmatpush1.msra.mxu0 %v272
    %1919 = vmatprep.subr.mxu0 %v277
    %1920 = vmatpush1.msra.mxu0 %v276
    %1921 = vmatprep.subr.mxu0 %v281
    %1922 = vmatpush1.msra.mxu0 %v280
    %1923 = vmatprep.subr.mxu0 %v285
    %1924 = vmatpush1.msra.mxu0 %v284
    %1925 = vmatprep.subr.mxu0 %v289
    %1926 = vmatpush1.msra.mxu0 %v288
    %1927 = vmatprep.subr.mxu0 %v293
    %1928 = vmatpush1.msra.mxu0 %v292
    %1929 = vmatprep.subr.mxu0 %v297
    %1930 = vmatpush1.msra.mxu0 %v296
    %1931 = vmatprep.subr.mxu0 %v301
    %1932 = vmatpush1.msra.mxu0 %v300
    %1933 = vmatprep.subr.mxu0 %v305
    %1934 = vmatpush1.msra.mxu0 %v304
    %1935 = vmatprep.subr.mxu0 0.0
    %1936 = vmatpush1.msra.mxu0 0.0
    %1937 = vmatprep.subr.mxu0 0.0
    %1938 = vmatpush1.msra.mxu0 0.0
    %1939 = vmatprep.subr.mxu0 0.0
    %1940 = vmatpush1.msra.mxu0 0.0
    %1941 = vmatprep.subr.mxu0 0.0
    %1942 = vmatpush1.msra.mxu0 0.0
    %1943 = vmatprep.subr.mxu0 0.0
    %1944 = vmatpush1.msra.mxu0 0.0
    %1945 = vmatprep.subr.mxu0 0.0
    %1946 = vmatpush1.msra.mxu0 0.0
    %1947 = vmatprep.subr.mxu0 0.0
    %1948 = vmatpush1.msra.mxu0 0.0
    %1949 = vmatprep.subr.mxu0 0.0
    %1950 = vmatpush1.msra.mxu0 0.0
    %1951 = vmatprep.subr.mxu0 0.0
    %1952 = vmatpush1.msra.mxu0 0.0
    %1953 = vmatprep.subr.mxu0 0.0
    %1954 = vmatpush1.msra.mxu0 0.0
    %1955 = vmatprep.subr.mxu0 0.0
    %1956 = vmatpush1.msra.mxu0 0.0
    %1957 = vmatprep.subr.mxu0 0.0
    %1958 = vmatpush1.msra.mxu0 0.0
    %1959 = vmatprep.subr.mxu0 0.0
    %1960 = vmatpush1.msra.mxu0 0.0
    %1961 = vmatprep.subr.mxu0 0.0
    %1962 = vmatpush1.msra.mxu0 0.0
    %1963 = vmatprep.subr.mxu0 0.0
    %1964 = vmatpush1.msra.mxu0 0.0
    %1965 = vmatprep.subr.mxu0 0.0
    %1966 = vmatpush1.msra.mxu0 0.0
    %1967 = vmatprep.mubr.f32.mxu0 0.0
    %1968 = vmatmul.mubr.f32.gmra.mrb[0].mxu0 %v1583
    %v1969 = vpop.f32.mrb[0].mxu0
    %v1970 = vadd.f32 0.0, %v1969
    %v1971 = vpop.f32.mrb[0].mxu0
    %v1972 = vadd.f32 0.0, %v1971
    %1973 = vdwg.mxu0
    %1974 = vmatprep.subr.mxu0 %v247
    %1975 = vmatpush1.msra.mxu0 %v246
    %1976 = vmatprep.subr.mxu0 %v251
    %1977 = vmatpush1.msra.mxu0 %v250
    %1978 = vmatprep.subr.mxu0 %v255
    %1979 = vmatpush1.msra.mxu0 %v254
    %1980 = vmatprep.subr.mxu0 %v259
    %1981 = vmatpush1.msra.mxu0 %v258
    %1982 = vmatprep.subr.mxu0 %v263
    %1983 = vmatpush1.msra.mxu0 %v262
    %1984 = vmatprep.subr.mxu0 %v267
    %1985 = vmatpush1.msra.mxu0 %v266
    %1986 = vmatprep.subr.mxu0 %v271
    %1987 = vmatpush1.msra.mxu0 %v270
    %1988 = vmatprep.subr.mxu0 %v275
    %1989 = vmatpush1.msra.mxu0 %v274
    %1990 = vmatprep.subr.mxu0 %v279
    %1991 = vmatpush1.msra.mxu0 %v278
    %1992 = vmatprep.subr.mxu0 %v283
    %1993 = vmatpush1.msra.mxu0 %v282
    %1994 = vmatprep.subr.mxu0 %v287
    %1995 = vmatpush1.msra.mxu0 %v286
    %1996 = vmatprep.subr.mxu0 %v291
    %1997 = vmatpush1.msra.mxu0 %v290
    %1998 = vmatprep.subr.mxu0 %v295
    %1999 = vmatpush1.msra.mxu0 %v294
    %2000 = vmatprep.subr.mxu0 %v299
    %2001 = vmatpush1.msra.mxu0 %v298
    %2002 = vmatprep.subr.mxu0 %v303
    %2003 = vmatpush1.msra.mxu0 %v302
    %2004 = vmatprep.subr.mxu0 %v307
    %2005 = vmatpush1.msra.mxu0 %v306
    %2006 = vmatprep.subr.mxu0 0.0
    %2007 = vmatpush1.msra.mxu0 0.0
    %2008 = vmatprep.subr.mxu0 0.0
    %2009 = vmatpush1.msra.mxu0 0.0
    %2010 = vmatprep.subr.mxu0 0.0
    %2011 = vmatpush1.msra.mxu0 0.0
    %2012 = vmatprep.subr.mxu0 0.0
    %2013 = vmatpush1.msra.mxu0 0.0
    %2014 = vmatprep.subr.mxu0 0.0
    %2015 = vmatpush1.msra.mxu0 0.0
    %2016 = vmatprep.subr.mxu0 0.0
    %2017 = vmatpush1.msra.mxu0 0.0
    %2018 = vmatprep.subr.mxu0 0.0
    %2019 = vmatpush1.msra.mxu0 0.0
    %2020 = vmatprep.subr.mxu0 0.0
    %2021 = vmatpush1.msra.mxu0 0.0
    %2022 = vmatprep.subr.mxu0 0.0
    %2023 = vmatpush1.msra.mxu0 0.0
    %2024 = vmatprep.subr.mxu0 0.0
    %2025 = vmatpush1.msra.mxu0 0.0
    %2026 = vmatprep.subr.mxu0 0.0
    %2027 = vmatpush1.msra.mxu0 0.0
    %2028 = vmatprep.subr.mxu0 0.0
    %2029 = vmatpush1.msra.mxu0 0.0
    %2030 = vmatprep.subr.mxu0 0.0
    %2031 = vmatpush1.msra.mxu0 0.0
    %2032 = vmatprep.subr.mxu0 0.0
    %2033 = vmatpush1.msra.mxu0 0.0
    %2034 = vmatprep.subr.mxu0 0.0
    %2035 = vmatpush1.msra.mxu0 0.0
    %2036 = vmatprep.subr.mxu0 0.0
    %2037 = vmatpush1.msra.mxu0 0.0
    %2038 = vmatprep.mubr.f32.mxu0 0.0
    %2039 = vmatmul.mubr.f32.gmra.mrb[0].mxu0 %v1583
    %v2040 = vpop.f32.mrb[0].mxu0
    %v2041 = vadd.f32 0.0, %v2040
    %v2042 = vpop.f32.mrb[0].mxu0
    %v2043 = vadd.f32 0.0, %v2042
    %2044 = vdwg.mxu0
    %v2045 = vadd.f32 %v1899, %v1970
    %v2046 = vadd.f32 %v1900, %v1972
    %v2047 = vadd.f32 %v1901, %v2041
    %v2048 = vadd.f32 %v1902, %v2043
    %v2049 = vxor.u32 %v2045, 2147483648
    %v2050 = vxor.u32 %v2046, 2147483648
    %v2051 = vxor.u32 %v2047, 2147483648
    %v2052 = vmul.f32 %v2049, 1.442695
    %v2053 = vpow.pop %v2052
    %v2054 = vmul.f32 %v2050, 1.442695
    %v2055 = vpow.pop %v2054
    %v2056 = vmul.f32 %v2051, 1.442695
    %v2057 = vpow.pop %v2056
    %v2058 = vadd.f32 %v2053, 1.0
    %v2059 = vadd.f32 %v2055, 1.0
    %v2060 = vadd.f32 %v2057, 1.0
    %v2061 = vrcp.pop %v2058
    %v2062 = vmul.f32 1.0, %v2061
    %v2063 = vrcp.pop %v2059
    %v2064 = vmul.f32 1.0, %v2063
    %v2065 = vrcp.pop %v2060
    %v2066 = vmul.f32 1.0, %v2065
    %v2067 = vtanh.pop %v2048
    %v2068 = vmul.f32 %v2064, %v1581
    %v2069 = vmul.f32 %v2062, %v2067
    %v2070 = vadd.f32 %v2068, %v2069
    %v2071 = vtanh.pop %v2070
    %v2072 = vmul.f32 %v2066, %v2071
    %2073 = vmatprep.subr.mxu0 %v543
    %2074 = vmatpush1.msra.mxu0 %v542
    %2075 = vmatprep.subr.mxu0 %v547
    %2076 = vmatpush1.msra.mxu0 %v546
    %2077 = vmatprep.subr.mxu0 %v551
    %2078 = vmatpush1.msra.mxu0 %v550
    %2079 = vmatprep.subr.mxu0 %v555
    %2080 = vmatpush1.msra.mxu0 %v554
    %2081 = vmatprep.subr.mxu0 %v559
    %2082 = vmatpush1.msra.mxu0 %v558
    %2083 = vmatprep.subr.mxu0 %v563
    %2084 = vmatpush1.msra.mxu0 %v562
    %2085 = vmatprep.subr.mxu0 %v567
    %2086 = vmatpush1.msra.mxu0 %v566
    %2087 = vmatprep.subr.mxu0 %v571
    %2088 = vmatpush1.msra.mxu0 %v570
    %2089 = vmatprep.subr.mxu0 %v575
    %2090 = vmatpush1.msra.mxu0 %v574
    %2091 = vmatprep.subr.mxu0 %v579
    %2092 = vmatpush1.msra.mxu0 %v578
    %2093 = vmatprep.subr.mxu0 %v583
    %2094 = vmatpush1.msra.mxu0 %v582
    %2095 = vmatprep.subr.mxu0 %v587
    %2096 = vmatpush1.msra.mxu0 %v586
    %2097 = vmatprep.subr.mxu0 %v591
    %2098 = vmatpush1.msra.mxu0 %v590
    %2099 = vmatprep.subr.mxu0 %v595
    %2100 = vmatpush1.msra.mxu0 %v594
    %2101 = vmatprep.subr.mxu0 %v599
    %2102 = vmatpush1.msra.mxu0 %v598
    %2103 = vmatprep.subr.mxu0 %v603
    %2104 = vmatpush1.msra.mxu0 %v602
    %2105 = vmatprep.subr.mxu0 0.0
    %2106 = vmatpush1.msra.mxu0 0.0
    %2107 = vmatprep.subr.mxu0 0.0
    %2108 = vmatpush1.msra.mxu0 0.0
    %2109 = vmatprep.subr.mxu0 0.0
    %2110 = vmatpush1.msra.mxu0 0.0
    %2111 = vmatprep.subr.mxu0 0.0
    %2112 = vmatpush1.msra.mxu0 0.0
    %2113 = vmatprep.subr.mxu0 0.0
    %2114 = vmatpush1.msra.mxu0 0.0
    %2115 = vmatprep.subr.mxu0 0.0
    %2116 = vmatpush1.msra.mxu0 0.0
    %2117 = vmatprep.subr.mxu0 0.0
    %2118 = vmatpush1.msra.mxu0 0.0
    %2119 = vmatprep.subr.mxu0 0.0
    %2120 = vmatpush1.msra.mxu0 0.0
    %2121 = vmatprep.subr.mxu0 0.0
    %2122 = vmatpush1.msra.mxu0 0.0
    %2123 = vmatprep.subr.mxu0 0.0
    %2124 = vmatpush1.msra.mxu0 0.0
    %2125 = vmatprep.subr.mxu0 0.0
    %2126 = vmatpush1.msra.mxu0 0.0
    %2127 = vmatprep.subr.mxu0 0.0
    %2128 = vmatpush1.msra.mxu0 0.0
    %2129 = vmatprep.subr.mxu0 0.0
    %2130 = vmatpush1.msra.mxu0 0.0
    %2131 = vmatprep.subr.mxu0 0.0
    %2132 = vmatpush1.msra.mxu0 0.0
    %2133 = vmatprep.subr.mxu0 0.0
    %2134 = vmatpush1.msra.mxu0 0.0
    %2135 = vmatprep.subr.mxu0 0.0
    %2136 = vmatpush1.msra.mxu0 0.0
    %2137 = vmatprep.mubr.f32.mxu0 0.0
    %2138 = vmatmul.mubr.f32.gmra.mrb[0].mxu0 %v1895
    %v2139 = vpop.f32.mrb[0].mxu0
    %v2140 = vadd.f32 0.0, %v2139
    %v2141 = vpop.f32.mrb[0].mxu0
    %v2142 = vadd.f32 0.0, %v2141
    %2143 = vdwg.mxu0
    %2144 = vmatprep.subr.mxu0 %v545
    %2145 = vmatpush1.msra.mxu0 %v544
    %2146 = vmatprep.subr.mxu0 %v549
    %2147 = vmatpush1.msra.mxu0 %v548
    %2148 = vmatprep.subr.mxu0 %v553
    %2149 = vmatpush1.msra.mxu0 %v552
    %2150 = vmatprep.subr.mxu0 %v557
    %2151 = vmatpush1.msra.mxu0 %v556
    %2152 = vmatprep.subr.mxu0 %v561
    %2153 = vmatpush1.msra.mxu0 %v560
    %2154 = vmatprep.subr.mxu0 %v565
    %2155 = vmatpush1.msra.mxu0 %v564
    %2156 = vmatprep.subr.mxu0 %v569
    %2157 = vmatpush1.msra.mxu0 %v568
    %2158 = vmatprep.subr.mxu0 %v573
    %2159 = vmatpush1.msra.mxu0 %v572
    %2160 = vmatprep.subr.mxu0 %v577
    %2161 = vmatpush1.msra.mxu0 %v576
    %2162 = vmatprep.subr.mxu0 %v581
    %2163 = vmatpush1.msra.mxu0 %v580
    %2164 = vmatprep.subr.mxu0 %v585
    %2165 = vmatpush1.msra.mxu0 %v584
    %2166 = vmatprep.subr.mxu0 %v589
    %2167 = vmatpush1.msra.mxu0 %v588
    %2168 = vmatprep.subr.mxu0 %v593
    %2169 = vmatpush1.msra.mxu0 %v592
    %2170 = vmatprep.subr.mxu0 %v597
    %2171 = vmatpush1.msra.mxu0 %v596
    %2172 = vmatprep.subr.mxu0 %v601
    %2173 = vmatpush1.msra.mxu0 %v600
    %2174 = vmatprep.subr.mxu0 %v605
    %2175 = vmatpush1.msra.mxu0 %v604
    %2176 = vmatprep.subr.mxu0 0.0
    %2177 = vmatpush1.msra.mxu0 0.0
    %2178 = vmatprep.subr.mxu0 0.0
    %2179 = vmatpush1.msra.mxu0 0.0
    %2180 = vmatprep.subr.mxu0 0.0
    %2181 = vmatpush1.msra.mxu0 0.0
    %2182 = vmatprep.subr.mxu0 0.0
    %2183 = vmatpush1.msra.mxu0 0.0
    %2184 = vmatprep.subr.mxu0 0.0
    %2185 = vmatpush1.msra.mxu0 0.0
    %2186 = vmatprep.subr.mxu0 0.0
    %2187 = vmatpush1.msra.mxu0 0.0
    %2188 = vmatprep.subr.mxu0 0.0
    %2189 = vmatpush1.msra.mxu0 0.0
    %2190 = vmatprep.subr.mxu0 0.0
    %2191 = vmatpush1.msra.mxu0 0.0
    %2192 = vmatprep.subr.mxu0 0.0
    %2193 = vmatpush1.msra.mxu0 0.0
    %2194 = vmatprep.subr.mxu0 0.0
    %2195 = vmatpush1.msra.mxu0 0.0
    %2196 = vmatprep.subr.mxu0 0.0
    %2197 = vmatpush1.msra.mxu0 0.0
    %2198 = vmatprep.subr.mxu0 0.0
    %2199 = vmatpush1.msra.mxu0 0.0
    %2200 = vmatprep.subr.mxu0 0.0
    %2201 = vmatpush1.msra.mxu0 0.0
    %2202 = vmatprep.subr.mxu0 0.0
    %2203 = vmatpush1.msra.mxu0 0.0
    %2204 = vmatprep.subr.mxu0 0.0
    %2205 = vmatpush1.msra.mxu0 0.0
    %2206 = vmatprep.subr.mxu0 0.0
    %2207 = vmatpush1.msra.mxu0 0.0
    %2208 = vmatprep.mubr.f32.mxu0 0.0
    %2209 = vmatmul.mubr.f32.gmra.mrb[0].mxu0 %v1895
    %v2210 = vpop.f32.mrb[0].mxu0
    %v2211 = vadd.f32 0.0, %v2210
    %v2212 = vpop.f32.mrb[0].mxu0
    %v2213 = vadd.f32 0.0, %v2212
    %2214 = vdwg.mxu0
    %2215 = vmatprep.subr.mxu0 %v479
    %2216 = vmatpush1.msra.mxu0 %v478
    %2217 = vmatprep.subr.mxu0 %v483
    %2218 = vmatpush1.msra.mxu0 %v482
    %2219 = vmatprep.subr.mxu0 %v487
    %2220 = vmatpush1.msra.mxu0 %v486
    %2221 = vmatprep.subr.mxu0 %v491
    %2222 = vmatpush1.msra.mxu0 %v490
    %2223 = vmatprep.subr.mxu0 %v495
    %2224 = vmatpush1.msra.mxu0 %v494
    %2225 = vmatprep.subr.mxu0 %v499
    %2226 = vmatpush1.msra.mxu0 %v498
    %2227 = vmatprep.subr.mxu0 %v503
    %2228 = vmatpush1.msra.mxu0 %v502
    %2229 = vmatprep.subr.mxu0 %v507
    %2230 = vmatpush1.msra.mxu0 %v506
    %2231 = vmatprep.subr.mxu0 %v511
    %2232 = vmatpush1.msra.mxu0 %v510
    %2233 = vmatprep.subr.mxu0 %v515
    %2234 = vmatpush1.msra.mxu0 %v514
    %2235 = vmatprep.subr.mxu0 %v519
    %2236 = vmatpush1.msra.mxu0 %v518
    %2237 = vmatprep.subr.mxu0 %v523
    %2238 = vmatpush1.msra.mxu0 %v522
    %2239 = vmatprep.subr.mxu0 %v527
    %2240 = vmatpush1.msra.mxu0 %v526
    %2241 = vmatprep.subr.mxu0 %v531
    %2242 = vmatpush1.msra.mxu0 %v530
    %2243 = vmatprep.subr.mxu0 %v535
    %2244 = vmatpush1.msra.mxu0 %v534
    %2245 = vmatprep.subr.mxu0 %v539
    %2246 = vmatpush1.msra.mxu0 %v538
    %2247 = vmatprep.subr.mxu0 0.0
    %2248 = vmatpush1.msra.mxu0 0.0
    %2249 = vmatprep.subr.mxu0 0.0
    %2250 = vmatpush1.msra.mxu0 0.0
    %2251 = vmatprep.subr.mxu0 0.0
    %2252 = vmatpush1.msra.mxu0 0.0
    %2253 = vmatprep.subr.mxu0 0.0
    %2254 = vmatpush1.msra.mxu0 0.0
    %2255 = vmatprep.subr.mxu0 0.0
    %2256 = vmatpush1.msra.mxu0 0.0
    %2257 = vmatprep.subr.mxu0 0.0
    %2258 = vmatpush1.msra.mxu0 0.0
    %2259 = vmatprep.subr.mxu0 0.0
    %2260 = vmatpush1.msra.mxu0 0.0
    %2261 = vmatprep.subr.mxu0 0.0
    %2262 = vmatpush1.msra.mxu0 0.0
    %2263 = vmatprep.subr.mxu0 0.0
    %2264 = vmatpush1.msra.mxu0 0.0
    %2265 = vmatprep.subr.mxu0 0.0
    %2266 = vmatpush1.msra.mxu0 0.0
    %2267 = vmatprep.subr.mxu0 0.0
    %2268 = vmatpush1.msra.mxu0 0.0
    %2269 = vmatprep.subr.mxu0 0.0
    %2270 = vmatpush1.msra.mxu0 0.0
    %2271 = vmatprep.subr.mxu0 0.0
    %2272 = vmatpush1.msra.mxu0 0.0
    %2273 = vmatprep.subr.mxu0 0.0
    %2274 = vmatpush1.msra.mxu0 0.0
    %2275 = vmatprep.subr.mxu0 0.0
    %2276 = vmatpush1.msra.mxu0 0.0
    %2277 = vmatprep.subr.mxu0 0.0
    %2278 = vmatpush1.msra.mxu0 0.0
    %2279 = vmatprep.mubr.f32.mxu0 0.0
    %2280 = vmatmul.mubr.f32.gmra.mrb[0].mxu0 %v2072
    %v2281 = vpop.f32.mrb[0].mxu0
    %v2282 = vadd.f32 %v2140, %v2281
    %v2283 = vpop.f32.mrb[0].mxu0
    %v2284 = vadd.f32 %v2142, %v2283
    %2285 = vdwg.mxu0
    %2286 = vmatprep.subr.mxu0 %v481
    %2287 = vmatpush1.msra.mxu0 %v480
    %2288 = vmatprep.subr.mxu0 %v485
    %2289 = vmatpush1.msra.mxu0 %v484
    %2290 = vmatprep.subr.mxu0 %v489
    %2291 = vmatpush1.msra.mxu0 %v488
    %2292 = vmatprep.subr.mxu0 %v493
    %2293 = vmatpush1.msra.mxu0 %v492
    %2294 = vmatprep.subr.mxu0 %v497
    %2295 = vmatpush1.msra.mxu0 %v496
    %2296 = vmatprep.subr.mxu0 %v501
    %2297 = vmatpush1.msra.mxu0 %v500
    %2298 = vmatprep.subr.mxu0 %v505
    %2299 = vmatpush1.msra.mxu0 %v504
    %2300 = vmatprep.subr.mxu0 %v509
    %2301 = vmatpush1.msra.mxu0 %v508
    %2302 = vmatprep.subr.mxu0 %v513
    %2303 = vmatpush1.msra.mxu0 %v512
    %2304 = vmatprep.subr.mxu0 %v517
    %2305 = vmatpush1.msra.mxu0 %v516
    %2306 = vmatprep.subr.mxu0 %v521
    %2307 = vmatpush1.msra.mxu0 %v520
    %2308 = vmatprep.subr.mxu0 %v525
    %2309 = vmatpush1.msra.mxu0 %v524
    %2310 = vmatprep.subr.mxu0 %v529
    %2311 = vmatpush1.msra.mxu0 %v528
    %2312 = vmatprep.subr.mxu0 %v533
    %2313 = vmatpush1.msra.mxu0 %v532
    %2314 = vmatprep.subr.mxu0 %v537
    %2315 = vmatpush1.msra.mxu0 %v536
    %2316 = vmatprep.subr.mxu0 %v541
    %2317 = vmatpush1.msra.mxu0 %v540
    %2318 = vmatprep.subr.mxu0 0.0
    %2319 = vmatpush1.msra.mxu0 0.0
    %2320 = vmatprep.subr.mxu0 0.0
    %2321 = vmatpush1.msra.mxu0 0.0
    %2322 = vmatprep.subr.mxu0 0.0
    %2323 = vmatpush1.msra.mxu0 0.0
    %2324 = vmatprep.subr.mxu0 0.0
    %2325 = vmatpush1.msra.mxu0 0.0
    %2326 = vmatprep.subr.mxu0 0.0
    %2327 = vmatpush1.msra.mxu0 0.0
    %2328 = vmatprep.subr.mxu0 0.0
    %2329 = vmatpush1.msra.mxu0 0.0
    %2330 = vmatprep.subr.mxu0 0.0
    %2331 = vmatpush1.msra.mxu0 0.0
    %2332 = vmatprep.subr.mxu0 0.0
    %2333 = vmatpush1.msra.mxu0 0.0
    %2334 = vmatprep.subr.mxu0 0.0
    %2335 = vmatpush1.msra.mxu0 0.0
    %2336 = vmatprep.subr.mxu0 0.0
    %2337 = vmatpush1.msra.mxu0 0.0
    %2338 = vmatprep.subr.mxu0 0.0
    %2339 = vmatpush1.msra.mxu0 0.0
    %2340 = vmatprep.subr.mxu0 0.0
    %2341 = vmatpush1.msra.mxu0 0.0
    %2342 = vmatprep.subr.mxu0 0.0
    %2343 = vmatpush1.msra.mxu0 0.0
    %2344 = vmatprep.subr.mxu0 0.0
    %2345 = vmatpush1.msra.mxu0 0.0
    %2346 = vmatprep.subr.mxu0 0.0
    %2347 = vmatpush1.msra.mxu0 0.0
    %2348 = vmatprep.subr.mxu0 0.0
    %2349 = vmatpush1.msra.mxu0 0.0
    %2350 = vmatprep.mubr.f32.mxu0 0.0
    %2351 = vmatmul.mubr.f32.gmra.mrb[0].mxu0 %v2072
    %v2352 = vpop.f32.mrb[0].mxu0
    %v2353 = vadd.f32 %v2211, %v2352
    %v2354 = vpop.f32.mrb[0].mxu0
    %v2355 = vadd.f32 %v2213, %v2354
    %2356 = vdwg.mxu0
    %v2357 = vadd.f32 %v2282, %v220
    %v2358 = vadd.f32 %v2284, %v224
    %v2359 = vadd.f32 %v2353, %v228
    %v2360 = vadd.f32 %v2355, %v232
    %v2361 = vxor.u32 %v2357, 2147483648
    %v2362 = vxor.u32 %v2358, 2147483648
    %v2363 = vxor.u32 %v2359, 2147483648
    %v2364 = vmul.f32 %v2361, 1.442695
    %v2365 = vpow.pop %v2364
    %v2366 = vmul.f32 %v2362, 1.442695
    %v2367 = vpow.pop %v2366
    %v2368 = vmul.f32 %v2363, 1.442695
    %v2369 = vpow.pop %v2368
    %v2370 = vadd.f32 %v2365, 1.0
    %v2371 = vadd.f32 %v2367, 1.0
    %v2372 = vadd.f32 %v2369, 1.0
    %v2373 = vrcp.pop %v2370
    %v2374 = vmul.f32 1.0, %v2373
    %v2375 = vrcp.pop %v2371
    %v2376 = vmul.f32 1.0, %v2375
    %v2377 = vrcp.pop %v2372
    %v2378 = vmul.f32 1.0, %v2377
    %v2379 = vtanh.pop %v2360
    %v2380 = vmul.f32 %v2376, %v1893
    %v2381 = vmul.f32 %v2374, %v2379
    %v2382 = vadd.f32 %v2380, %v2381
    %v2383 = vtanh.pop %v2382
    %v2384 = vmul.f32 %v2378, %v2383
    %s2385 = smul.u32 4, 4
    %s2386 = smul.addr %s2385, 8
    %s2387 = scalar_lea.vmem [#allocation2], %s2386
    %v2388 = vld [vmem:[%s2387] sm:$0xff]
    %v2389 = vld [vmem:[%s2387 + $0x8] sm:$0xff]
    %v2390 = vld [vmem:[%s2387 + $0x10] sm:$0xff]
    %v2391 = vld [vmem:[%s2387 + $0x18] sm:$0xff]
    %2392 = vmatprep.subr.mxu0 %v245
    %2393 = vmatpush1.msra.mxu0 %v244
    %2394 = vmatprep.subr.mxu0 %v249
    %2395 = vmatpush1.msra.mxu0 %v248
    %2396 = vmatprep.subr.mxu0 %v253
    %2397 = vmatpush1.msra.mxu0 %v252
    %2398 = vmatprep.subr.mxu0 %v257
    %2399 = vmatpush1.msra.mxu0 %v256
    %2400 = vmatprep.subr.mxu0 %v261
    %2401 = vmatpush1.msra.mxu0 %v260
    %2402 = vmatprep.subr.mxu0 %v265
    %2403 = vmatpush1.msra.mxu0 %v264
    %2404 = vmatprep.subr.mxu0 %v269
    %2405 = vmatpush1.msra.mxu0 %v268
    %2406 = vmatprep.subr.mxu0 %v273
    %2407 = vmatpush1.msra.mxu0 %v272
    %2408 = vmatprep.subr.mxu0 %v277
    %2409 = vmatpush1.msra.mxu0 %v276
    %2410 = vmatprep.subr.mxu0 %v281
    %2411 = vmatpush1.msra.mxu0 %v280
    %2412 = vmatprep.subr.mxu0 %v285
    %2413 = vmatpush1.msra.mxu0 %v284
    %2414 = vmatprep.subr.mxu0 %v289
    %2415 = vmatpush1.msra.mxu0 %v288
    %2416 = vmatprep.subr.mxu0 %v293
    %2417 = vmatpush1.msra.mxu0 %v292
    %2418 = vmatprep.subr.mxu0 %v297
    %2419 = vmatpush1.msra.mxu0 %v296
    %2420 = vmatprep.subr.mxu0 %v301
    %2421 = vmatpush1.msra.mxu0 %v300
    %2422 = vmatprep.subr.mxu0 %v305
    %2423 = vmatpush1.msra.mxu0 %v304
    %2424 = vmatprep.subr.mxu0 0.0
    %2425 = vmatpush1.msra.mxu0 0.0
    %2426 = vmatprep.subr.mxu0 0.0
    %2427 = vmatpush1.msra.mxu0 0.0
    %2428 = vmatprep.subr.mxu0 0.0
    %2429 = vmatpush1.msra.mxu0 0.0
    %2430 = vmatprep.subr.mxu0 0.0
    %2431 = vmatpush1.msra.mxu0 0.0
    %2432 = vmatprep.subr.mxu0 0.0
    %2433 = vmatpush1.msra.mxu0 0.0
    %2434 = vmatprep.subr.mxu0 0.0
    %2435 = vmatpush1.msra.mxu0 0.0
    %2436 = vmatprep.subr.mxu0 0.0
    %2437 = vmatpush1.msra.mxu0 0.0
    %2438 = vmatprep.subr.mxu0 0.0
    %2439 = vmatpush1.msra.mxu0 0.0
    %2440 = vmatprep.subr.mxu0 0.0
    %2441 = vmatpush1.msra.mxu0 0.0
    %2442 = vmatprep.subr.mxu0 0.0
    %2443 = vmatpush1.msra.mxu0 0.0
    %2444 = vmatprep.subr.mxu0 0.0
    %2445 = vmatpush1.msra.mxu0 0.0
    %2446 = vmatprep.subr.mxu0 0.0
    %2447 = vmatpush1.msra.mxu0 0.0
    %2448 = vmatprep.subr.mxu0 0.0
    %2449 = vmatpush1.msra.mxu0 0.0
    %2450 = vmatprep.subr.mxu0 0.0
    %2451 = vmatpush1.msra.mxu0 0.0
    %2452 = vmatprep.subr.mxu0 0.0
    %2453 = vmatpush1.msra.mxu0 0.0
    %2454 = vmatprep.subr.mxu0 0.0
    %2455 = vmatpush1.msra.mxu0 0.0
    %2456 = vmatprep.mubr.f32.mxu0 0.0
    %2457 = vmatmul.mubr.f32.gmra.mrb[0].mxu0 %v2072
    %v2458 = vpop.f32.mrb[0].mxu0
    %v2459 = vadd.f32 0.0, %v2458
    %v2460 = vpop.f32.mrb[0].mxu0
    %v2461 = vadd.f32 0.0, %v2460
    %2462 = vdwg.mxu0
    %2463 = vmatprep.subr.mxu0 %v247
    %2464 = vmatpush1.msra.mxu0 %v246
    %2465 = vmatprep.subr.mxu0 %v251
    %2466 = vmatpush1.msra.mxu0 %v250
    %2467 = vmatprep.subr.mxu0 %v255
    %2468 = vmatpush1.msra.mxu0 %v254
    %2469 = vmatprep.subr.mxu0 %v259
    %2470 = vmatpush1.msra.mxu0 %v258
    %2471 = vmatprep.subr.mxu0 %v263
    %2472 = vmatpush1.msra.mxu0 %v262
    %2473 = vmatprep.subr.mxu0 %v267
    %2474 = vmatpush1.msra.mxu0 %v266
    %2475 = vmatprep.subr.mxu0 %v271
    %2476 = vmatpush1.msra.mxu0 %v270
    %2477 = vmatprep.subr.mxu0 %v275
    %2478 = vmatpush1.msra.mxu0 %v274
    %2479 = vmatprep.subr.mxu0 %v279
    %2480 = vmatpush1.msra.mxu0 %v278
    %2481 = vmatprep.subr.mxu0 %v283
    %2482 = vmatpush1.msra.mxu0 %v282
    %2483 = vmatprep.subr.mxu0 %v287
    %2484 = vmatpush1.msra.mxu0 %v286
    %2485 = vmatprep.subr.mxu0 %v291
    %2486 = vmatpush1.msra.mxu0 %v290
    %2487 = vmatprep.subr.mxu0 %v295
    %2488 = vmatpush1.msra.mxu0 %v294
    %2489 = vmatprep.subr.mxu0 %v299
    %2490 = vmatpush1.msra.mxu0 %v298
    %2491 = vmatprep.subr.mxu0 %v303
    %2492 = vmatpush1.msra.mxu0 %v302
    %2493 = vmatprep.subr.mxu0 %v307
    %2494 = vmatpush1.msra.mxu0 %v306
    %2495 = vmatprep.subr.mxu0 0.0
    %2496 = vmatpush1.msra.mxu0 0.0
    %2497 = vmatprep.subr.mxu0 0.0
    %2498 = vmatpush1.msra.mxu0 0.0
    %2499 = vmatprep.subr.mxu0 0.0
    %2500 = vmatpush1.msra.mxu0 0.0
    %2501 = vmatprep.subr.mxu0 0.0
    %2502 = vmatpush1.msra.mxu0 0.0
    %2503 = vmatprep.subr.mxu0 0.0
    %2504 = vmatpush1.msra.mxu0 0.0
    %2505 = vmatprep.subr.mxu0 0.0
    %2506 = vmatpush1.msra.mxu0 0.0
    %2507 = vmatprep.subr.mxu0 0.0
    %2508 = vmatpush1.msra.mxu0 0.0
    %2509 = vmatprep.subr.mxu0 0.0
    %2510 = vmatpush1.msra.mxu0 0.0
    %2511 = vmatprep.subr.mxu0 0.0
    %2512 = vmatpush1.msra.mxu0 0.0
    %2513 = vmatprep.subr.mxu0 0.0
    %2514 = vmatpush1.msra.mxu0 0.0
    %2515 = vmatprep.subr.mxu0 0.0
    %2516 = vmatpush1.msra.mxu0 0.0
    %2517 = vmatprep.subr.mxu0 0.0
    %2518 = vmatpush1.msra.mxu0 0.0
    %2519 = vmatprep.subr.mxu0 0.0
    %2520 = vmatpush1.msra.mxu0 0.0
    %2521 = vmatprep.subr.mxu0 0.0
    %2522 = vmatpush1.msra.mxu0 0.0
    %2523 = vmatprep.subr.mxu0 0.0
    %2524 = vmatpush1.msra.mxu0 0.0
    %2525 = vmatprep.subr.mxu0 0.0
    %2526 = vmatpush1.msra.mxu0 0.0
    %2527 = vmatprep.mubr.f32.mxu0 0.0
    %2528 = vmatmul.mubr.f32.gmra.mrb[0].mxu0 %v2072
    %v2529 = vpop.f32.mrb[0].mxu0
    %v2530 = vadd.f32 0.0, %v2529
    %v2531 = vpop.f32.mrb[0].mxu0
    %v2532 = vadd.f32 0.0, %v2531
    %2533 = vdwg.mxu0
    %v2534 = vadd.f32 %v2388, %v2459
    %v2535 = vadd.f32 %v2389, %v2461
    %v2536 = vadd.f32 %v2390, %v2530
    %v2537 = vadd.f32 %v2391, %v2532
    %v2538 = vxor.u32 %v2534, 2147483648
    %v2539 = vxor.u32 %v2535, 2147483648
    %v2540 = vxor.u32 %v2536, 2147483648
    %v2541 = vmul.f32 %v2538, 1.442695
    %v2542 = vpow.pop %v2541
    %v2543 = vmul.f32 %v2539, 1.442695
    %v2544 = vpow.pop %v2543
    %v2545 = vmul.f32 %v2540, 1.442695
    %v2546 = vpow.pop %v2545
    %v2547 = vadd.f32 %v2542, 1.0
    %v2548 = vadd.f32 %v2544, 1.0
    %v2549 = vadd.f32 %v2546, 1.0
    %v2550 = vrcp.pop %v2547
    %v2551 = vmul.f32 1.0, %v2550
    %v2552 = vrcp.pop %v2548
    %v2553 = vmul.f32 1.0, %v2552
    %v2554 = vrcp.pop %v2549
    %v2555 = vmul.f32 1.0, %v2554
    %v2556 = vtanh.pop %v2537
    %v2557 = vmul.f32 %v2553, %v2070
    %v2558 = vmul.f32 %v2551, %v2556
    %v2559 = vadd.f32 %v2557, %v2558
    %v2560 = vtanh.pop %v2559
    %v2561 = vmul.f32 %v2555, %v2560
    %2562 = vmatprep.subr.mxu0 %v543
    %2563 = vmatpush1.msra.mxu0 %v542
    %2564 = vmatprep.subr.mxu0 %v547
    %2565 = vmatpush1.msra.mxu0 %v546
    %2566 = vmatprep.subr.mxu0 %v551
    %2567 = vmatpush1.msra.mxu0 %v550
    %2568 = vmatprep.subr.mxu0 %v555
    %2569 = vmatpush1.msra.mxu0 %v554
    %2570 = vmatprep.subr.mxu0 %v559
    %2571 = vmatpush1.msra.mxu0 %v558
    %2572 = vmatprep.subr.mxu0 %v563
    %2573 = vmatpush1.msra.mxu0 %v562
    %2574 = vmatprep.subr.mxu0 %v567
    %2575 = vmatpush1.msra.mxu0 %v566
    %2576 = vmatprep.subr.mxu0 %v571
    %2577 = vmatpush1.msra.mxu0 %v570
    %2578 = vmatprep.subr.mxu0 %v575
    %2579 = vmatpush1.msra.mxu0 %v574
    %2580 = vmatprep.subr.mxu0 %v579
    %2581 = vmatpush1.msra.mxu0 %v578
    %2582 = vmatprep.subr.mxu0 %v583
    %2583 = vmatpush1.msra.mxu0 %v582
    %2584 = vmatprep.subr.mxu0 %v587
    %2585 = vmatpush1.msra.mxu0 %v586
    %2586 = vmatprep.subr.mxu0 %v591
    %2587 = vmatpush1.msra.mxu0 %v590
    %2588 = vmatprep.subr.mxu0 %v595
    %2589 = vmatpush1.msra.mxu0 %v594
    %2590 = vmatprep.subr.mxu0 %v599
    %2591 = vmatpush1.msra.mxu0 %v598
    %2592 = vmatprep.subr.mxu0 %v603
    %2593 = vmatpush1.msra.mxu0 %v602
    %2594 = vmatprep.subr.mxu0 0.0
    %2595 = vmatpush1.msra.mxu0 0.0
    %2596 = vmatprep.subr.mxu0 0.0
    %2597 = vmatpush1.msra.mxu0 0.0
    %2598 = vmatprep.subr.mxu0 0.0
    %2599 = vmatpush1.msra.mxu0 0.0
    %2600 = vmatprep.subr.mxu0 0.0
    %2601 = vmatpush1.msra.mxu0 0.0
    %2602 = vmatprep.subr.mxu0 0.0
    %2603 = vmatpush1.msra.mxu0 0.0
    %2604 = vmatprep.subr.mxu0 0.0
    %2605 = vmatpush1.msra.mxu0 0.0
    %2606 = vmatprep.subr.mxu0 0.0
    %2607 = vmatpush1.msra.mxu0 0.0
    %2608 = vmatprep.subr.mxu0 0.0
    %2609 = vmatpush1.msra.mxu0 0.0
    %2610 = vmatprep.subr.mxu0 0.0
    %2611 = vmatpush1.msra.mxu0 0.0
    %2612 = vmatprep.subr.mxu0 0.0
    %2613 = vmatpush1.msra.mxu0 0.0
    %2614 = vmatprep.subr.mxu0 0.0
    %2615 = vmatpush1.msra.mxu0 0.0
    %2616 = vmatprep.subr.mxu0 0.0
    %2617 = vmatpush1.msra.mxu0 0.0
    %2618 = vmatprep.subr.mxu0 0.0
    %2619 = vmatpush1.msra.mxu0 0.0
    %2620 = vmatprep.subr.mxu0 0.0
    %2621 = vmatpush1.msra.mxu0 0.0
    %2622 = vmatprep.subr.mxu0 0.0
    %2623 = vmatpush1.msra.mxu0 0.0
    %2624 = vmatprep.subr.mxu0 0.0
    %2625 = vmatpush1.msra.mxu0 0.0
    %2626 = vmatprep.mubr.f32.mxu0 0.0
    %2627 = vmatmul.mubr.f32.gmra.mrb[0].mxu0 %v2384
    %v2628 = vpop.f32.mrb[0].mxu0
    %v2629 = vadd.f32 0.0, %v2628
    %v2630 = vpop.f32.mrb[0].mxu0
    %v2631 = vadd.f32 0.0, %v2630
    %2632 = vdwg.mxu0
    %2633 = vmatprep.subr.mxu0 %v545
    %2634 = vmatpush1.msra.mxu0 %v544
    %2635 = vmatprep.subr.mxu0 %v549
    %2636 = vmatpush1.msra.mxu0 %v548
    %2637 = vmatprep.subr.mxu0 %v553
    %2638 = vmatpush1.msra.mxu0 %v552
    %2639 = vmatprep.subr.mxu0 %v557
    %2640 = vmatpush1.msra.mxu0 %v556
    %2641 = vmatprep.subr.mxu0 %v561
    %2642 = vmatpush1.msra.mxu0 %v560
    %2643 = vmatprep.subr.mxu0 %v565
    %2644 = vmatpush1.msra.mxu0 %v564
    %2645 = vmatprep.subr.mxu0 %v569
    %2646 = vmatpush1.msra.mxu0 %v568
    %2647 = vmatprep.subr.mxu0 %v573
    %2648 = vmatpush1.msra.mxu0 %v572
    %2649 = vmatprep.subr.mxu0 %v577
    %2650 = vmatpush1.msra.mxu0 %v576
    %2651 = vmatprep.subr.mxu0 %v581
    %2652 = vmatpush1.msra.mxu0 %v580
    %2653 = vmatprep.subr.mxu0 %v585
    %2654 = vmatpush1.msra.mxu0 %v584
    %2655 = vmatprep.subr.mxu0 %v589
    %2656 = vmatpush1.msra.mxu0 %v588
    %2657 = vmatprep.subr.mxu0 %v593
    %2658 = vmatpush1.msra.mxu0 %v592
    %2659 = vmatprep.subr.mxu0 %v597
    %2660 = vmatpush1.msra.mxu0 %v596
    %2661 = vmatprep.subr.mxu0 %v601
    %2662 = vmatpush1.msra.mxu0 %v600
    %2663 = vmatprep.subr.mxu0 %v605
    %2664 = vmatpush1.msra.mxu0 %v604
    %2665 = vmatprep.subr.mxu0 0.0
    %2666 = vmatpush1.msra.mxu0 0.0
    %2667 = vmatprep.subr.mxu0 0.0
    %2668 = vmatpush1.msra.mxu0 0.0
    %2669 = vmatprep.subr.mxu0 0.0
    %2670 = vmatpush1.msra.mxu0 0.0
    %2671 = vmatprep.subr.mxu0 0.0
    %2672 = vmatpush1.msra.mxu0 0.0
    %2673 = vmatprep.subr.mxu0 0.0
    %2674 = vmatpush1.msra.mxu0 0.0
    %2675 = vmatprep.subr.mxu0 0.0
    %2676 = vmatpush1.msra.mxu0 0.0
    %2677 = vmatprep.subr.mxu0 0.0
    %2678 = vmatpush1.msra.mxu0 0.0
    %2679 = vmatprep.subr.mxu0 0.0
    %2680 = vmatpush1.msra.mxu0 0.0
    %2681 = vmatprep.subr.mxu0 0.0
    %2682 = vmatpush1.msra.mxu0 0.0
    %2683 = vmatprep.subr.mxu0 0.0
    %2684 = vmatpush1.msra.mxu0 0.0
    %2685 = vmatprep.subr.mxu0 0.0
    %2686 = vmatpush1.msra.mxu0 0.0
    %2687 = vmatprep.subr.mxu0 0.0
    %2688 = vmatpush1.msra.mxu0 0.0
    %2689 = vmatprep.subr.mxu0 0.0
    %2690 = vmatpush1.msra.mxu0 0.0
    %2691 = vmatprep.subr.mxu0 0.0
    %2692 = vmatpush1.msra.mxu0 0.0
    %2693 = vmatprep.subr.mxu0 0.0
    %2694 = vmatpush1.msra.mxu0 0.0
    %2695 = vmatprep.subr.mxu0 0.0
    %2696 = vmatpush1.msra.mxu0 0.0
    %2697 = vmatprep.mubr.f32.mxu0 0.0
    %2698 = vmatmul.mubr.f32.gmra.mrb[0].mxu0 %v2384
    %v2699 = vpop.f32.mrb[0].mxu0
    %v2700 = vadd.f32 0.0, %v2699
    %v2701 = vpop.f32.mrb[0].mxu0
    %v2702 = vadd.f32 0.0, %v2701
    %2703 = vdwg.mxu0
    %2704 = vmatprep.subr.mxu0 %v479
    %2705 = vmatpush1.msra.mxu0 %v478
    %2706 = vmatprep.subr.mxu0 %v483
    %2707 = vmatpush1.msra.mxu0 %v482
    %2708 = vmatprep.subr.mxu0 %v487
    %2709 = vmatpush1.msra.mxu0 %v486
    %2710 = vmatprep.subr.mxu0 %v491
    %2711 = vmatpush1.msra.mxu0 %v490
    %2712 = vmatprep.subr.mxu0 %v495
    %2713 = vmatpush1.msra.mxu0 %v494
    %2714 = vmatprep.subr.mxu0 %v499
    %2715 = vmatpush1.msra.mxu0 %v498
    %2716 = vmatprep.subr.mxu0 %v503
    %2717 = vmatpush1.msra.mxu0 %v502
    %2718 = vmatprep.subr.mxu0 %v507
    %2719 = vmatpush1.msra.mxu0 %v506
    %2720 = vmatprep.subr.mxu0 %v511
    %2721 = vmatpush1.msra.mxu0 %v510
    %2722 = vmatprep.subr.mxu0 %v515
    %2723 = vmatpush1.msra.mxu0 %v514
    %2724 = vmatprep.subr.mxu0 %v519
    %2725 = vmatpush1.msra.mxu0 %v518
    %2726 = vmatprep.subr.mxu0 %v523
    %2727 = vmatpush1.msra.mxu0 %v522
    %2728 = vmatprep.subr.mxu0 %v527
    %2729 = vmatpush1.msra.mxu0 %v526
    %2730 = vmatprep.subr.mxu0 %v531
    %2731 = vmatpush1.msra.mxu0 %v530
    %2732 = vmatprep.subr.mxu0 %v535
    %2733 = vmatpush1.msra.mxu0 %v534
    %2734 = vmatprep.subr.mxu0 %v539
    %2735 = vmatpush1.msra.mxu0 %v538
    %2736 = vmatprep.subr.mxu0 0.0
    %2737 = vmatpush1.msra.mxu0 0.0
    %2738 = vmatprep.subr.mxu0 0.0
    %2739 = vmatpush1.msra.mxu0 0.0
    %2740 = vmatprep.subr.mxu0 0.0
    %2741 = vmatpush1.msra.mxu0 0.0
    %2742 = vmatprep.subr.mxu0 0.0
    %2743 = vmatpush1.msra.mxu0 0.0
    %2744 = vmatprep.subr.mxu0 0.0
    %2745 = vmatpush1.msra.mxu0 0.0
    %2746 = vmatprep.subr.mxu0 0.0
    %2747 = vmatpush1.msra.mxu0 0.0
    %2748 = vmatprep.subr.mxu0 0.0
    %2749 = vmatpush1.msra.mxu0 0.0
    %2750 = vmatprep.subr.mxu0 0.0
    %2751 = vmatpush1.msra.mxu0 0.0
    %2752 = vmatprep.subr.mxu0 0.0
    %2753 = vmatpush1.msra.mxu0 0.0
    %2754 = vmatprep.subr.mxu0 0.0
    %2755 = vmatpush1.msra.mxu0 0.0
    %2756 = vmatprep.subr.mxu0 0.0
    %2757 = vmatpush1.msra.mxu0 0.0
    %2758 = vmatprep.subr.mxu0 0.0
    %2759 = vmatpush1.msra.mxu0 0.0
    %2760 = vmatprep.subr.mxu0 0.0
    %2761 = vmatpush1.msra.mxu0 0.0
    %2762 = vmatprep.subr.mxu0 0.0
    %2763 = vmatpush1.msra.mxu0 0.0
    %2764 = vmatprep.subr.mxu0 0.0
    %2765 = vmatpush1.msra.mxu0 0.0
    %2766 = vmatprep.subr.mxu0 0.0
    %2767 = vmatpush1.msra.mxu0 0.0
    %2768 = vmatprep.mubr.f32.mxu0 0.0
    %2769 = vmatmul.mubr.f32.gmra.mrb[0].mxu0 %v2561
    %v2770 = vpop.f32.mrb[0].mxu0
    %v2771 = vadd.f32 %v2629, %v2770
    %v2772 = vpop.f32.mrb[0].mxu0
    %v2773 = vadd.f32 %v2631, %v2772
    %2774 = vdwg.mxu0
    %2775 = vmatprep.subr.mxu0 %v481
    %2776 = vmatpush1.msra.mxu0 %v480
    %2777 = vmatprep.subr.mxu0 %v485
    %2778 = vmatpush1.msra.mxu0 %v484
    %2779 = vmatprep.subr.mxu0 %v489
    %2780 = vmatpush1.msra.mxu0 %v488
    %2781 = vmatprep.subr.mxu0 %v493
    %2782 = vmatpush1.msra.mxu0 %v492
    %2783 = vmatprep.subr.mxu0 %v497
    %2784 = vmatpush1.msra.mxu0 %v496
    %2785 = vmatprep.subr.mxu0 %v501
    %2786 = vmatpush1.msra.mxu0 %v500
    %2787 = vmatprep.subr.mxu0 %v505
    %2788 = vmatpush1.msra.mxu0 %v504
    %2789 = vmatprep.subr.mxu0 %v509
    %2790 = vmatpush1.msra.mxu0 %v508
    %2791 = vmatprep.subr.mxu0 %v513
    %2792 = vmatpush1.msra.mxu0 %v512
    %2793 = vmatprep.subr.mxu0 %v517
    %2794 = vmatpush1.msra.mxu0 %v516
    %2795 = vmatprep.subr.mxu0 %v521
    %2796 = vmatpush1.msra.mxu0 %v520
    %2797 = vmatprep.subr.mxu0 %v525
    %2798 = vmatpush1.msra.mxu0 %v524
    %2799 = vmatprep.subr.mxu0 %v529
    %2800 = vmatpush1.msra.mxu0 %v528
    %2801 = vmatprep.subr.mxu0 %v533
    %2802 = vmatpush1.msra.mxu0 %v532
    %2803 = vmatprep.subr.mxu0 %v537
    %2804 = vmatpush1.msra.mxu0 %v536
    %2805 = vmatprep.subr.mxu0 %v541
    %2806 = vmatpush1.msra.mxu0 %v540
    %2807 = vmatprep.subr.mxu0 0.0
    %2808 = vmatpush1.msra.mxu0 0.0
    %2809 = vmatprep.subr.mxu0 0.0
    %2810 = vmatpush1.msra.mxu0 0.0
    %2811 = vmatprep.subr.mxu0 0.0
    %2812 = vmatpush1.msra.mxu0 0.0
    %2813 = vmatprep.subr.mxu0 0.0
    %2814 = vmatpush1.msra.mxu0 0.0
    %2815 = vmatprep.subr.mxu0 0.0
    %2816 = vmatpush1.msra.mxu0 0.0
    %2817 = vmatprep.subr.mxu0 0.0
    %2818 = vmatpush1.msra.mxu0 0.0
    %2819 = vmatprep.subr.mxu0 0.0
    %2820 = vmatpush1.msra.mxu0 0.0
    %2821 = vmatprep.subr.mxu0 0.0
    %2822 = vmatpush1.msra.mxu0 0.0
    %2823 = vmatprep.subr.mxu0 0.0
    %2824 = vmatpush1.msra.mxu0 0.0
    %2825 = vmatprep.subr.mxu0 0.0
    %2826 = vmatpush1.msra.mxu0 0.0
    %2827 = vmatprep.subr.mxu0 0.0
    %2828 = vmatpush1.msra.mxu0 0.0
    %2829 = vmatprep.subr.mxu0 0.0
    %2830 = vmatpush1.msra.mxu0 0.0
    %2831 = vmatprep.subr.mxu0 0.0
    %2832 = vmatpush1.msra.mxu0 0.0
    %2833 = vmatprep.subr.mxu0 0.0
    %2834 = vmatpush1.msra.mxu0 0.0
    %2835 = vmatprep.subr.mxu0 0.0
    %2836 = vmatpush1.msra.mxu0 0.0
    %2837 = vmatprep.subr.mxu0 0.0
    %2838 = vmatpush1.msra.mxu0 0.0
    %2839 = vmatprep.mubr.f32.mxu0 0.0
    %2840 = vmatmul.mubr.f32.gmra.mrb[0].mxu0 %v2561
    %v2841 = vpop.f32.mrb[0].mxu0
    %v2842 = vadd.f32 %v2700, %v2841
    %v2843 = vpop.f32.mrb[0].mxu0
    %v2844 = vadd.f32 %v2702, %v2843
    %2845 = vdwg.mxu0
    %v2846 = vadd.f32 %v2771, %v220
    %v2847 = vadd.f32 %v2773, %v224
    %v2848 = vadd.f32 %v2842, %v228
    %v2849 = vadd.f32 %v2844, %v232
    %v2850 = vxor.u32 %v2846, 2147483648
    %v2851 = vxor.u32 %v2847, 2147483648
    %v2852 = vxor.u32 %v2848, 2147483648
    %v2853 = vmul.f32 %v2850, 1.442695
    %v2854 = vpow.pop %v2853
    %v2855 = vmul.f32 %v2851, 1.442695
    %v2856 = vpow.pop %v2855
    %v2857 = vmul.f32 %v2852, 1.442695
    %v2858 = vpow.pop %v2857
    %v2859 = vadd.f32 %v2854, 1.0
    %v2860 = vadd.f32 %v2856, 1.0
    %v2861 = vadd.f32 %v2858, 1.0
    %v2862 = vrcp.pop %v2859
    %v2863 = vmul.f32 1.0, %v2862
    %v2864 = vrcp.pop %v2860
    %v2865 = vmul.f32 1.0, %v2864
    %v2866 = vrcp.pop %v2861
    %v2867 = vmul.f32 1.0, %v2866
    %v2868 = vtanh.pop %v2849
    %v2869 = vmul.f32 %v2865, %v2382
    %v2870 = vmul.f32 %v2863, %v2868
    %v2871 = vadd.f32 %v2869, %v2870
    %v2872 = vtanh.pop %v2871
    %v2873 = vmul.f32 %v2867, %v2872
    %s2874 = smul.u32 5, 4
    %s2875 = smul.addr %s2874, 8
    %s2876 = scalar_lea.vmem [#allocation2], %s2875
    %v2877 = vld [vmem:[%s2876] sm:$0xff]
    %v2878 = vld [vmem:[%s2876 + $0x8] sm:$0xff]
    %v2879 = vld [vmem:[%s2876 + $0x10] sm:$0xff]
    %v2880 = vld [vmem:[%s2876 + $0x18] sm:$0xff]
    %2881 = vmatprep.subr.mxu0 %v245
    %2882 = vmatpush1.msra.mxu0 %v244
    %2883 = vmatprep.subr.mxu0 %v249
    %2884 = vmatpush1.msra.mxu0 %v248
    %2885 = vmatprep.subr.mxu0 %v253
    %2886 = vmatpush1.msra.mxu0 %v252
    %2887 = vmatprep.subr.mxu0 %v257
    %2888 = vmatpush1.msra.mxu0 %v256
    %2889 = vmatprep.subr.mxu0 %v261
    %2890 = vmatpush1.msra.mxu0 %v260
    %2891 = vmatprep.subr.mxu0 %v265
    %2892 = vmatpush1.msra.mxu0 %v264
    %2893 = vmatprep.subr.mxu0 %v269
    %2894 = vmatpush1.msra.mxu0 %v268
    %2895 = vmatprep.subr.mxu0 %v273
    %2896 = vmatpush1.msra.mxu0 %v272
    %2897 = vmatprep.subr.mxu0 %v277
    %2898 = vmatpush1.msra.mxu0 %v276
    %2899 = vmatprep.subr.mxu0 %v281
    %2900 = vmatpush1.msra.mxu0 %v280
    %2901 = vmatprep.subr.mxu0 %v285
    %2902 = vmatpush1.msra.mxu0 %v284
    %2903 = vmatprep.subr.mxu0 %v289
    %2904 = vmatpush1.msra.mxu0 %v288
    %2905 = vmatprep.subr.mxu0 %v293
    %2906 = vmatpush1.msra.mxu0 %v292
    %2907 = vmatprep.subr.mxu0 %v297
    %2908 = vmatpush1.msra.mxu0 %v296
    %2909 = vmatprep.subr.mxu0 %v301
    %2910 = vmatpush1.msra.mxu0 %v300
    %2911 = vmatprep.subr.mxu0 %v305
    %2912 = vmatpush1.msra.mxu0 %v304
    %2913 = vmatprep.subr.mxu0 0.0
    %2914 = vmatpush1.msra.mxu0 0.0
    %2915 = vmatprep.subr.mxu0 0.0
    %2916 = vmatpush1.msra.mxu0 0.0
    %2917 = vmatprep.subr.mxu0 0.0
    %2918 = vmatpush1.msra.mxu0 0.0
    %2919 = vmatprep.subr.mxu0 0.0
    %2920 = vmatpush1.msra.mxu0 0.0
    %2921 = vmatprep.subr.mxu0 0.0
    %2922 = vmatpush1.msra.mxu0 0.0
    %2923 = vmatprep.subr.mxu0 0.0
    %2924 = vmatpush1.msra.mxu0 0.0
    %2925 = vmatprep.subr.mxu0 0.0
    %2926 = vmatpush1.msra.mxu0 0.0
    %2927 = vmatprep.subr.mxu0 0.0
    %2928 = vmatpush1.msra.mxu0 0.0
    %2929 = vmatprep.subr.mxu0 0.0
    %2930 = vmatpush1.msra.mxu0 0.0
    %2931 = vmatprep.subr.mxu0 0.0
    %2932 = vmatpush1.msra.mxu0 0.0
    %2933 = vmatprep.subr.mxu0 0.0
    %2934 = vmatpush1.msra.mxu0 0.0
    %2935 = vmatprep.subr.mxu0 0.0
    %2936 = vmatpush1.msra.mxu0 0.0
    %2937 = vmatprep.subr.mxu0 0.0
    %2938 = vmatpush1.msra.mxu0 0.0
    %2939 = vmatprep.subr.mxu0 0.0
    %2940 = vmatpush1.msra.mxu0 0.0
    %2941 = vmatprep.subr.mxu0 0.0
    %2942 = vmatpush1.msra.mxu0 0.0
    %2943 = vmatprep.subr.mxu0 0.0
    %2944 = vmatpush1.msra.mxu0 0.0
    %2945 = vmatprep.mubr.f32.mxu0 0.0
    %2946 = vmatmul.mubr.f32.gmra.mrb[0].mxu0 %v2561
    %v2947 = vpop.f32.mrb[0].mxu0
    %v2948 = vadd.f32 0.0, %v2947
    %v2949 = vpop.f32.mrb[0].mxu0
    %v2950 = vadd.f32 0.0, %v2949
    %2951 = vdwg.mxu0
    %2952 = vmatprep.subr.mxu0 %v247
    %2953 = vmatpush1.msra.mxu0 %v246
    %2954 = vmatprep.subr.mxu0 %v251
    %2955 = vmatpush1.msra.mxu0 %v250
    %2956 = vmatprep.subr.mxu0 %v255
    %2957 = vmatpush1.msra.mxu0 %v254
    %2958 = vmatprep.subr.mxu0 %v259
    %2959 = vmatpush1.msra.mxu0 %v258
    %2960 = vmatprep.subr.mxu0 %v263
    %2961 = vmatpush1.msra.mxu0 %v262
    %2962 = vmatprep.subr.mxu0 %v267
    %2963 = vmatpush1.msra.mxu0 %v266
    %2964 = vmatprep.subr.mxu0 %v271
    %2965 = vmatpush1.msra.mxu0 %v270
    %2966 = vmatprep.subr.mxu0 %v275
    %2967 = vmatpush1.msra.mxu0 %v274
    %2968 = vmatprep.subr.mxu0 %v279
    %2969 = vmatpush1.msra.mxu0 %v278
    %2970 = vmatprep.subr.mxu0 %v283
    %2971 = vmatpush1.msra.mxu0 %v282
    %2972 = vmatprep.subr.mxu0 %v287
    %2973 = vmatpush1.msra.mxu0 %v286
    %2974 = vmatprep.subr.mxu0 %v291
    %2975 = vmatpush1.msra.mxu0 %v290
    %2976 = vmatprep.subr.mxu0 %v295
    %2977 = vmatpush1.msra.mxu0 %v294
    %2978 = vmatprep.subr.mxu0 %v299
    %2979 = vmatpush1.msra.mxu0 %v298
    %2980 = vmatprep.subr.mxu0 %v303
    %2981 = vmatpush1.msra.mxu0 %v302
    %2982 = vmatprep.subr.mxu0 %v307
    %2983 = vmatpush1.msra.mxu0 %v306
    %2984 = vmatprep.subr.mxu0 0.0
    %2985 = vmatpush1.msra.mxu0 0.0
    %2986 = vmatprep.subr.mxu0 0.0
    %2987 = vmatpush1.msra.mxu0 0.0
    %2988 = vmatprep.subr.mxu0 0.0
    %2989 = vmatpush1.msra.mxu0 0.0
    %2990 = vmatprep.subr.mxu0 0.0
    %2991 = vmatpush1.msra.mxu0 0.0
    %2992 = vmatprep.subr.mxu0 0.0
    %2993 = vmatpush1.msra.mxu0 0.0
    %2994 = vmatprep.subr.mxu0 0.0
    %2995 = vmatpush1.msra.mxu0 0.0
    %2996 = vmatprep.subr.mxu0 0.0
    %2997 = vmatpush1.msra.mxu0 0.0
    %2998 = vmatprep.subr.mxu0 0.0
    %2999 = vmatpush1.msra.mxu0 0.0
    %3000 = vmatprep.subr.mxu0 0.0
    %3001 = vmatpush1.msra.mxu0 0.0
    %3002 = vmatprep.subr.mxu0 0.0
    %3003 = vmatpush1.msra.mxu0 0.0
    %3004 = vmatprep.subr.mxu0 0.0
    %3005 = vmatpush1.msra.mxu0 0.0
    %3006 = vmatprep.subr.mxu0 0.0
    %3007 = vmatpush1.msra.mxu0 0.0
    %3008 = vmatprep.subr.mxu0 0.0
    %3009 = vmatpush1.msra.mxu0 0.0
    %3010 = vmatprep.subr.mxu0 0.0
    %3011 = vmatpush1.msra.mxu0 0.0
    %3012 = vmatprep.subr.mxu0 0.0
    %3013 = vmatpush1.msra.mxu0 0.0
    %3014 = vmatprep.subr.mxu0 0.0
    %3015 = vmatpush1.msra.mxu0 0.0
    %3016 = vmatprep.mubr.f32.mxu0 0.0
    %3017 = vmatmul.mubr.f32.gmra.mrb[0].mxu0 %v2561
    %v3018 = vpop.f32.mrb[0].mxu0
    %v3019 = vadd.f32 0.0, %v3018
    %v3020 = vpop.f32.mrb[0].mxu0
    %v3021 = vadd.f32 0.0, %v3020
    %3022 = vdwg.mxu0
    %v3023 = vadd.f32 %v2877, %v2948
    %v3024 = vadd.f32 %v2878, %v2950
    %v3025 = vadd.f32 %v2879, %v3019
    %v3026 = vadd.f32 %v2880, %v3021
    %v3027 = vxor.u32 %v3023, 2147483648
    %v3028 = vxor.u32 %v3024, 2147483648
    %v3029 = vxor.u32 %v3025, 2147483648
    %v3030 = vmul.f32 %v3027, 1.442695
    %v3031 = vpow.pop %v3030
    %v3032 = vmul.f32 %v3028, 1.442695
    %v3033 = vpow.pop %v3032
    %v3034 = vmul.f32 %v3029, 1.442695
    %v3035 = vpow.pop %v3034
    %v3036 = vadd.f32 %v3031, 1.0
    %v3037 = vadd.f32 %v3033, 1.0
    %v3038 = vadd.f32 %v3035, 1.0
    %v3039 = vrcp.pop %v3036
    %v3040 = vmul.f32 1.0, %v3039
    %v3041 = vrcp.pop %v3037
    %v3042 = vmul.f32 1.0, %v3041
    %v3043 = vrcp.pop %v3038
    %v3044 = vmul.f32 1.0, %v3043
    %v3045 = vtanh.pop %v3026
    %v3046 = vmul.f32 %v3042, %v2559
    %v3047 = vmul.f32 %v3040, %v3045
    %v3048 = vadd.f32 %v3046, %v3047
    %v3049 = vtanh.pop %v3048
    %v3050 = vmul.f32 %v3044, %v3049
    %3051 = vmatprep.subr.mxu0 %v543
    %3052 = vmatpush1.msra.mxu0 %v542
    %3053 = vmatprep.subr.mxu0 %v547
    %3054 = vmatpush1.msra.mxu0 %v546
    %3055 = vmatprep.subr.mxu0 %v551
    %3056 = vmatpush1.msra.mxu0 %v550
    %3057 = vmatprep.subr.mxu0 %v555
    %3058 = vmatpush1.msra.mxu0 %v554
    %3059 = vmatprep.subr.mxu0 %v559
    %3060 = vmatpush1.msra.mxu0 %v558
    %3061 = vmatprep.subr.mxu0 %v563
    %3062 = vmatpush1.msra.mxu0 %v562
    %3063 = vmatprep.subr.mxu0 %v567
    %3064 = vmatpush1.msra.mxu0 %v566
    %3065 = vmatprep.subr.mxu0 %v571
    %3066 = vmatpush1.msra.mxu0 %v570
    %3067 = vmatprep.subr.mxu0 %v575
    %3068 = vmatpush1.msra.mxu0 %v574
    %3069 = vmatprep.subr.mxu0 %v579
    %3070 = vmatpush1.msra.mxu0 %v578
    %3071 = vmatprep.subr.mxu0 %v583
    %3072 = vmatpush1.msra.mxu0 %v582
    %3073 = vmatprep.subr.mxu0 %v587
    %3074 = vmatpush1.msra.mxu0 %v586
    %3075 = vmatprep.subr.mxu0 %v591
    %3076 = vmatpush1.msra.mxu0 %v590
    %3077 = vmatprep.subr.mxu0 %v595
    %3078 = vmatpush1.msra.mxu0 %v594
    %3079 = vmatprep.subr.mxu0 %v599
    %3080 = vmatpush1.msra.mxu0 %v598
    %3081 = vmatprep.subr.mxu0 %v603
    %3082 = vmatpush1.msra.mxu0 %v602
    %3083 = vmatprep.subr.mxu0 0.0
    %3084 = vmatpush1.msra.mxu0 0.0
    %3085 = vmatprep.subr.mxu0 0.0
    %3086 = vmatpush1.msra.mxu0 0.0
    %3087 = vmatprep.subr.mxu0 0.0
    %3088 = vmatpush1.msra.mxu0 0.0
    %3089 = vmatprep.subr.mxu0 0.0
    %3090 = vmatpush1.msra.mxu0 0.0
    %3091 = vmatprep.subr.mxu0 0.0
    %3092 = vmatpush1.msra.mxu0 0.0
    %3093 = vmatprep.subr.mxu0 0.0
    %3094 = vmatpush1.msra.mxu0 0.0
    %3095 = vmatprep.subr.mxu0 0.0
    %3096 = vmatpush1.msra.mxu0 0.0
    %3097 = vmatprep.subr.mxu0 0.0
    %3098 = vmatpush1.msra.mxu0 0.0
    %3099 = vmatprep.subr.mxu0 0.0
    %3100 = vmatpush1.msra.mxu0 0.0
    %3101 = vmatprep.subr.mxu0 0.0
    %3102 = vmatpush1.msra.mxu0 0.0
    %3103 = vmatprep.subr.mxu0 0.0
    %3104 = vmatpush1.msra.mxu0 0.0
    %3105 = vmatprep.subr.mxu0 0.0
    %3106 = vmatpush1.msra.mxu0 0.0
    %3107 = vmatprep.subr.mxu0 0.0
    %3108 = vmatpush1.msra.mxu0 0.0
    %3109 = vmatprep.subr.mxu0 0.0
    %3110 = vmatpush1.msra.mxu0 0.0
    %3111 = vmatprep.subr.mxu0 0.0
    %3112 = vmatpush1.msra.mxu0 0.0
    %3113 = vmatprep.subr.mxu0 0.0
    %3114 = vmatpush1.msra.mxu0 0.0
    %3115 = vmatprep.mubr.f32.mxu0 0.0
    %3116 = vmatmul.mubr.f32.gmra.mrb[0].mxu0 %v2873
    %v3117 = vpop.f32.mrb[0].mxu0
    %v3118 = vadd.f32 0.0, %v3117
    %v3119 = vpop.f32.mrb[0].mxu0
    %v3120 = vadd.f32 0.0, %v3119
    %3121 = vdwg.mxu0
    %3122 = vmatprep.subr.mxu0 %v545
    %3123 = vmatpush1.msra.mxu0 %v544
    %3124 = vmatprep.subr.mxu0 %v549
    %3125 = vmatpush1.msra.mxu0 %v548
    %3126 = vmatprep.subr.mxu0 %v553
    %3127 = vmatpush1.msra.mxu0 %v552
    %3128 = vmatprep.subr.mxu0 %v557
    %3129 = vmatpush1.msra.mxu0 %v556
    %3130 = vmatprep.subr.mxu0 %v561
    %3131 = vmatpush1.msra.mxu0 %v560
    %3132 = vmatprep.subr.mxu0 %v565
    %3133 = vmatpush1.msra.mxu0 %v564
    %3134 = vmatprep.subr.mxu0 %v569
    %3135 = vmatpush1.msra.mxu0 %v568
    %3136 = vmatprep.subr.mxu0 %v573
    %3137 = vmatpush1.msra.mxu0 %v572
    %3138 = vmatprep.subr.mxu0 %v577
    %3139 = vmatpush1.msra.mxu0 %v576
    %3140 = vmatprep.subr.mxu0 %v581
    %3141 = vmatpush1.msra.mxu0 %v580
    %3142 = vmatprep.subr.mxu0 %v585
    %3143 = vmatpush1.msra.mxu0 %v584
    %3144 = vmatprep.subr.mxu0 %v589
    %3145 = vmatpush1.msra.mxu0 %v588
    %3146 = vmatprep.subr.mxu0 %v593
    %3147 = vmatpush1.msra.mxu0 %v592
    %3148 = vmatprep.subr.mxu0 %v597
    %3149 = vmatpush1.msra.mxu0 %v596
    %3150 = vmatprep.subr.mxu0 %v601
    %3151 = vmatpush1.msra.mxu0 %v600
    %3152 = vmatprep.subr.mxu0 %v605
    %3153 = vmatpush1.msra.mxu0 %v604
    %3154 = vmatprep.subr.mxu0 0.0
    %3155 = vmatpush1.msra.mxu0 0.0
    %3156 = vmatprep.subr.mxu0 0.0
    %3157 = vmatpush1.msra.mxu0 0.0
    %3158 = vmatprep.subr.mxu0 0.0
    %3159 = vmatpush1.msra.mxu0 0.0
    %3160 = vmatprep.subr.mxu0 0.0
    %3161 = vmatpush1.msra.mxu0 0.0
    %3162 = vmatprep.subr.mxu0 0.0
    %3163 = vmatpush1.msra.mxu0 0.0
    %3164 = vmatprep.subr.mxu0 0.0
    %3165 = vmatpush1.msra.mxu0 0.0
    %3166 = vmatprep.subr.mxu0 0.0
    %3167 = vmatpush1.msra.mxu0 0.0
    %3168 = vmatprep.subr.mxu0 0.0
    %3169 = vmatpush1.msra.mxu0 0.0
    %3170 = vmatprep.subr.mxu0 0.0
    %3171 = vmatpush1.msra.mxu0 0.0
    %3172 = vmatprep.subr.mxu0 0.0
    %3173 = vmatpush1.msra.mxu0 0.0
    %3174 = vmatprep.subr.mxu0 0.0
    %3175 = vmatpush1.msra.mxu0 0.0
    %3176 = vmatprep.subr.mxu0 0.0
    %3177 = vmatpush1.msra.mxu0 0.0
    %3178 = vmatprep.subr.mxu0 0.0
    %3179 = vmatpush1.msra.mxu0 0.0
    %3180 = vmatprep.subr.mxu0 0.0
    %3181 = vmatpush1.msra.mxu0 0.0
    %3182 = vmatprep.subr.mxu0 0.0
    %3183 = vmatpush1.msra.mxu0 0.0
    %3184 = vmatprep.subr.mxu0 0.0
    %3185 = vmatpush1.msra.mxu0 0.0
    %3186 = vmatprep.mubr.f32.mxu0 0.0
    %3187 = vmatmul.mubr.f32.gmra.mrb[0].mxu0 %v2873
    %v3188 = vpop.f32.mrb[0].mxu0
    %v3189 = vadd.f32 0.0, %v3188
    %v3190 = vpop.f32.mrb[0].mxu0
    %v3191 = vadd.f32 0.0, %v3190
    %3192 = vdwg.mxu0
    %3193 = vmatprep.subr.mxu0 %v479
    %3194 = vmatpush1.msra.mxu0 %v478
    %3195 = vmatprep.subr.mxu0 %v483
    %3196 = vmatpush1.msra.mxu0 %v482
    %3197 = vmatprep.subr.mxu0 %v487
    %3198 = vmatpush1.msra.mxu0 %v486
    %3199 = vmatprep.subr.mxu0 %v491
    %3200 = vmatpush1.msra.mxu0 %v490
    %3201 = vmatprep.subr.mxu0 %v495
    %3202 = vmatpush1.msra.mxu0 %v494
    %3203 = vmatprep.subr.mxu0 %v499
    %3204 = vmatpush1.msra.mxu0 %v498
    %3205 = vmatprep.subr.mxu0 %v503
    %3206 = vmatpush1.msra.mxu0 %v502
    %3207 = vmatprep.subr.mxu0 %v507
    %3208 = vmatpush1.msra.mxu0 %v506
    %3209 = vmatprep.subr.mxu0 %v511
    %3210 = vmatpush1.msra.mxu0 %v510
    %3211 = vmatprep.subr.mxu0 %v515
    %3212 = vmatpush1.msra.mxu0 %v514
    %3213 = vmatprep.subr.mxu0 %v519
    %3214 = vmatpush1.msra.mxu0 %v518
    %3215 = vmatprep.subr.mxu0 %v523
    %3216 = vmatpush1.msra.mxu0 %v522
    %3217 = vmatprep.subr.mxu0 %v527
    %3218 = vmatpush1.msra.mxu0 %v526
    %3219 = vmatprep.subr.mxu0 %v531
    %3220 = vmatpush1.msra.mxu0 %v530
    %3221 = vmatprep.subr.mxu0 %v535
    %3222 = vmatpush1.msra.mxu0 %v534
    %3223 = vmatprep.subr.mxu0 %v539
    %3224 = vmatpush1.msra.mxu0 %v538
    %3225 = vmatprep.subr.mxu0 0.0
    %3226 = vmatpush1.msra.mxu0 0.0
    %3227 = vmatprep.subr.mxu0 0.0
    %3228 = vmatpush1.msra.mxu0 0.0
    %3229 = vmatprep.subr.mxu0 0.0
    %3230 = vmatpush1.msra.mxu0 0.0
    %3231 = vmatprep.subr.mxu0 0.0
    %3232 = vmatpush1.msra.mxu0 0.0
    %3233 = vmatprep.subr.mxu0 0.0
    %3234 = vmatpush1.msra.mxu0 0.0
    %3235 = vmatprep.subr.mxu0 0.0
    %3236 = vmatpush1.msra.mxu0 0.0
    %3237 = vmatprep.subr.mxu0 0.0
    %3238 = vmatpush1.msra.mxu0 0.0
    %3239 = vmatprep.subr.mxu0 0.0
    %3240 = vmatpush1.msra.mxu0 0.0
    %3241 = vmatprep.subr.mxu0 0.0
    %3242 = vmatpush1.msra.mxu0 0.0
    %3243 = vmatprep.subr.mxu0 0.0
    %3244 = vmatpush1.msra.mxu0 0.0
    %3245 = vmatprep.subr.mxu0 0.0
    %3246 = vmatpush1.msra.mxu0 0.0
    %3247 = vmatprep.subr.mxu0 0.0
    %3248 = vmatpush1.msra.mxu0 0.0
    %3249 = vmatprep.subr.mxu0 0.0
    %3250 = vmatpush1.msra.mxu0 0.0
    %3251 = vmatprep.subr.mxu0 0.0
    %3252 = vmatpush1.msra.mxu0 0.0
    %3253 = vmatprep.subr.mxu0 0.0
    %3254 = vmatpush1.msra.mxu0 0.0
    %3255 = vmatprep.subr.mxu0 0.0
    %3256 = vmatpush1.msra.mxu0 0.0
    %3257 = vmatprep.mubr.f32.mxu0 0.0
    %3258 = vmatmul.mubr.f32.gmra.mrb[0].mxu0 %v3050
    %v3259 = vpop.f32.mrb[0].mxu0
    %v3260 = vadd.f32 %v3118, %v3259
    %v3261 = vpop.f32.mrb[0].mxu0
    %v3262 = vadd.f32 %v3120, %v3261
    %3263 = vdwg.mxu0
    %3264 = vmatprep.subr.mxu0 %v481
    %3265 = vmatpush1.msra.mxu0 %v480
    %3266 = vmatprep.subr.mxu0 %v485
    %3267 = vmatpush1.msra.mxu0 %v484
    %3268 = vmatprep.subr.mxu0 %v489
    %3269 = vmatpush1.msra.mxu0 %v488
    %3270 = vmatprep.subr.mxu0 %v493
    %3271 = vmatpush1.msra.mxu0 %v492
    %3272 = vmatprep.subr.mxu0 %v497
    %3273 = vmatpush1.msra.mxu0 %v496
    %3274 = vmatprep.subr.mxu0 %v501
    %3275 = vmatpush1.msra.mxu0 %v500
    %3276 = vmatprep.subr.mxu0 %v505
    %3277 = vmatpush1.msra.mxu0 %v504
    %3278 = vmatprep.subr.mxu0 %v509
    %3279 = vmatpush1.msra.mxu0 %v508
    %3280 = vmatprep.subr.mxu0 %v513
    %3281 = vmatpush1.msra.mxu0 %v512
    %3282 = vmatprep.subr.mxu0 %v517
    %3283 = vmatpush1.msra.mxu0 %v516
    %3284 = vmatprep.subr.mxu0 %v521
    %3285 = vmatpush1.msra.mxu0 %v520
    %3286 = vmatprep.subr.mxu0 %v525
    %3287 = vmatpush1.msra.mxu0 %v524
    %3288 = vmatprep.subr.mxu0 %v529
    %3289 = vmatpush1.msra.mxu0 %v528
    %3290 = vmatprep.subr.mxu0 %v533
    %3291 = vmatpush1.msra.mxu0 %v532
    %3292 = vmatprep.subr.mxu0 %v537
    %3293 = vmatpush1.msra.mxu0 %v536
    %3294 = vmatprep.subr.mxu0 %v541
    %3295 = vmatpush1.msra.mxu0 %v540
    %3296 = vmatprep.subr.mxu0 0.0
    %3297 = vmatpush1.msra.mxu0 0.0
    %3298 = vmatprep.subr.mxu0 0.0
    %3299 = vmatpush1.msra.mxu0 0.0
    %3300 = vmatprep.subr.mxu0 0.0
    %3301 = vmatpush1.msra.mxu0 0.0
    %3302 = vmatprep.subr.mxu0 0.0
    %3303 = vmatpush1.msra.mxu0 0.0
    %3304 = vmatprep.subr.mxu0 0.0
    %3305 = vmatpush1.msra.mxu0 0.0
    %3306 = vmatprep.subr.mxu0 0.0
    %3307 = vmatpush1.msra.mxu0 0.0
    %3308 = vmatprep.subr.mxu0 0.0
    %3309 = vmatpush1.msra.mxu0 0.0
    %3310 = vmatprep.subr.mxu0 0.0
    %3311 = vmatpush1.msra.mxu0 0.0
    %3312 = vmatprep.subr.mxu0 0.0
    %3313 = vmatpush1.msra.mxu0 0.0
    %3314 = vmatprep.subr.mxu0 0.0
    %3315 = vmatpush1.msra.mxu0 0.0
    %3316 = vmatprep.subr.mxu0 0.0
    %3317 = vmatpush1.msra.mxu0 0.0
    %3318 = vmatprep.subr.mxu0 0.0
    %3319 = vmatpush1.msra.mxu0 0.0
    %3320 = vmatprep.subr.mxu0 0.0
    %3321 = vmatpush1.msra.mxu0 0.0
    %3322 = vmatprep.subr.mxu0 0.0
    %3323 = vmatpush1.msra.mxu0 0.0
    %3324 = vmatprep.subr.mxu0 0.0
    %3325 = vmatpush1.msra.mxu0 0.0
    %3326 = vmatprep.subr.mxu0 0.0
    %3327 = vmatpush1.msra.mxu0 0.0
    %3328 = vmatprep.mubr.f32.mxu0 0.0
    %3329 = vmatmul.mubr.f32.gmra.mrb[0].mxu0 %v3050
    %v3330 = vpop.f32.mrb[0].mxu0
    %v3331 = vadd.f32 %v3189, %v3330
    %v3332 = vpop.f32.mrb[0].mxu0
    %v3333 = vadd.f32 %v3191, %v3332
    %3334 = vdwg.mxu0
    %v3335 = vadd.f32 %v3260, %v220
    %v3336 = vadd.f32 %v3262, %v224
    %v3337 = vadd.f32 %v3331, %v228
    %v3338 = vadd.f32 %v3333, %v232
    %v3339 = vxor.u32 %v3335, 2147483648
    %v3340 = vxor.u32 %v3336, 2147483648
    %v3341 = vxor.u32 %v3337, 2147483648
    %v3342 = vmul.f32 %v3339, 1.442695
    %v3343 = vpow.pop %v3342
    %v3344 = vmul.f32 %v3340, 1.442695
    %v3345 = vpow.pop %v3344
    %v3346 = vmul.f32 %v3341, 1.442695
    %v3347 = vpow.pop %v3346
    %v3348 = vadd.f32 %v3343, 1.0
    %v3349 = vadd.f32 %v3345, 1.0
    %v3350 = vadd.f32 %v3347, 1.0
    %v3351 = vrcp.pop %v3348
    %v3352 = vmul.f32 1.0, %v3351
    %v3353 = vrcp.pop %v3349
    %v3354 = vmul.f32 1.0, %v3353
    %v3355 = vrcp.pop %v3350
    %v3356 = vmul.f32 1.0, %v3355
    %v3357 = vtanh.pop %v3338
    %v3358 = vmul.f32 %v3354, %v2871
    %v3359 = vmul.f32 %v3352, %v3357
    %v3360 = vadd.f32 %v3358, %v3359
    %v3361 = vtanh.pop %v3360
    %v3362 = vmul.f32 %v3356, %v3361
    %s3363 = smul.u32 6, 4
    %s3364 = smul.addr %s3363, 8
    %s3365 = scalar_lea.vmem [#allocation2], %s3364
    %v3366 = vld [vmem:[%s3365] sm:$0xff]
    %v3367 = vld [vmem:[%s3365 + $0x8] sm:$0xff]
    %v3368 = vld [vmem:[%s3365 + $0x10] sm:$0xff]
    %v3369 = vld [vmem:[%s3365 + $0x18] sm:$0xff]
    %3370 = vmatprep.subr.mxu0 %v245
    %3371 = vmatpush1.msra.mxu0 %v244
    %3372 = vmatprep.subr.mxu0 %v249
    %3373 = vmatpush1.msra.mxu0 %v248
    %3374 = vmatprep.subr.mxu0 %v253
    %3375 = vmatpush1.msra.mxu0 %v252
    %3376 = vmatprep.subr.mxu0 %v257
    %3377 = vmatpush1.msra.mxu0 %v256
    %3378 = vmatprep.subr.mxu0 %v261
    %3379 = vmatpush1.msra.mxu0 %v260
    %3380 = vmatprep.subr.mxu0 %v265
    %3381 = vmatpush1.msra.mxu0 %v264
    %3382 = vmatprep.subr.mxu0 %v269
    %3383 = vmatpush1.msra.mxu0 %v268
    %3384 = vmatprep.subr.mxu0 %v273
    %3385 = vmatpush1.msra.mxu0 %v272
    %3386 = vmatprep.subr.mxu0 %v277
    %3387 = vmatpush1.msra.mxu0 %v276
    %3388 = vmatprep.subr.mxu0 %v281
    %3389 = vmatpush1.msra.mxu0 %v280
    %3390 = vmatprep.subr.mxu0 %v285
    %3391 = vmatpush1.msra.mxu0 %v284
    %3392 = vmatprep.subr.mxu0 %v289
    %3393 = vmatpush1.msra.mxu0 %v288
    %3394 = vmatprep.subr.mxu0 %v293
    %3395 = vmatpush1.msra.mxu0 %v292
    %3396 = vmatprep.subr.mxu0 %v297
    %3397 = vmatpush1.msra.mxu0 %v296
    %3398 = vmatprep.subr.mxu0 %v301
    %3399 = vmatpush1.msra.mxu0 %v300
    %3400 = vmatprep.subr.mxu0 %v305
    %3401 = vmatpush1.msra.mxu0 %v304
    %3402 = vmatprep.subr.mxu0 0.0
    %3403 = vmatpush1.msra.mxu0 0.0
    %3404 = vmatprep.subr.mxu0 0.0
    %3405 = vmatpush1.msra.mxu0 0.0
    %3406 = vmatprep.subr.mxu0 0.0
    %3407 = vmatpush1.msra.mxu0 0.0
    %3408 = vmatprep.subr.mxu0 0.0
    %3409 = vmatpush1.msra.mxu0 0.0
    %3410 = vmatprep.subr.mxu0 0.0
    %3411 = vmatpush1.msra.mxu0 0.0
    %3412 = vmatprep.subr.mxu0 0.0
    %3413 = vmatpush1.msra.mxu0 0.0
    %3414 = vmatprep.subr.mxu0 0.0
    %3415 = vmatpush1.msra.mxu0 0.0
    %3416 = vmatprep.subr.mxu0 0.0
    %3417 = vmatpush1.msra.mxu0 0.0
    %3418 = vmatprep.subr.mxu0 0.0
    %3419 = vmatpush1.msra.mxu0 0.0
    %3420 = vmatprep.subr.mxu0 0.0
    %3421 = vmatpush1.msra.mxu0 0.0
    %3422 = vmatprep.subr.mxu0 0.0
    %3423 = vmatpush1.msra.mxu0 0.0
    %3424 = vmatprep.subr.mxu0 0.0
    %3425 = vmatpush1.msra.mxu0 0.0
    %3426 = vmatprep.subr.mxu0 0.0
    %3427 = vmatpush1.msra.mxu0 0.0
    %3428 = vmatprep.subr.mxu0 0.0
    %3429 = vmatpush1.msra.mxu0 0.0
    %3430 = vmatprep.subr.mxu0 0.0
    %3431 = vmatpush1.msra.mxu0 0.0
    %3432 = vmatprep.subr.mxu0 0.0
    %3433 = vmatpush1.msra.mxu0 0.0
    %3434 = vmatprep.mubr.f32.mxu0 0.0
    %3435 = vmatmul.mubr.f32.gmra.mrb[0].mxu0 %v3050
    %v3436 = vpop.f32.mrb[0].mxu0
    %v3437 = vadd.f32 0.0, %v3436
    %v3438 = vpop.f32.mrb[0].mxu0
    %v3439 = vadd.f32 0.0, %v3438
    %3440 = vdwg.mxu0
    %3441 = vmatprep.subr.mxu0 %v247
    %3442 = vmatpush1.msra.mxu0 %v246
    %3443 = vmatprep.subr.mxu0 %v251
    %3444 = vmatpush1.msra.mxu0 %v250
    %3445 = vmatprep.subr.mxu0 %v255
    %3446 = vmatpush1.msra.mxu0 %v254
    %3447 = vmatprep.subr.mxu0 %v259
    %3448 = vmatpush1.msra.mxu0 %v258
    %3449 = vmatprep.subr.mxu0 %v263
    %3450 = vmatpush1.msra.mxu0 %v262
    %3451 = vmatprep.subr.mxu0 %v267
    %3452 = vmatpush1.msra.mxu0 %v266
    %3453 = vmatprep.subr.mxu0 %v271
    %3454 = vmatpush1.msra.mxu0 %v270
    %3455 = vmatprep.subr.mxu0 %v275
    %3456 = vmatpush1.msra.mxu0 %v274
    %3457 = vmatprep.subr.mxu0 %v279
    %3458 = vmatpush1.msra.mxu0 %v278
    %3459 = vmatprep.subr.mxu0 %v283
    %3460 = vmatpush1.msra.mxu0 %v282
    %3461 = vmatprep.subr.mxu0 %v287
    %3462 = vmatpush1.msra.mxu0 %v286
    %3463 = vmatprep.subr.mxu0 %v291
    %3464 = vmatpush1.msra.mxu0 %v290
    %3465 = vmatprep.subr.mxu0 %v295
    %3466 = vmatpush1.msra.mxu0 %v294
    %3467 = vmatprep.subr.mxu0 %v299
    %3468 = vmatpush1.msra.mxu0 %v298
    %3469 = vmatprep.subr.mxu0 %v303
    %3470 = vmatpush1.msra.mxu0 %v302
    %3471 = vmatprep.subr.mxu0 %v307
    %3472 = vmatpush1.msra.mxu0 %v306
    %3473 = vmatprep.subr.mxu0 0.0
    %3474 = vmatpush1.msra.mxu0 0.0
    %3475 = vmatprep.subr.mxu0 0.0
    %3476 = vmatpush1.msra.mxu0 0.0
    %3477 = vmatprep.subr.mxu0 0.0
    %3478 = vmatpush1.msra.mxu0 0.0
    %3479 = vmatprep.subr.mxu0 0.0
    %3480 = vmatpush1.msra.mxu0 0.0
    %3481 = vmatprep.subr.mxu0 0.0
    %3482 = vmatpush1.msra.mxu0 0.0
    %3483 = vmatprep.subr.mxu0 0.0
    %3484 = vmatpush1.msra.mxu0 0.0
    %3485 = vmatprep.subr.mxu0 0.0
    %3486 = vmatpush1.msra.mxu0 0.0
    %3487 = vmatprep.subr.mxu0 0.0
    %3488 = vmatpush1.msra.mxu0 0.0
    %3489 = vmatprep.subr.mxu0 0.0
    %3490 = vmatpush1.msra.mxu0 0.0
    %3491 = vmatprep.subr.mxu0 0.0
    %3492 = vmatpush1.msra.mxu0 0.0
    %3493 = vmatprep.subr.mxu0 0.0
    %3494 = vmatpush1.msra.mxu0 0.0
    %3495 = vmatprep.subr.mxu0 0.0
    %3496 = vmatpush1.msra.mxu0 0.0
    %3497 = vmatprep.subr.mxu0 0.0
    %3498 = vmatpush1.msra.mxu0 0.0
    %3499 = vmatprep.subr.mxu0 0.0
    %3500 = vmatpush1.msra.mxu0 0.0
    %3501 = vmatprep.subr.mxu0 0.0
    %3502 = vmatpush1.msra.mxu0 0.0
    %3503 = vmatprep.subr.mxu0 0.0
    %3504 = vmatpush1.msra.mxu0 0.0
    %3505 = vmatprep.mubr.f32.mxu0 0.0
    %3506 = vmatmul.mubr.f32.gmra.mrb[0].mxu0 %v3050
    %v3507 = vpop.f32.mrb[0].mxu0
    %v3508 = vadd.f32 0.0, %v3507
    %v3509 = vpop.f32.mrb[0].mxu0
    %v3510 = vadd.f32 0.0, %v3509
    %3511 = vdwg.mxu0
    %v3512 = vadd.f32 %v3366, %v3437
    %v3513 = vadd.f32 %v3367, %v3439
    %v3514 = vadd.f32 %v3368, %v3508
    %v3515 = vadd.f32 %v3369, %v3510
    %v3516 = vxor.u32 %v3512, 2147483648
    %v3517 = vxor.u32 %v3513, 2147483648
    %v3518 = vxor.u32 %v3514, 2147483648
    %v3519 = vmul.f32 %v3516, 1.442695
    %v3520 = vpow.pop %v3519
    %v3521 = vmul.f32 %v3517, 1.442695
    %v3522 = vpow.pop %v3521
    %v3523 = vmul.f32 %v3518, 1.442695
    %v3524 = vpow.pop %v3523
    %v3525 = vadd.f32 %v3520, 1.0
    %v3526 = vadd.f32 %v3522, 1.0
    %v3527 = vadd.f32 %v3524, 1.0
    %v3528 = vrcp.pop %v3525
    %v3529 = vmul.f32 1.0, %v3528
    %v3530 = vrcp.pop %v3526
    %v3531 = vmul.f32 1.0, %v3530
    %v3532 = vrcp.pop %v3527
    %v3533 = vmul.f32 1.0, %v3532
    %v3534 = vtanh.pop %v3515
    %v3535 = vmul.f32 %v3531, %v3048
    %v3536 = vmul.f32 %v3529, %v3534
    %v3537 = vadd.f32 %v3535, %v3536
    %v3538 = vtanh.pop %v3537
    %v3539 = vmul.f32 %v3533, %v3538
    %3540 = vmatprep.subr.mxu0 %v543
    %3541 = vmatpush1.msra.mxu0 %v542
    %3542 = vmatprep.subr.mxu0 %v547
    %3543 = vmatpush1.msra.mxu0 %v546
    %3544 = vmatprep.subr.mxu0 %v551
    %3545 = vmatpush1.msra.mxu0 %v550
    %3546 = vmatprep.subr.mxu0 %v555
    %3547 = vmatpush1.msra.mxu0 %v554
    %3548 = vmatprep.subr.mxu0 %v559
    %3549 = vmatpush1.msra.mxu0 %v558
    %3550 = vmatprep.subr.mxu0 %v563
    %3551 = vmatpush1.msra.mxu0 %v562
    %3552 = vmatprep.subr.mxu0 %v567
    %3553 = vmatpush1.msra.mxu0 %v566
    %3554 = vmatprep.subr.mxu0 %v571
    %3555 = vmatpush1.msra.mxu0 %v570
    %3556 = vmatprep.subr.mxu0 %v575
    %3557 = vmatpush1.msra.mxu0 %v574
    %3558 = vmatprep.subr.mxu0 %v579
    %3559 = vmatpush1.msra.mxu0 %v578
    %3560 = vmatprep.subr.mxu0 %v583
    %3561 = vmatpush1.msra.mxu0 %v582
    %3562 = vmatprep.subr.mxu0 %v587
    %3563 = vmatpush1.msra.mxu0 %v586
    %3564 = vmatprep.subr.mxu0 %v591
    %3565 = vmatpush1.msra.mxu0 %v590
    %3566 = vmatprep.subr.mxu0 %v595
    %3567 = vmatpush1.msra.mxu0 %v594
    %3568 = vmatprep.subr.mxu0 %v599
    %3569 = vmatpush1.msra.mxu0 %v598
    %3570 = vmatprep.subr.mxu0 %v603
    %3571 = vmatpush1.msra.mxu0 %v602
    %3572 = vmatprep.subr.mxu0 0.0
    %3573 = vmatpush1.msra.mxu0 0.0
    %3574 = vmatprep.subr.mxu0 0.0
    %3575 = vmatpush1.msra.mxu0 0.0
    %3576 = vmatprep.subr.mxu0 0.0
    %3577 = vmatpush1.msra.mxu0 0.0
    %3578 = vmatprep.subr.mxu0 0.0
    %3579 = vmatpush1.msra.mxu0 0.0
    %3580 = vmatprep.subr.mxu0 0.0
    %3581 = vmatpush1.msra.mxu0 0.0
    %3582 = vmatprep.subr.mxu0 0.0
    %3583 = vmatpush1.msra.mxu0 0.0
    %3584 = vmatprep.subr.mxu0 0.0
    %3585 = vmatpush1.msra.mxu0 0.0
    %3586 = vmatprep.subr.mxu0 0.0
    %3587 = vmatpush1.msra.mxu0 0.0
    %3588 = vmatprep.subr.mxu0 0.0
    %3589 = vmatpush1.msra.mxu0 0.0
    %3590 = vmatprep.subr.mxu0 0.0
    %3591 = vmatpush1.msra.mxu0 0.0
    %3592 = vmatprep.subr.mxu0 0.0
    %3593 = vmatpush1.msra.mxu0 0.0
    %3594 = vmatprep.subr.mxu0 0.0
    %3595 = vmatpush1.msra.mxu0 0.0
    %3596 = vmatprep.subr.mxu0 0.0
    %3597 = vmatpush1.msra.mxu0 0.0
    %3598 = vmatprep.subr.mxu0 0.0
    %3599 = vmatpush1.msra.mxu0 0.0
    %3600 = vmatprep.subr.mxu0 0.0
    %3601 = vmatpush1.msra.mxu0 0.0
    %3602 = vmatprep.subr.mxu0 0.0
    %3603 = vmatpush1.msra.mxu0 0.0
    %3604 = vmatprep.mubr.f32.mxu0 0.0
    %3605 = vmatmul.mubr.f32.gmra.mrb[0].mxu0 %v3362
    %v3606 = vpop.f32.mrb[0].mxu0
    %v3607 = vadd.f32 0.0, %v3606
    %v3608 = vpop.f32.mrb[0].mxu0
    %v3609 = vadd.f32 0.0, %v3608
    %3610 = vdwg.mxu0
    %3611 = vmatprep.subr.mxu0 %v545
    %3612 = vmatpush1.msra.mxu0 %v544
    %3613 = vmatprep.subr.mxu0 %v549
    %3614 = vmatpush1.msra.mxu0 %v548
    %3615 = vmatprep.subr.mxu0 %v553
    %3616 = vmatpush1.msra.mxu0 %v552
    %3617 = vmatprep.subr.mxu0 %v557
    %3618 = vmatpush1.msra.mxu0 %v556
    %3619 = vmatprep.subr.mxu0 %v561
    %3620 = vmatpush1.msra.mxu0 %v560
    %3621 = vmatprep.subr.mxu0 %v565
    %3622 = vmatpush1.msra.mxu0 %v564
    %3623 = vmatprep.subr.mxu0 %v569
    %3624 = vmatpush1.msra.mxu0 %v568
    %3625 = vmatprep.subr.mxu0 %v573
    %3626 = vmatpush1.msra.mxu0 %v572
    %3627 = vmatprep.subr.mxu0 %v577
    %3628 = vmatpush1.msra.mxu0 %v576
    %3629 = vmatprep.subr.mxu0 %v581
    %3630 = vmatpush1.msra.mxu0 %v580
    %3631 = vmatprep.subr.mxu0 %v585
    %3632 = vmatpush1.msra.mxu0 %v584
    %3633 = vmatprep.subr.mxu0 %v589
    %3634 = vmatpush1.msra.mxu0 %v588
    %3635 = vmatprep.subr.mxu0 %v593
    %3636 = vmatpush1.msra.mxu0 %v592
    %3637 = vmatprep.subr.mxu0 %v597
    %3638 = vmatpush1.msra.mxu0 %v596
    %3639 = vmatprep.subr.mxu0 %v601
    %3640 = vmatpush1.msra.mxu0 %v600
    %3641 = vmatprep.subr.mxu0 %v605
    %3642 = vmatpush1.msra.mxu0 %v604
    %3643 = vmatprep.subr.mxu0 0.0
    %3644 = vmatpush1.msra.mxu0 0.0
    %3645 = vmatprep.subr.mxu0 0.0
    %3646 = vmatpush1.msra.mxu0 0.0
    %3647 = vmatprep.subr.mxu0 0.0
    %3648 = vmatpush1.msra.mxu0 0.0
    %3649 = vmatprep.subr.mxu0 0.0
    %3650 = vmatpush1.msra.mxu0 0.0
    %3651 = vmatprep.subr.mxu0 0.0
    %3652 = vmatpush1.msra.mxu0 0.0
    %3653 = vmatprep.subr.mxu0 0.0
    %3654 = vmatpush1.msra.mxu0 0.0
    %3655 = vmatprep.subr.mxu0 0.0
    %3656 = vmatpush1.msra.mxu0 0.0
    %3657 = vmatprep.subr.mxu0 0.0
    %3658 = vmatpush1.msra.mxu0 0.0
    %3659 = vmatprep.subr.mxu0 0.0
    %3660 = vmatpush1.msra.mxu0 0.0
    %3661 = vmatprep.subr.mxu0 0.0
    %3662 = vmatpush1.msra.mxu0 0.0
    %3663 = vmatprep.subr.mxu0 0.0
    %3664 = vmatpush1.msra.mxu0 0.0
    %3665 = vmatprep.subr.mxu0 0.0
    %3666 = vmatpush1.msra.mxu0 0.0
    %3667 = vmatprep.subr.mxu0 0.0
    %3668 = vmatpush1.msra.mxu0 0.0
    %3669 = vmatprep.subr.mxu0 0.0
    %3670 = vmatpush1.msra.mxu0 0.0
    %3671 = vmatprep.subr.mxu0 0.0
    %3672 = vmatpush1.msra.mxu0 0.0
    %3673 = vmatprep.subr.mxu0 0.0
    %3674 = vmatpush1.msra.mxu0 0.0
    %3675 = vmatprep.mubr.f32.mxu0 0.0
    %3676 = vmatmul.mubr.f32.gmra.mrb[0].mxu0 %v3362
    %v3677 = vpop.f32.mrb[0].mxu0
    %v3678 = vadd.f32 0.0, %v3677
    %v3679 = vpop.f32.mrb[0].mxu0
    %v3680 = vadd.f32 0.0, %v3679
    %3681 = vdwg.mxu0
    %3682 = vmatprep.subr.mxu0 %v479
    %3683 = vmatpush1.msra.mxu0 %v478
    %3684 = vmatprep.subr.mxu0 %v483
    %3685 = vmatpush1.msra.mxu0 %v482
    %3686 = vmatprep.subr.mxu0 %v487
    %3687 = vmatpush1.msra.mxu0 %v486
    %3688 = vmatprep.subr.mxu0 %v491
    %3689 = vmatpush1.msra.mxu0 %v490
    %3690 = vmatprep.subr.mxu0 %v495
    %3691 = vmatpush1.msra.mxu0 %v494
    %3692 = vmatprep.subr.mxu0 %v499
    %3693 = vmatpush1.msra.mxu0 %v498
    %3694 = vmatprep.subr.mxu0 %v503
    %3695 = vmatpush1.msra.mxu0 %v502
    %3696 = vmatprep.subr.mxu0 %v507
    %3697 = vmatpush1.msra.mxu0 %v506
    %3698 = vmatprep.subr.mxu0 %v511
    %3699 = vmatpush1.msra.mxu0 %v510
    %3700 = vmatprep.subr.mxu0 %v515
    %3701 = vmatpush1.msra.mxu0 %v514
    %3702 = vmatprep.subr.mxu0 %v519
    %3703 = vmatpush1.msra.mxu0 %v518
    %3704 = vmatprep.subr.mxu0 %v523
    %3705 = vmatpush1.msra.mxu0 %v522
    %3706 = vmatprep.subr.mxu0 %v527
    %3707 = vmatpush1.msra.mxu0 %v526
    %3708 = vmatprep.subr.mxu0 %v531
    %3709 = vmatpush1.msra.mxu0 %v530
    %3710 = vmatprep.subr.mxu0 %v535
    %3711 = vmatpush1.msra.mxu0 %v534
    %3712 = vmatprep.subr.mxu0 %v539
    %3713 = vmatpush1.msra.mxu0 %v538
    %3714 = vmatprep.subr.mxu0 0.0
    %3715 = vmatpush1.msra.mxu0 0.0
    %3716 = vmatprep.subr.mxu0 0.0
    %3717 = vmatpush1.msra.mxu0 0.0
    %3718 = vmatprep.subr.mxu0 0.0
    %3719 = vmatpush1.msra.mxu0 0.0
    %3720 = vmatprep.subr.mxu0 0.0
    %3721 = vmatpush1.msra.mxu0 0.0
    %3722 = vmatprep.subr.mxu0 0.0
    %3723 = vmatpush1.msra.mxu0 0.0
    %3724 = vmatprep.subr.mxu0 0.0
    %3725 = vmatpush1.msra.mxu0 0.0
    %3726 = vmatprep.subr.mxu0 0.0
    %3727 = vmatpush1.msra.mxu0 0.0
    %3728 = vmatprep.subr.mxu0 0.0
    %3729 = vmatpush1.msra.mxu0 0.0
    %3730 = vmatprep.subr.mxu0 0.0
    %3731 = vmatpush1.msra.mxu0 0.0
    %3732 = vmatprep.subr.mxu0 0.0
    %3733 = vmatpush1.msra.mxu0 0.0
    %3734 = vmatprep.subr.mxu0 0.0
    %3735 = vmatpush1.msra.mxu0 0.0
    %3736 = vmatprep.subr.mxu0 0.0
    %3737 = vmatpush1.msra.mxu0 0.0
    %3738 = vmatprep.subr.mxu0 0.0
    %3739 = vmatpush1.msra.mxu0 0.0
    %3740 = vmatprep.subr.mxu0 0.0
    %3741 = vmatpush1.msra.mxu0 0.0
    %3742 = vmatprep.subr.mxu0 0.0
    %3743 = vmatpush1.msra.mxu0 0.0
    %3744 = vmatprep.subr.mxu0 0.0
    %3745 = vmatpush1.msra.mxu0 0.0
    %3746 = vmatprep.mubr.f32.mxu0 0.0
    %3747 = vmatmul.mubr.f32.gmra.mrb[0].mxu0 %v3539
    %v3748 = vpop.f32.mrb[0].mxu0
    %v3749 = vadd.f32 %v3607, %v3748
    %v3750 = vpop.f32.mrb[0].mxu0
    %v3751 = vadd.f32 %v3609, %v3750
    %3752 = vdwg.mxu0
    %3753 = vmatprep.subr.mxu0 %v481
    %3754 = vmatpush1.msra.mxu0 %v480
    %3755 = vmatprep.subr.mxu0 %v485
    %3756 = vmatpush1.msra.mxu0 %v484
    %3757 = vmatprep.subr.mxu0 %v489
    %3758 = vmatpush1.msra.mxu0 %v488
    %3759 = vmatprep.subr.mxu0 %v493
    %3760 = vmatpush1.msra.mxu0 %v492
    %3761 = vmatprep.subr.mxu0 %v497
    %3762 = vmatpush1.msra.mxu0 %v496
    %3763 = vmatprep.subr.mxu0 %v501
    %3764 = vmatpush1.msra.mxu0 %v500
    %3765 = vmatprep.subr.mxu0 %v505
    %3766 = vmatpush1.msra.mxu0 %v504
    %3767 = vmatprep.subr.mxu0 %v509
    %3768 = vmatpush1.msra.mxu0 %v508
    %3769 = vmatprep.subr.mxu0 %v513
    %3770 = vmatpush1.msra.mxu0 %v512
    %3771 = vmatprep.subr.mxu0 %v517
    %3772 = vmatpush1.msra.mxu0 %v516
    %3773 = vmatprep.subr.mxu0 %v521
    %3774 = vmatpush1.msra.mxu0 %v520
    %3775 = vmatprep.subr.mxu0 %v525
    %3776 = vmatpush1.msra.mxu0 %v524
    %3777 = vmatprep.subr.mxu0 %v529
    %3778 = vmatpush1.msra.mxu0 %v528
    %3779 = vmatprep.subr.mxu0 %v533
    %3780 = vmatpush1.msra.mxu0 %v532
    %3781 = vmatprep.subr.mxu0 %v537
    %3782 = vmatpush1.msra.mxu0 %v536
    %3783 = vmatprep.subr.mxu0 %v541
    %3784 = vmatpush1.msra.mxu0 %v540
    %3785 = vmatprep.subr.mxu0 0.0
    %3786 = vmatpush1.msra.mxu0 0.0
    %3787 = vmatprep.subr.mxu0 0.0
    %3788 = vmatpush1.msra.mxu0 0.0
    %3789 = vmatprep.subr.mxu0 0.0
    %3790 = vmatpush1.msra.mxu0 0.0
    %3791 = vmatprep.subr.mxu0 0.0
    %3792 = vmatpush1.msra.mxu0 0.0
    %3793 = vmatprep.subr.mxu0 0.0
    %3794 = vmatpush1.msra.mxu0 0.0
    %3795 = vmatprep.subr.mxu0 0.0
    %3796 = vmatpush1.msra.mxu0 0.0
    %3797 = vmatprep.subr.mxu0 0.0
    %3798 = vmatpush1.msra.mxu0 0.0
    %3799 = vmatprep.subr.mxu0 0.0
    %3800 = vmatpush1.msra.mxu0 0.0
    %3801 = vmatprep.subr.mxu0 0.0
    %3802 = vmatpush1.msra.mxu0 0.0
    %3803 = vmatprep.subr.mxu0 0.0
    %3804 = vmatpush1.msra.mxu0 0.0
    %3805 = vmatprep.subr.mxu0 0.0
    %3806 = vmatpush1.msra.mxu0 0.0
    %3807 = vmatprep.subr.mxu0 0.0
    %3808 = vmatpush1.msra.mxu0 0.0
    %3809 = vmatprep.subr.mxu0 0.0
    %3810 = vmatpush1.msra.mxu0 0.0
    %3811 = vmatprep.subr.mxu0 0.0
    %3812 = vmatpush1.msra.mxu0 0.0
    %3813 = vmatprep.subr.mxu0 0.0
    %3814 = vmatpush1.msra.mxu0 0.0
    %3815 = vmatprep.subr.mxu0 0.0
    %3816 = vmatpush1.msra.mxu0 0.0
    %3817 = vmatprep.mubr.f32.mxu0 0.0
    %3818 = vmatmul.mubr.f32.gmra.mrb[0].mxu0 %v3539
    %v3819 = vpop.f32.mrb[0].mxu0
    %v3820 = vadd.f32 %v3678, %v3819
    %v3821 = vpop.f32.mrb[0].mxu0
    %v3822 = vadd.f32 %v3680, %v3821
    %3823 = vdwg.mxu0
    %v3824 = vadd.f32 %v3749, %v220
    %v3825 = vadd.f32 %v3751, %v224
    %v3826 = vadd.f32 %v3820, %v228
    %v3827 = vadd.f32 %v3822, %v232
    %v3828 = vxor.u32 %v3824, 2147483648
    %v3829 = vxor.u32 %v3825, 2147483648
    %v3830 = vxor.u32 %v3826, 2147483648
    %v3831 = vmul.f32 %v3828, 1.442695
    %v3832 = vpow.pop %v3831
    %v3833 = vmul.f32 %v3829, 1.442695
    %v3834 = vpow.pop %v3833
    %v3835 = vmul.f32 %v3830, 1.442695
    %v3836 = vpow.pop %v3835
    %v3837 = vadd.f32 %v3832, 1.0
    %v3838 = vadd.f32 %v3834, 1.0
    %v3839 = vadd.f32 %v3836, 1.0
    %v3840 = vrcp.pop %v3837
    %v3841 = vmul.f32 1.0, %v3840
    %v3842 = vrcp.pop %v3838
    %v3843 = vmul.f32 1.0, %v3842
    %v3844 = vrcp.pop %v3839
    %v3845 = vmul.f32 1.0, %v3844
    %v3846 = vtanh.pop %v3827
    %v3847 = vmul.f32 %v3843, %v3360
    %v3848 = vmul.f32 %v3841, %v3846
    %v3849 = vadd.f32 %v3847, %v3848
    %v3850 = vtanh.pop %v3849
    %v3851 = vmul.f32 %v3845, %v3850
    %s3852 = smul.u32 7, 4
    %s3853 = smul.addr %s3852, 8
    %s3854 = scalar_lea.vmem [#allocation2], %s3853
    %v3855 = vld [vmem:[%s3854] sm:$0xff]
    %v3856 = vld [vmem:[%s3854 + $0x8] sm:$0xff]
    %v3857 = vld [vmem:[%s3854 + $0x10] sm:$0xff]
    %v3858 = vld [vmem:[%s3854 + $0x18] sm:$0xff]
    %3859 = vmatprep.subr.mxu0 %v245
    %3860 = vmatpush1.msra.mxu0 %v244
    %3861 = vmatprep.subr.mxu0 %v249
    %3862 = vmatpush1.msra.mxu0 %v248
    %3863 = vmatprep.subr.mxu0 %v253
    %3864 = vmatpush1.msra.mxu0 %v252
    %3865 = vmatprep.subr.mxu0 %v257
    %3866 = vmatpush1.msra.mxu0 %v256
    %3867 = vmatprep.subr.mxu0 %v261
    %3868 = vmatpush1.msra.mxu0 %v260
    %3869 = vmatprep.subr.mxu0 %v265
    %3870 = vmatpush1.msra.mxu0 %v264
    %3871 = vmatprep.subr.mxu0 %v269
    %3872 = vmatpush1.msra.mxu0 %v268
    %3873 = vmatprep.subr.mxu0 %v273
    %3874 = vmatpush1.msra.mxu0 %v272
    %3875 = vmatprep.subr.mxu0 %v277
    %3876 = vmatpush1.msra.mxu0 %v276
    %3877 = vmatprep.subr.mxu0 %v281
    %3878 = vmatpush1.msra.mxu0 %v280
    %3879 = vmatprep.subr.mxu0 %v285
    %3880 = vmatpush1.msra.mxu0 %v284
    %3881 = vmatprep.subr.mxu0 %v289
    %3882 = vmatpush1.msra.mxu0 %v288
    %3883 = vmatprep.subr.mxu0 %v293
    %3884 = vmatpush1.msra.mxu0 %v292
    %3885 = vmatprep.subr.mxu0 %v297
    %3886 = vmatpush1.msra.mxu0 %v296
    %3887 = vmatprep.subr.mxu0 %v301
    %3888 = vmatpush1.msra.mxu0 %v300
    %3889 = vmatprep.subr.mxu0 %v305
    %3890 = vmatpush1.msra.mxu0 %v304
    %3891 = vmatprep.subr.mxu0 0.0
    %3892 = vmatpush1.msra.mxu0 0.0
    %3893 = vmatprep.subr.mxu0 0.0
    %3894 = vmatpush1.msra.mxu0 0.0
    %3895 = vmatprep.subr.mxu0 0.0
    %3896 = vmatpush1.msra.mxu0 0.0
    %3897 = vmatprep.subr.mxu0 0.0
    %3898 = vmatpush1.msra.mxu0 0.0
    %3899 = vmatprep.subr.mxu0 0.0
    %3900 = vmatpush1.msra.mxu0 0.0
    %3901 = vmatprep.subr.mxu0 0.0
    %3902 = vmatpush1.msra.mxu0 0.0
    %3903 = vmatprep.subr.mxu0 0.0
    %3904 = vmatpush1.msra.mxu0 0.0
    %3905 = vmatprep.subr.mxu0 0.0
    %3906 = vmatpush1.msra.mxu0 0.0
    %3907 = vmatprep.subr.mxu0 0.0
    %3908 = vmatpush1.msra.mxu0 0.0
    %3909 = vmatprep.subr.mxu0 0.0
    %3910 = vmatpush1.msra.mxu0 0.0
    %3911 = vmatprep.subr.mxu0 0.0
    %3912 = vmatpush1.msra.mxu0 0.0
    %3913 = vmatprep.subr.mxu0 0.0
    %3914 = vmatpush1.msra.mxu0 0.0
    %3915 = vmatprep.subr.mxu0 0.0
    %3916 = vmatpush1.msra.mxu0 0.0
    %3917 = vmatprep.subr.mxu0 0.0
    %3918 = vmatpush1.msra.mxu0 0.0
    %3919 = vmatprep.subr.mxu0 0.0
    %3920 = vmatpush1.msra.mxu0 0.0
    %3921 = vmatprep.subr.mxu0 0.0
    %3922 = vmatpush1.msra.mxu0 0.0
    %3923 = vmatprep.mubr.f32.mxu0 0.0
    %3924 = vmatmul.mubr.f32.gmra.mrb[0].mxu0 %v3539
    %v3925 = vpop.f32.mrb[0].mxu0
    %v3926 = vadd.f32 0.0, %v3925
    %v3927 = vpop.f32.mrb[0].mxu0
    %v3928 = vadd.f32 0.0, %v3927
    %3929 = vdwg.mxu0
    %3930 = vmatprep.subr.mxu0 %v247
    %3931 = vmatpush1.msra.mxu0 %v246
    %3932 = vmatprep.subr.mxu0 %v251
    %3933 = vmatpush1.msra.mxu0 %v250
    %3934 = vmatprep.subr.mxu0 %v255
    %3935 = vmatpush1.msra.mxu0 %v254
    %3936 = vmatprep.subr.mxu0 %v259
    %3937 = vmatpush1.msra.mxu0 %v258
    %3938 = vmatprep.subr.mxu0 %v263
    %3939 = vmatpush1.msra.mxu0 %v262
    %3940 = vmatprep.subr.mxu0 %v267
    %3941 = vmatpush1.msra.mxu0 %v266
    %3942 = vmatprep.subr.mxu0 %v271
    %3943 = vmatpush1.msra.mxu0 %v270
    %3944 = vmatprep.subr.mxu0 %v275
    %3945 = vmatpush1.msra.mxu0 %v274
    %3946 = vmatprep.subr.mxu0 %v279
    %3947 = vmatpush1.msra.mxu0 %v278
    %3948 = vmatprep.subr.mxu0 %v283
    %3949 = vmatpush1.msra.mxu0 %v282
    %3950 = vmatprep.subr.mxu0 %v287
    %3951 = vmatpush1.msra.mxu0 %v286
    %3952 = vmatprep.subr.mxu0 %v291
    %3953 = vmatpush1.msra.mxu0 %v290
    %3954 = vmatprep.subr.mxu0 %v295
    %3955 = vmatpush1.msra.mxu0 %v294
    %3956 = vmatprep.subr.mxu0 %v299
    %3957 = vmatpush1.msra.mxu0 %v298
    %3958 = vmatprep.subr.mxu0 %v303
    %3959 = vmatpush1.msra.mxu0 %v302
    %3960 = vmatprep.subr.mxu0 %v307
    %3961 = vmatpush1.msra.mxu0 %v306
    %3962 = vmatprep.subr.mxu0 0.0
    %3963 = vmatpush1.msra.mxu0 0.0
    %3964 = vmatprep.subr.mxu0 0.0
    %3965 = vmatpush1.msra.mxu0 0.0
    %3966 = vmatprep.subr.mxu0 0.0
    %3967 = vmatpush1.msra.mxu0 0.0
    %3968 = vmatprep.subr.mxu0 0.0
    %3969 = vmatpush1.msra.mxu0 0.0
    %3970 = vmatprep.subr.mxu0 0.0
    %3971 = vmatpush1.msra.mxu0 0.0
    %3972 = vmatprep.subr.mxu0 0.0
    %3973 = vmatpush1.msra.mxu0 0.0
    %3974 = vmatprep.subr.mxu0 0.0
    %3975 = vmatpush1.msra.mxu0 0.0
    %3976 = vmatprep.subr.mxu0 0.0
    %3977 = vmatpush1.msra.mxu0 0.0
    %3978 = vmatprep.subr.mxu0 0.0
    %3979 = vmatpush1.msra.mxu0 0.0
    %3980 = vmatprep.subr.mxu0 0.0
    %3981 = vmatpush1.msra.mxu0 0.0
    %3982 = vmatprep.subr.mxu0 0.0
    %3983 = vmatpush1.msra.mxu0 0.0
    %3984 = vmatprep.subr.mxu0 0.0
    %3985 = vmatpush1.msra.mxu0 0.0
    %3986 = vmatprep.subr.mxu0 0.0
    %3987 = vmatpush1.msra.mxu0 0.0
    %3988 = vmatprep.subr.mxu0 0.0
    %3989 = vmatpush1.msra.mxu0 0.0
    %3990 = vmatprep.subr.mxu0 0.0
    %3991 = vmatpush1.msra.mxu0 0.0
    %3992 = vmatprep.subr.mxu0 0.0
    %3993 = vmatpush1.msra.mxu0 0.0
    %3994 = vmatprep.mubr.f32.mxu0 0.0
    %3995 = vmatmul.mubr.f32.gmra.mrb[0].mxu0 %v3539
    %v3996 = vpop.f32.mrb[0].mxu0
    %v3997 = vadd.f32 0.0, %v3996
    %v3998 = vpop.f32.mrb[0].mxu0
    %v3999 = vadd.f32 0.0, %v3998
    %4000 = vdwg.mxu0
    %v4001 = vadd.f32 %v3855, %v3926
    %v4002 = vadd.f32 %v3856, %v3928
    %v4003 = vadd.f32 %v3857, %v3997
    %v4004 = vadd.f32 %v3858, %v3999
    %v4005 = vxor.u32 %v4001, 2147483648
    %v4006 = vxor.u32 %v4002, 2147483648
    %v4007 = vxor.u32 %v4003, 2147483648
    %v4008 = vmul.f32 %v4005, 1.442695
    %v4009 = vpow.pop %v4008
    %v4010 = vmul.f32 %v4006, 1.442695
    %v4011 = vpow.pop %v4010
    %v4012 = vmul.f32 %v4007, 1.442695
    %v4013 = vpow.pop %v4012
    %v4014 = vadd.f32 %v4009, 1.0
    %v4015 = vadd.f32 %v4011, 1.0
    %v4016 = vadd.f32 %v4013, 1.0
    %v4017 = vrcp.pop %v4014
    %v4018 = vmul.f32 1.0, %v4017
    %v4019 = vrcp.pop %v4015
    %v4020 = vmul.f32 1.0, %v4019
    %v4021 = vrcp.pop %v4016
    %v4022 = vmul.f32 1.0, %v4021
    %v4023 = vtanh.pop %v4004
    %v4024 = vmul.f32 %v4020, %v3537
    %v4025 = vmul.f32 %v4018, %v4023
    %v4026 = vadd.f32 %v4024, %v4025
    %v4027 = vtanh.pop %v4026
    %v4028 = vmul.f32 %v4022, %v4027
    %4029 = vmatprep.subr.mxu0 %v543
    %4030 = vmatpush1.msra.mxu0 %v542
    %4031 = vmatprep.subr.mxu0 %v547
    %4032 = vmatpush1.msra.mxu0 %v546
    %4033 = vmatprep.subr.mxu0 %v551
    %4034 = vmatpush1.msra.mxu0 %v550
    %4035 = vmatprep.subr.mxu0 %v555
    %4036 = vmatpush1.msra.mxu0 %v554
    %4037 = vmatprep.subr.mxu0 %v559
    %4038 = vmatpush1.msra.mxu0 %v558
    %4039 = vmatprep.subr.mxu0 %v563
    %4040 = vmatpush1.msra.mxu0 %v562
    %4041 = vmatprep.subr.mxu0 %v567
    %4042 = vmatpush1.msra.mxu0 %v566
    %4043 = vmatprep.subr.mxu0 %v571
    %4044 = vmatpush1.msra.mxu0 %v570
    %4045 = vmatprep.subr.mxu0 %v575
    %4046 = vmatpush1.msra.mxu0 %v574
    %4047 = vmatprep.subr.mxu0 %v579
    %4048 = vmatpush1.msra.mxu0 %v578
    %4049 = vmatprep.subr.mxu0 %v583
    %4050 = vmatpush1.msra.mxu0 %v582
    %4051 = vmatprep.subr.mxu0 %v587
    %4052 = vmatpush1.msra.mxu0 %v586
    %4053 = vmatprep.subr.mxu0 %v591
    %4054 = vmatpush1.msra.mxu0 %v590
    %4055 = vmatprep.subr.mxu0 %v595
    %4056 = vmatpush1.msra.mxu0 %v594
    %4057 = vmatprep.subr.mxu0 %v599
    %4058 = vmatpush1.msra.mxu0 %v598
    %4059 = vmatprep.subr.mxu0 %v603
    %4060 = vmatpush1.msra.mxu0 %v602
    %4061 = vmatprep.subr.mxu0 0.0
    %4062 = vmatpush1.msra.mxu0 0.0
    %4063 = vmatprep.subr.mxu0 0.0
    %4064 = vmatpush1.msra.mxu0 0.0
    %4065 = vmatprep.subr.mxu0 0.0
    %4066 = vmatpush1.msra.mxu0 0.0
    %4067 = vmatprep.subr.mxu0 0.0
    %4068 = vmatpush1.msra.mxu0 0.0
    %4069 = vmatprep.subr.mxu0 0.0
    %4070 = vmatpush1.msra.mxu0 0.0
    %4071 = vmatprep.subr.mxu0 0.0
    %4072 = vmatpush1.msra.mxu0 0.0
    %4073 = vmatprep.subr.mxu0 0.0
    %4074 = vmatpush1.msra.mxu0 0.0
    %4075 = vmatprep.subr.mxu0 0.0
    %4076 = vmatpush1.msra.mxu0 0.0
    %4077 = vmatprep.subr.mxu0 0.0
    %4078 = vmatpush1.msra.mxu0 0.0
    %4079 = vmatprep.subr.mxu0 0.0
    %4080 = vmatpush1.msra.mxu0 0.0
    %4081 = vmatprep.subr.mxu0 0.0
    %4082 = vmatpush1.msra.mxu0 0.0
    %4083 = vmatprep.subr.mxu0 0.0
    %4084 = vmatpush1.msra.mxu0 0.0
    %4085 = vmatprep.subr.mxu0 0.0
    %4086 = vmatpush1.msra.mxu0 0.0
    %4087 = vmatprep.subr.mxu0 0.0
    %4088 = vmatpush1.msra.mxu0 0.0
    %4089 = vmatprep.subr.mxu0 0.0
    %4090 = vmatpush1.msra.mxu0 0.0
    %4091 = vmatprep.subr.mxu0 0.0
    %4092 = vmatpush1.msra.mxu0 0.0
    %4093 = vmatprep.mubr.f32.mxu0 0.0
    %4094 = vmatmul.mubr.f32.gmra.mrb[0].mxu0 %v3851
    %v4095 = vpop.f32.mrb[0].mxu0
    %v4096 = vadd.f32 0.0, %v4095
    %v4097 = vpop.f32.mrb[0].mxu0
    %v4098 = vadd.f32 0.0, %v4097
    %4099 = vdwg.mxu0
    %4100 = vmatprep.subr.mxu0 %v545
    %4101 = vmatpush1.msra.mxu0 %v544
    %4102 = vmatprep.subr.mxu0 %v549
    %4103 = vmatpush1.msra.mxu0 %v548
    %4104 = vmatprep.subr.mxu0 %v553
    %4105 = vmatpush1.msra.mxu0 %v552
    %4106 = vmatprep.subr.mxu0 %v557
    %4107 = vmatpush1.msra.mxu0 %v556
    %4108 = vmatprep.subr.mxu0 %v561
    %4109 = vmatpush1.msra.mxu0 %v560
    %4110 = vmatprep.subr.mxu0 %v565
    %4111 = vmatpush1.msra.mxu0 %v564
    %4112 = vmatprep.subr.mxu0 %v569
    %4113 = vmatpush1.msra.mxu0 %v568
    %4114 = vmatprep.subr.mxu0 %v573
    %4115 = vmatpush1.msra.mxu0 %v572
    %4116 = vmatprep.subr.mxu0 %v577
    %4117 = vmatpush1.msra.mxu0 %v576
    %4118 = vmatprep.subr.mxu0 %v581
    %4119 = vmatpush1.msra.mxu0 %v580
    %4120 = vmatprep.subr.mxu0 %v585
    %4121 = vmatpush1.msra.mxu0 %v584
    %4122 = vmatprep.subr.mxu0 %v589
    %4123 = vmatpush1.msra.mxu0 %v588
    %4124 = vmatprep.subr.mxu0 %v593
    %4125 = vmatpush1.msra.mxu0 %v592
    %4126 = vmatprep.subr.mxu0 %v597
    %4127 = vmatpush1.msra.mxu0 %v596
    %4128 = vmatprep.subr.mxu0 %v601
    %4129 = vmatpush1.msra.mxu0 %v600
    %4130 = vmatprep.subr.mxu0 %v605
    %4131 = vmatpush1.msra.mxu0 %v604
    %4132 = vmatprep.subr.mxu0 0.0
    %4133 = vmatpush1.msra.mxu0 0.0
    %4134 = vmatprep.subr.mxu0 0.0
    %4135 = vmatpush1.msra.mxu0 0.0
    %4136 = vmatprep.subr.mxu0 0.0
    %4137 = vmatpush1.msra.mxu0 0.0
    %4138 = vmatprep.subr.mxu0 0.0
    %4139 = vmatpush1.msra.mxu0 0.0
    %4140 = vmatprep.subr.mxu0 0.0
    %4141 = vmatpush1.msra.mxu0 0.0
    %4142 = vmatprep.subr.mxu0 0.0
    %4143 = vmatpush1.msra.mxu0 0.0
    %4144 = vmatprep.subr.mxu0 0.0
    %4145 = vmatpush1.msra.mxu0 0.0
    %4146 = vmatprep.subr.mxu0 0.0
    %4147 = vmatpush1.msra.mxu0 0.0
    %4148 = vmatprep.subr.mxu0 0.0
    %4149 = vmatpush1.msra.mxu0 0.0
    %4150 = vmatprep.subr.mxu0 0.0
    %4151 = vmatpush1.msra.mxu0 0.0
    %4152 = vmatprep.subr.mxu0 0.0
    %4153 = vmatpush1.msra.mxu0 0.0
    %4154 = vmatprep.subr.mxu0 0.0
    %4155 = vmatpush1.msra.mxu0 0.0
    %4156 = vmatprep.subr.mxu0 0.0
    %4157 = vmatpush1.msra.mxu0 0.0
    %4158 = vmatprep.subr.mxu0 0.0
    %4159 = vmatpush1.msra.mxu0 0.0
    %4160 = vmatprep.subr.mxu0 0.0
    %4161 = vmatpush1.msra.mxu0 0.0
    %4162 = vmatprep.subr.mxu0 0.0
    %4163 = vmatpush1.msra.mxu0 0.0
    %4164 = vmatprep.mubr.f32.mxu0 0.0
    %4165 = vmatmul.mubr.f32.gmra.mrb[0].mxu0 %v3851
    %v4166 = vpop.f32.mrb[0].mxu0
    %v4167 = vadd.f32 0.0, %v4166
    %v4168 = vpop.f32.mrb[0].mxu0
    %v4169 = vadd.f32 0.0, %v4168
    %4170 = vdwg.mxu0
    %4171 = vmatprep.subr.mxu0 %v479
    %4172 = vmatpush1.msra.mxu0 %v478
    %4173 = vmatprep.subr.mxu0 %v483
    %4174 = vmatpush1.msra.mxu0 %v482
    %4175 = vmatprep.subr.mxu0 %v487
    %4176 = vmatpush1.msra.mxu0 %v486
    %4177 = vmatprep.subr.mxu0 %v491
    %4178 = vmatpush1.msra.mxu0 %v490
    %4179 = vmatprep.subr.mxu0 %v495
    %4180 = vmatpush1.msra.mxu0 %v494
    %4181 = vmatprep.subr.mxu0 %v499
    %4182 = vmatpush1.msra.mxu0 %v498
    %4183 = vmatprep.subr.mxu0 %v503
    %4184 = vmatpush1.msra.mxu0 %v502
    %4185 = vmatprep.subr.mxu0 %v507
    %4186 = vmatpush1.msra.mxu0 %v506
    %4187 = vmatprep.subr.mxu0 %v511
    %4188 = vmatpush1.msra.mxu0 %v510
    %4189 = vmatprep.subr.mxu0 %v515
    %4190 = vmatpush1.msra.mxu0 %v514
    %4191 = vmatprep.subr.mxu0 %v519
    %4192 = vmatpush1.msra.mxu0 %v518
    %4193 = vmatprep.subr.mxu0 %v523
    %4194 = vmatpush1.msra.mxu0 %v522
    %4195 = vmatprep.subr.mxu0 %v527
    %4196 = vmatpush1.msra.mxu0 %v526
    %4197 = vmatprep.subr.mxu0 %v531
    %4198 = vmatpush1.msra.mxu0 %v530
    %4199 = vmatprep.subr.mxu0 %v535
    %4200 = vmatpush1.msra.mxu0 %v534
    %4201 = vmatprep.subr.mxu0 %v539
    %4202 = vmatpush1.msra.mxu0 %v538
    %4203 = vmatprep.subr.mxu0 0.0
    %4204 = vmatpush1.msra.mxu0 0.0
    %4205 = vmatprep.subr.mxu0 0.0
    %4206 = vmatpush1.msra.mxu0 0.0
    %4207 = vmatprep.subr.mxu0 0.0
    %4208 = vmatpush1.msra.mxu0 0.0
    %4209 = vmatprep.subr.mxu0 0.0
    %4210 = vmatpush1.msra.mxu0 0.0
    %4211 = vmatprep.subr.mxu0 0.0
    %4212 = vmatpush1.msra.mxu0 0.0
    %4213 = vmatprep.subr.mxu0 0.0
    %4214 = vmatpush1.msra.mxu0 0.0
    %4215 = vmatprep.subr.mxu0 0.0
    %4216 = vmatpush1.msra.mxu0 0.0
    %4217 = vmatprep.subr.mxu0 0.0
    %4218 = vmatpush1.msra.mxu0 0.0
    %4219 = vmatprep.subr.mxu0 0.0
    %4220 = vmatpush1.msra.mxu0 0.0
    %4221 = vmatprep.subr.mxu0 0.0
    %4222 = vmatpush1.msra.mxu0 0.0
    %4223 = vmatprep.subr.mxu0 0.0
    %4224 = vmatpush1.msra.mxu0 0.0
    %4225 = vmatprep.subr.mxu0 0.0
    %4226 = vmatpush1.msra.mxu0 0.0
    %4227 = vmatprep.subr.mxu0 0.0
    %4228 = vmatpush1.msra.mxu0 0.0
    %4229 = vmatprep.subr.mxu0 0.0
    %4230 = vmatpush1.msra.mxu0 0.0
    %4231 = vmatprep.subr.mxu0 0.0
    %4232 = vmatpush1.msra.mxu0 0.0
    %4233 = vmatprep.subr.mxu0 0.0
    %4234 = vmatpush1.msra.mxu0 0.0
    %4235 = vmatprep.mubr.f32.mxu0 0.0
    %4236 = vmatmul.mubr.f32.gmra.mrb[0].mxu0 %v4028
    %v4237 = vpop.f32.mrb[0].mxu0
    %v4238 = vadd.f32 %v4096, %v4237
    %v4239 = vpop.f32.mrb[0].mxu0
    %v4240 = vadd.f32 %v4098, %v4239
    %4241 = vdwg.mxu0
    %4242 = vmatprep.subr.mxu0 %v481
    %4243 = vmatpush1.msra.mxu0 %v480
    %4244 = vmatprep.subr.mxu0 %v485
    %4245 = vmatpush1.msra.mxu0 %v484
    %4246 = vmatprep.subr.mxu0 %v489
    %4247 = vmatpush1.msra.mxu0 %v488
    %4248 = vmatprep.subr.mxu0 %v493
    %4249 = vmatpush1.msra.mxu0 %v492
    %4250 = vmatprep.subr.mxu0 %v497
    %4251 = vmatpush1.msra.mxu0 %v496
    %4252 = vmatprep.subr.mxu0 %v501
    %4253 = vmatpush1.msra.mxu0 %v500
    %4254 = vmatprep.subr.mxu0 %v505
    %4255 = vmatpush1.msra.mxu0 %v504
    %4256 = vmatprep.subr.mxu0 %v509
    %4257 = vmatpush1.msra.mxu0 %v508
    %4258 = vmatprep.subr.mxu0 %v513
    %4259 = vmatpush1.msra.mxu0 %v512
    %4260 = vmatprep.subr.mxu0 %v517
    %4261 = vmatpush1.msra.mxu0 %v516
    %4262 = vmatprep.subr.mxu0 %v521
    %4263 = vmatpush1.msra.mxu0 %v520
    %4264 = vmatprep.subr.mxu0 %v525
    %4265 = vmatpush1.msra.mxu0 %v524
    %4266 = vmatprep.subr.mxu0 %v529
    %4267 = vmatpush1.msra.mxu0 %v528
    %4268 = vmatprep.subr.mxu0 %v533
    %4269 = vmatpush1.msra.mxu0 %v532
    %4270 = vmatprep.subr.mxu0 %v537
    %4271 = vmatpush1.msra.mxu0 %v536
    %4272 = vmatprep.subr.mxu0 %v541
    %4273 = vmatpush1.msra.mxu0 %v540
    %4274 = vmatprep.subr.mxu0 0.0
    %4275 = vmatpush1.msra.mxu0 0.0
    %4276 = vmatprep.subr.mxu0 0.0
    %4277 = vmatpush1.msra.mxu0 0.0
    %4278 = vmatprep.subr.mxu0 0.0
    %4279 = vmatpush1.msra.mxu0 0.0
    %4280 = vmatprep.subr.mxu0 0.0
    %4281 = vmatpush1.msra.mxu0 0.0
    %4282 = vmatprep.subr.mxu0 0.0
    %4283 = vmatpush1.msra.mxu0 0.0
    %4284 = vmatprep.subr.mxu0 0.0
    %4285 = vmatpush1.msra.mxu0 0.0
    %4286 = vmatprep.subr.mxu0 0.0
    %4287 = vmatpush1.msra.mxu0 0.0
    %4288 = vmatprep.subr.mxu0 0.0
    %4289 = vmatpush1.msra.mxu0 0.0
    %4290 = vmatprep.subr.mxu0 0.0
    %4291 = vmatpush1.msra.mxu0 0.0
    %4292 = vmatprep.subr.mxu0 0.0
    %4293 = vmatpush1.msra.mxu0 0.0
    %4294 = vmatprep.subr.mxu0 0.0
    %4295 = vmatpush1.msra.mxu0 0.0
    %4296 = vmatprep.subr.mxu0 0.0
    %4297 = vmatpush1.msra.mxu0 0.0
    %4298 = vmatprep.subr.mxu0 0.0
    %4299 = vmatpush1.msra.mxu0 0.0
    %4300 = vmatprep.subr.mxu0 0.0
    %4301 = vmatpush1.msra.mxu0 0.0
    %4302 = vmatprep.subr.mxu0 0.0
    %4303 = vmatpush1.msra.mxu0 0.0
    %4304 = vmatprep.subr.mxu0 0.0
    %4305 = vmatpush1.msra.mxu0 0.0
    %4306 = vmatprep.mubr.f32.mxu0 0.0
    %4307 = vmatmul.mubr.f32.gmra.mrb[0].mxu0 %v4028
    %v4308 = vpop.f32.mrb[0].mxu0
    %v4309 = vadd.f32 %v4167, %v4308
    %v4310 = vpop.f32.mrb[0].mxu0
    %v4311 = vadd.f32 %v4169, %v4310
    %4312 = vdwg.mxu0
    %v4313 = vadd.f32 %v4238, %v220
    %v4314 = vadd.f32 %v4240, %v224
    %v4315 = vadd.f32 %v4309, %v228
    %v4316 = vadd.f32 %v4311, %v232
    %v4317 = vxor.u32 %v4313, 2147483648
    %v4318 = vxor.u32 %v4314, 2147483648
    %v4319 = vxor.u32 %v4315, 2147483648
    %v4320 = vmul.f32 %v4317, 1.442695
    %v4321 = vpow.pop %v4320
    %v4322 = vmul.f32 %v4318, 1.442695
    %v4323 = vpow.pop %v4322
    %v4324 = vmul.f32 %v4319, 1.442695
    %v4325 = vpow.pop %v4324
    %v4326 = vadd.f32 %v4321, 1.0
    %v4327 = vadd.f32 %v4323, 1.0
    %v4328 = vadd.f32 %v4325, 1.0
    %v4329 = vrcp.pop %v4326
    %v4330 = vmul.f32 1.0, %v4329
    %v4331 = vrcp.pop %v4327
    %v4332 = vmul.f32 1.0, %v4331
    %v4333 = vrcp.pop %v4328
    %v4334 = vmul.f32 1.0, %v4333
    %v4335 = vtanh.pop %v4316
    %v4336 = vmul.f32 %v4332, %v3849
    %v4337 = vmul.f32 %v4330, %v4335
    %v4338 = vadd.f32 %v4336, %v4337
    %v4339 = vtanh.pop %v4338
    %v4340 = vmul.f32 %v4334, %v4339
    %v4341 = vld [vmem:[#allocation3 + $0x660] ss:$0 sm:$0xff]
    %v4342 = vmul.f32 %v4340, %v4341
    %4343 = vadd.xlane.f32.xlu0 %v4342
    %v4344 = vpop.xlane.xlu0 %4343
    %v4345 = vld [vmem:[#allocation3 + $0x680] ss:$0 sm:$0xff]
    %v4346 = vadd.f32 %v4344, %v4345
    %vm4347 = vcmask 7168
    %4348 = vst.msk [vmem:[%s2] sm:$0xff] %vm4347, %v4346
    // Predicated region
    $region14: #{tpu_custom_call.1} parent=1 // pred_check
      _
    $region15: #{tpu_custom_call.1} parent=1 // pred_check_branch
      %4350 = sbr.rel (0) target = $region17
    $region16: #{tpu_custom_call.1} parent=1 // pred_region
      _
    $region17: #{tpu_custom_call.1} parent=1 // pred_fallthru
      _
    // Predicated region
    $region18: #{tpu_custom_call.1} parent=1 // pred_check
      _
    $region19: #{tpu_custom_call.1} parent=1 // pred_check_branch
      %4352 = sbr.rel (0) target = $region21
    $region20: #{tpu_custom_call.1} parent=1 // pred_region
      _
    $region21: #{tpu_custom_call.1} parent=1 // pred_fallthru
      _
    %4353 = vsyncpa [#allocation4], 1

</llo_original>
